<compile_context>
chip_gen: v7x
topology: tpu7x:2x2x1
jax: 0.10.0
libtpu: 0.0.40
codegen_flags: <defaults>
</compile_context>

<pallas_src>
import functools
import math

import jax
import jax.numpy as jnp
from jax.experimental import pallas as pl
from jax.experimental.pallas import tpu as pltpu


# ----------------------------------------------------------------------------
# helpers
# ----------------------------------------------------------------------------

def _round_tile(dim, target, align):
    """Largest tile <= target that evenly divides `dim`; multiple of `align`
    unless it equals the full dim (TPU (8,128) block constraint)."""
    if dim <= target:
        return dim
    t = (target // align) * align
    while t >= align:
        if dim % t == 0:
            return t
        t -= align
    return dim  # fall back to the full (un-tiled) dimension


def sinusoidal_pe(T, d):
    pos = jnp.arange(T, dtype=jnp.float32)[:, None]
    div = jnp.exp(jnp.arange(0, d, 2, dtype=jnp.float32) * (-math.log(10000.0) / d))
    pe = jnp.zeros((T, d), jnp.float32)
    pe = pe.at[:, 0::2].set(jnp.sin(pos * div))
    pe = pe.at[:, 1::2].set(jnp.cos(pos * div))
    return pe


# ----------------------------------------------------------------------------
# fused, tiled linear:  [LN(x)] @ W + b  -> [act] -> [residual + scale * y]
# ----------------------------------------------------------------------------

def linear(x, w, b, *, activation="none", residual=None, res_scale=1.0,
           ln=None, ln_eps=1e-5, tm=256, tn=512, tk=1024):
    M, K = x.shape
    _, N = w.shape
    has_ln = ln is not None
    has_res = residual is not None
    if has_ln:
        tk = K                       # LN needs the whole input row per tile
    tm_ = _round_tile(M, tm, 8)
    tn_ = _round_tile(N, tn, 128)
    tk_ = _round_tile(K, tk, 128)
    nm, nn, nk = M // tm_, N // tn_, K // tk_

    def kernel(*refs):
        it = iter(refs)
        x_ref, w_ref, b_ref = next(it), next(it), next(it)
        g_ref = be_ref = r_ref = None
        if has_ln:
            g_ref, be_ref = next(it), next(it)
        if has_res:
            r_ref = next(it)
        o_ref = next(it)
        acc_ref = next(it) if nk > 1 else None

        xv = x_ref[...]
        if has_ln:
            xf = xv.astype(jnp.float32)
            mu = jnp.mean(xf, axis=-1, keepdims=True)
            var = jnp.mean(jnp.square(xf - mu), axis=-1, keepdims=True)
            xf = (xf - mu) * jax.lax.rsqrt(var + ln_eps)
            xv = (xf * g_ref[...] + be_ref[...]).astype(w_ref.dtype)

        part = jnp.dot(xv, w_ref[...], preferred_element_type=jnp.float32)

        def epilogue(acc):
            y = acc + b_ref[...].astype(jnp.float32)
            if activation == "relu":
                y = jnp.maximum(y, 0.0)
            elif activation == "swish":
                y = y * jax.nn.sigmoid(y)
            if has_res:
                y = r_ref[...].astype(jnp.float32) + res_scale * y
            o_ref[...] = y.astype(o_ref.dtype)

        if nk == 1:
            epilogue(part)
        else:
            ki = pl.program_id(2)

            @pl.when(ki == 0)
            def _():
                acc_ref[...] = jnp.zeros(acc_ref.shape, acc_ref.dtype)

            acc_ref[...] += part

            @pl.when(ki == nk - 1)
            def _():
                epilogue(acc_ref[...])

    in_specs = [
        pl.BlockSpec((tm_, tk_), lambda i, j, k: (i, k)),
        pl.BlockSpec((tk_, tn_), lambda i, j, k: (k, j)),
        pl.BlockSpec((1, tn_), lambda i, j, k: (0, j)),
    ]
    inputs = [x, w, b.reshape(1, N)]
    if has_ln:
        gamma, beta = ln
        in_specs += [pl.BlockSpec((1, K), lambda i, j, k: (0, 0)),
                     pl.BlockSpec((1, K), lambda i, j, k: (0, 0))]
        inputs += [gamma.reshape(1, K), beta.reshape(1, K)]
    if has_res:
        in_specs.append(pl.BlockSpec((tm_, tn_), lambda i, j, k: (i, j)))
        inputs.append(residual)

    scratch = [pltpu.VMEM((tm_, tn_), jnp.float32)] if nk > 1 else []
    return pl.pallas_call(
        kernel,
        grid=(nm, nn, nk),
        out_shape=jax.ShapeDtypeStruct((M, N), x.dtype),
        in_specs=in_specs,
        out_specs=pl.BlockSpec((tm_, tn_), lambda i, j, k: (i, j)),
        scratch_shapes=scratch,
        compiler_params=pltpu.CompilerParams(
            dimension_semantics=("parallel", "parallel", "arbitrary")),
    )(*inputs)


# ----------------------------------------------------------------------------
# fused LN + two matmuls + GLU (conv-module pointwise conv #1)
# ----------------------------------------------------------------------------

def _glu_ln_kernel(x_ref, g_ref, be_ref, wa_ref, ba_ref, wg_ref, bg_ref, o_ref, *, eps):
    x = x_ref[...].astype(jnp.float32)
    mu = jnp.mean(x, axis=-1, keepdims=True)
    var = jnp.mean(jnp.square(x - mu), axis=-1, keepdims=True)
    xn = ((x - mu) * jax.lax.rsqrt(var + eps) * g_ref[...] + be_ref[...]).astype(wa_ref.dtype)
    a = jnp.dot(xn, wa_ref[...], preferred_element_type=jnp.float32) + ba_ref[...]
    gate = jnp.dot(xn, wg_ref[...], preferred_element_type=jnp.float32) + bg_ref[...]
    o_ref[...] = (a * jax.nn.sigmoid(gate)).astype(o_ref.dtype)


def glu_linear(x, wa, ba, wg, bg, *, ln, eps=1e-5, tm=256, tn=512):
    M, K = x.shape
    _, N = wa.shape
    gamma, beta = ln
    tm_ = _round_tile(M, tm, 8)
    tn_ = _round_tile(N, tn, 128)
    nm, nn = M // tm_, N // tn_
    kern = functools.partial(_glu_ln_kernel, eps=eps)
    return pl.pallas_call(
        kern,
        grid=(nm, nn),
        out_shape=jax.ShapeDtypeStruct((M, N), x.dtype),
        in_specs=[
            pl.BlockSpec((tm_, K), lambda i, j: (i, 0)),
            pl.BlockSpec((1, K), lambda i, j: (0, 0)),
            pl.BlockSpec((1, K), lambda i, j: (0, 0)),
            pl.BlockSpec((K, tn_), lambda i, j: (0, j)),
            pl.BlockSpec((1, tn_), lambda i, j: (0, j)),
            pl.BlockSpec((K, tn_), lambda i, j: (0, j)),
            pl.BlockSpec((1, tn_), lambda i, j: (0, j)),
        ],
        out_specs=pl.BlockSpec((tm_, tn_), lambda i, j: (i, j)),
        compiler_params=pltpu.CompilerParams(
            dimension_semantics=("parallel", "parallel")),
    )(x, gamma.reshape(1, K), beta.reshape(1, K), wa, ba.reshape(1, N), wg, bg.reshape(1, N))


# ----------------------------------------------------------------------------
# flash-style multi-head self attention on packed (B, T, 3*adim) QKV
# ----------------------------------------------------------------------------

def _mhsa_kernel(q_ref, kv_ref, o_ref, m_ref, l_ref, acc_ref, *, H, dh, adim, nkv):
    ki = pl.program_id(2)

    @pl.when(ki == 0)
    def _():
        m_ref[...] = jnp.full(m_ref.shape, -jnp.inf, m_ref.dtype)
        l_ref[...] = jnp.zeros(l_ref.shape, l_ref.dtype)
        acc_ref[...] = jnp.zeros(acc_ref.shape, acc_ref.dtype)

    qt = q_ref[0]     # (tq, 3*adim) bf16 (q columns already carry 1/sqrt(dh))
    kvt = kv_ref[0]   # (tkv, 3*adim) bf16

    for h in range(H):
        q_h = qt[:, h * dh:(h + 1) * dh]
        k_h = kvt[:, adim + h * dh: adim + (h + 1) * dh]
        v_h = kvt[:, 2 * adim + h * dh: 2 * adim + (h + 1) * dh]

        s = jax.lax.dot_general(q_h, k_h, (((1,), (1,)), ((), ())),
                                preferred_element_type=jnp.float32)   # (tq, tkv)
        m_prev = m_ref[h]
        m_new = jnp.maximum(m_prev, jnp.max(s, axis=-1, keepdims=True))
        alpha = jnp.exp(m_prev - m_new)
        p = jnp.exp(s - m_new)
        l_ref[h] = alpha * l_ref[h] + jnp.sum(p, axis=-1, keepdims=True)
        acc_ref[h] = alpha * acc_ref[h] + jnp.dot(
            p.astype(v_h.dtype), v_h, preferred_element_type=jnp.float32)
        m_ref[h] = m_new

    @pl.when(ki == nkv - 1)
    def _():
        outs = []
        for h in range(H):
            inv_l = pl.reciprocal(l_ref[h], approx=True)
            outs.append((acc_ref[h] * inv_l).astype(o_ref.dtype))
        o_ref[0] = jnp.concatenate(outs, axis=-1)   # lane-dense (tq, adim) store


def mhsa(qkv, *, aheads, tq=256, tkv=256):
    """qkv: (B, T, 3*adim) packed [Q|K|V]; returns (B, T, adim)."""
    B, T, three_d = qkv.shape
    adim = three_d // 3
    dh = adim // aheads
    tq_ = _round_tile(T, tq, 8)
    tkv_ = _round_tile(T, tkv, 8)
    nq, nkv = T // tq_, T // tkv_
    kern = functools.partial(_mhsa_kernel, H=aheads, dh=dh, adim=adim, nkv=nkv)
    return pl.pallas_call(
        kern,
        grid=(B, nq, nkv),
        out_shape=jax.ShapeDtypeStruct((B, T, adim), qkv.dtype),
        in_specs=[
            pl.BlockSpec((1, tq_, three_d), lambda b, qi, ki: (b, qi, 0)),
            pl.BlockSpec((1, tkv_, three_d), lambda b, qi, ki: (b, ki, 0)),
        ],
        out_specs=pl.BlockSpec((1, tq_, adim), lambda b, qi, ki: (b, qi, 0)),
        scratch_shapes=[
            pltpu.VMEM((aheads, tq_, 1), jnp.float32),    # running max
            pltpu.VMEM((aheads, tq_, 1), jnp.float32),    # running sum
            pltpu.VMEM((aheads, tq_, dh), jnp.float32),   # output accumulator
        ],
        compiler_params=pltpu.CompilerParams(
            dimension_semantics=("parallel", "parallel", "arbitrary")),
    )(qkv, qkv)


# ----------------------------------------------------------------------------
# depthwise conv1d + (eval) BatchNorm + Swish, channels on the lane dim
# ----------------------------------------------------------------------------

def _dwconv_kernel(xp_ref, w_ref, b_ref, o_ref, *, ksize, T, bn_scale):
    xp = xp_ref[0].astype(jnp.float32)               # (T + K - 1, C)
    w = w_ref[...].astype(jnp.float32)               # (K, C)
    acc = xp[0:T, :] * w[0:1, :]
    for k in range(1, ksize):                        # static unrolled taps
        acc = acc + xp[k:k + T, :] * w[k:k + 1, :]
    y = (acc + b_ref[...]) * bn_scale                # BatchNorm1d eval, default stats
    y = y * jax.nn.sigmoid(y)                        # Swish
    o_ref[0] = y.astype(o_ref.dtype)


def depthwise_conv1d(x, w, b, bn_eps=1e-5):
    """x:(B,T,C); torch Conv1d(groups=C, padding=(K-1)//2) + BN(eval) + Swish."""
    B, T, C = x.shape
    K = w.shape[0]
    pad = (K - 1) // 2
    xp = jnp.pad(x, ((0, 0), (pad, K - 1 - pad), (0, 0)))
    bn_scale = 1.0 / math.sqrt(1.0 + bn_eps)
    kern = functools.partial(_dwconv_kernel, ksize=K, T=T, bn_scale=bn_scale)
    return pl.pallas_call(
        kern,
        grid=(B,),
        out_shape=jax.ShapeDtypeStruct((B, T, C), x.dtype),
        in_specs=[
            pl.BlockSpec((1, T + K - 1, C), lambda i: (i, 0, 0)),
            pl.BlockSpec((K, C), lambda i: (0, 0)),
            pl.BlockSpec((1, C), lambda i: (0, 0)),
        ],
        out_specs=pl.BlockSpec((1, T, C), lambda i: (i, 0, 0)),
        compiler_params=pltpu.CompilerParams(dimension_semantics=("parallel",)),
    )(xp, w, b.reshape(1, C))


# ----------------------------------------------------------------------------
# LayerNorm kernels
# ----------------------------------------------------------------------------

def _ln_kernel(x_ref, g_ref, b_ref, o_ref, *, eps):
    x = x_ref[...].astype(jnp.float32)
    mu = jnp.mean(x, axis=-1, keepdims=True)
    var = jnp.mean(jnp.square(x - mu), axis=-1, keepdims=True)
    y = (x - mu) * jax.lax.rsqrt(var + eps) * g_ref[...] + b_ref[...]
    o_ref[...] = y.astype(o_ref.dtype)


def layernorm(x, gamma, beta, eps=1e-5, tm=512):
    M, D = x.shape
    tm_ = _round_tile(M, tm, 8)
    nm = M // tm_
    kern = functools.partial(_ln_kernel, eps=eps)
    return pl.pallas_call(
        kern,
        grid=(nm,),
        out_shape=jax.ShapeDtypeStruct((M, D), x.dtype),
        in_specs=[
            pl.BlockSpec((tm_, D), lambda i: (i, 0)),
            pl.BlockSpec((1, D), lambda i: (0, 0)),
            pl.BlockSpec((1, D), lambda i: (0, 0)),
        ],
        out_specs=pl.BlockSpec((tm_, D), lambda i: (i, 0)),
        compiler_params=pltpu.CompilerParams(dimension_semantics=("parallel",)),
    )(x, gamma.reshape(1, D), beta.reshape(1, D))


def _ln_relu_pe_kernel(x_ref, g_ref, b_ref, pe_ref, o_ref, *, eps, xscale):
    x = x_ref[0].astype(jnp.float32)
    mu = jnp.mean(x, axis=-1, keepdims=True)
    var = jnp.mean(jnp.square(x - mu), axis=-1, keepdims=True)
    y = (x - mu) * jax.lax.rsqrt(var + eps) * g_ref[...] + b_ref[...]
    y = jnp.maximum(y, 0.0)
    y = y * xscale + pe_ref[...]
    o_ref[0] = y.astype(o_ref.dtype)


def ln_relu_scale_pe(x, gamma, beta, pe, *, xscale, eps=1e-5, tt=512):
    """Fused input-layer tail: LayerNorm -> ReLU -> x*sqrt(adim) + PE."""
    B, T, D = x.shape
    tt_ = _round_tile(T, tt, 8)
    nt = T // tt_
    kern = functools.partial(_ln_relu_pe_kernel, eps=eps, xscale=xscale)
    return pl.pallas_call(
        kern,
        grid=(B, nt),
        out_shape=jax.ShapeDtypeStruct((B, T, D), x.dtype),
        in_specs=[
            pl.BlockSpec((1, tt_, D), lambda b, t: (b, t, 0)),
            pl.BlockSpec((1, D), lambda b, t: (0, 0)),
            pl.BlockSpec((1, D), lambda b, t: (0, 0)),
            pl.BlockSpec((tt_, D), lambda b, t: (t, 0)),
        ],
        out_specs=pl.BlockSpec((1, tt_, D), lambda b, t: (b, t, 0)),
        compiler_params=pltpu.CompilerParams(
            dimension_semantics=("parallel", "parallel")),
    )(x, gamma.reshape(1, D), beta.reshape(1, D), pe)


# ----------------------------------------------------------------------------
# parameters and full forward pass
# ----------------------------------------------------------------------------

def init_params(key, idim, adim, eunits, aheads, elayers, ksize):
    cnt = [0]

    def nxt():
        cnt[0] += 1
        return jax.random.fold_in(key, cnt[0])

    def dense(fi, fo):
        w = (jax.random.normal(nxt(), (fi, fo), jnp.float32) * 0.02).astype(jnp.bfloat16)
        return w, jnp.zeros((fo,), jnp.float32)

    def ln(d):
        return jnp.ones((d,), jnp.float32), jnp.zeros((d,), jnp.float32)

    dh = adim // aheads
    qscale = 1.0 / math.sqrt(dh)

    params = {"in_w": dense(idim, adim), "in_ln": ln(adim), "blocks": []}
    for _ in range(elayers):
        wq, bq = dense(adim, adim)
        wk, bk = dense(adim, adim)
        wv, bv = dense(adim, adim)
        # fuse Q/K/V into one matmul; fold 1/sqrt(dh) into the Q columns
        wqkv = jnp.concatenate(
            [(wq.astype(jnp.float32) * qscale).astype(jnp.bfloat16), wk, wv], axis=1)
        bqkv = jnp.concatenate([bq * qscale, bk, bv], axis=0)
        blk = {
            "ff1_ln": ln(adim), "ff1_w1": dense(adim, eunits), "ff1_w2": dense(eunits, adim),
            "mha_ln": ln(adim), "wqkv": (wqkv, bqkv), "wo": dense(adim, adim),
            "conv_ln": ln(adim),
            "pw1_a": dense(adim, adim), "pw1_g": dense(adim, adim),   # GLU content / gate
            "dw_w": (jax.random.normal(nxt(), (ksize, adim), jnp.float32) * 0.02
                     ).astype(jnp.bfloat16),
            "dw_b": jnp.zeros((adim,), jnp.float32),
            "pw2": dense(adim, adim),
            "ff2_ln": ln(adim), "ff2_w1": dense(adim, eunits), "ff2_w2": dense(eunits, adim),
            "final_ln": ln(adim),
        }
        params["blocks"].append(blk)
    return params


def conformer_encoder(params, x, mask=None, *, aheads=4):
    B, T, idim = x.shape
    adim = params["in_w"][0].shape[1]
    x = x.astype(jnp.bfloat16)

    # ---- input layer: Linear -> LayerNorm -> Dropout(id) -> ReLU -> PosEnc ----
    h = linear(x.reshape(B * T, idim), *params["in_w"])
    pe = sinusoidal_pe(T, adim)                     # computed once per forward
    h = ln_relu_scale_pe(h.reshape(B, T, adim), *params["in_ln"], pe,
                         xscale=math.sqrt(adim))
    hf = h.reshape(B * T, adim)

    # ---- conformer blocks (macaron FFN -> MHSA -> Conv -> FFN -> LN) ----
    for blk in params["blocks"]:
        # macaron FFN #1: fused LN + matmul + Swish, then matmul + 0.5*residual
        y = linear(hf, *blk["ff1_w1"], ln=blk["ff1_ln"], activation="swish")
        hf = linear(y, *blk["ff1_w2"], residual=hf, res_scale=0.5)

        # multi-head self-attention: fused LN + QKV matmul, flash attention,
        # fused output projection + residual
        qkv = linear(hf, *blk["wqkv"], ln=blk["mha_ln"])
        o = mhsa(qkv.reshape(B, T, 3 * adim), aheads=aheads)
        hf = linear(o.reshape(B * T, adim), *blk["wo"], residual=hf)

        # convolution module: LN + pw-conv + GLU -> dw-conv + BN + Swish
        #                     -> pw-conv + residual
        y = glu_linear(hf, *blk["pw1_a"], *blk["pw1_g"], ln=blk["conv_ln"])
        y = depthwise_conv1d(y.reshape(B, T, adim), blk["dw_w"], blk["dw_b"])
        hf = linear(y.reshape(B * T, adim), *blk["pw2"], residual=hf)

        # macaron FFN #2
        y = linear(hf, *blk["ff2_w1"], ln=blk["ff2_ln"], activation="swish")
        hf = linear(y, *blk["ff2_w2"], residual=hf, res_scale=0.5)

        hf = layernorm(hf, *blk["final_ln"])

    out = hf.reshape(B, T, adim).astype(jnp.float32)
    return out, mask


if __name__ == "__main__":
    # small shapes consistent with the module: x is (batch, time, idim)
    B, T, idim = 2, 8, 16
    adim, eunits, aheads, elayers, ksize = 32, 64, 4, 2, 7

    key = jax.random.PRNGKey(0)
    kx, kp = jax.random.split(key)
    x = jax.random.normal(kx, (B, T, idim), jnp.float32)
    params = init_params(kp, idim, adim, eunits, aheads, elayers, ksize)

    fwd = jax.jit(functools.partial(conformer_encoder, aheads=aheads))
    out, mask = fwd(params, x)
    out = jax.block_until_ready(out)

    assert out.shape == (B, T, adim)
    assert bool(jnp.all(jnp.isfinite(out)))
    assert mask is None
    print("KERNEL_OK")
</pallas_src>

<mosaic_0001>
module attributes {stable_mosaic.version = 11 : i64} {
  func.func @kernel(%arg0: i32, %arg1: i32, %arg2: i32, %arg3: memref<16x32xbf16, #tpu.memory_space<vmem>>, %arg4: memref<32x64xbf16, #tpu.memory_space<vmem>>, %arg5: memref<1x64xf32, #tpu.memory_space<vmem>>, %arg6: memref<1x32xf32, #tpu.memory_space<vmem>>, %arg7: memref<1x32xf32, #tpu.memory_space<vmem>>, %arg8: memref<16x64xbf16, #tpu.memory_space<vmem>>) attributes {dimension_semantics = [#tpu.dimension_semantics<parallel>, #tpu.dimension_semantics<parallel>, #tpu.dimension_semantics<arbitrary>], iteration_bounds = array<i64: 1, 1, 1>, scalar_prefetch = 0 : i64, scratch_operands = 0 : i64, tpu.core_type = #tpu.core_type<tc>, window_params = [{transform_indices = @transform_0, window_bounds = array<i64: 16, 32>}, {transform_indices = @transform_1, window_bounds = array<i64: 32, 64>}, {transform_indices = @transform_2, window_bounds = array<i64: 1, 64>}, {pipeline_mode = #tpu.pipeline_mode<synchronous>, transform_indices = @transform_3, window_bounds = array<i64: 1, 32>}, {pipeline_mode = #tpu.pipeline_mode<synchronous>, transform_indices = @transform_4, window_bounds = array<i64: 1, 32>}, {transform_indices = @transform_5, window_bounds = array<i64: 16, 64>}]} {
    %c0 = arith.constant 0 : index
    %c0_0 = arith.constant 0 : index
    %0 = vector.load %arg3[%c0, %c0_0] : memref<16x32xbf16, #tpu.memory_space<vmem>>, vector<16x32xbf16>
    %1 = arith.extf %0 : vector<16x32xbf16> to vector<16x32xf32>
    %cst = arith.constant dense<0.000000e+00> : vector<16xf32>
    %2 = vector.multi_reduction <add>, %1, %cst [1] : vector<16x32xf32> to vector<16xf32>
    %3 = vector.shape_cast %2 : vector<16xf32> to vector<16x1xf32>
    %cst_1 = arith.constant 3.200000e+01 : f32
    %4 = vector.broadcast %cst_1 : f32 to vector<16x1xf32>
    %5 = arith.divf %3, %4 : vector<16x1xf32>
    %6 = vector.broadcast %5 : vector<16x1xf32> to vector<16x32xf32>
    %7 = arith.subf %1, %6 : vector<16x32xf32>
    %8 = arith.mulf %7, %7 : vector<16x32xf32>
    %cst_2 = arith.constant dense<0.000000e+00> : vector<16xf32>
    %9 = vector.multi_reduction <add>, %8, %cst_2 [1] : vector<16x32xf32> to vector<16xf32>
    %10 = vector.shape_cast %9 : vector<16xf32> to vector<16x1xf32>
    %cst_3 = arith.constant 3.200000e+01 : f32
    %11 = vector.broadcast %cst_3 : f32 to vector<16x1xf32>
    %12 = arith.divf %10, %11 : vector<16x1xf32>
    %13 = vector.broadcast %5 : vector<16x1xf32> to vector<16x32xf32>
    %14 = arith.subf %1, %13 : vector<16x32xf32>
    %cst_4 = arith.constant 9.99999974E-6 : f32
    %15 = vector.broadcast %cst_4 : f32 to vector<16x1xf32>
    %16 = arith.addf %12, %15 : vector<16x1xf32>
    %17 = math.rsqrt %16 : vector<16x1xf32>
    %18 = vector.broadcast %17 : vector<16x1xf32> to vector<16x32xf32>
    %19 = arith.mulf %14, %18 : vector<16x32xf32>
    %c0_5 = arith.constant 0 : index
    %c0_6 = arith.constant 0 : index
    %20 = vector.load %arg6[%c0_5, %c0_6] : memref<1x32xf32, #tpu.memory_space<vmem>>, vector<1x32xf32>
    %21 = vector.broadcast %20 : vector<1x32xf32> to vector<16x32xf32>
    %22 = arith.mulf %19, %21 : vector<16x32xf32>
    %c0_7 = arith.constant 0 : index
    %c0_8 = arith.constant 0 : index
    %23 = vector.load %arg7[%c0_7, %c0_8] : memref<1x32xf32, #tpu.memory_space<vmem>>, vector<1x32xf32>
    %24 = vector.broadcast %23 : vector<1x32xf32> to vector<16x32xf32>
    %25 = arith.addf %22, %24 : vector<16x32xf32>
    %26 = arith.truncf %25 : vector<16x32xf32> to vector<16x32xbf16>
    %c0_9 = arith.constant 0 : index
    %c0_10 = arith.constant 0 : index
    %27 = vector.load %arg4[%c0_9, %c0_10] : memref<32x64xbf16, #tpu.memory_space<vmem>>, vector<32x64xbf16>
    %cst_11 = arith.constant dense<0.000000e+00> : vector<16x64xf32>
    %28 = tpu.matmul %26, %27, %cst_11 {dimension_numbers = #tpu.dot_dimension_numbers<[1], [0], [0], [1], [0, 0, 1, 1], [], []>} : vector<16x32xbf16>, vector<32x64xbf16>, vector<16x64xf32> -> vector<16x64xf32>
    %c0_12 = arith.constant 0 : index
    %c0_13 = arith.constant 0 : index
    %29 = vector.load %arg5[%c0_12, %c0_13] : memref<1x64xf32, #tpu.memory_space<vmem>>, vector<1x64xf32>
    %30 = vector.broadcast %29 : vector<1x64xf32> to vector<16x64xf32>
    %31 = arith.addf %28, %30 : vector<16x64xf32>
    %32 = arith.negf %31 : vector<16x64xf32>
    %33 = math.exp %32 : vector<16x64xf32>
    %cst_14 = arith.constant 1.000000e+00 : f32
    %34 = vector.broadcast %cst_14 : f32 to vector<16x64xf32>
    %35 = arith.addf %34, %33 : vector<16x64xf32>
    %36 = arith.divf %34, %35 : vector<16x64xf32>
    %37 = arith.mulf %31, %36 : vector<16x64xf32>
    %38 = arith.truncf %37 : vector<16x64xf32> to vector<16x64xbf16>
    %c0_15 = arith.constant 0 : index
    %c0_16 = arith.constant 0 : index
    %39 = vector.load %arg8[%c0_15, %c0_16] : memref<16x64xbf16, #tpu.memory_space<vmem>>, vector<16x64xbf16>
    tpu.vector_store %arg8[%c0_15, %c0_16], %38 {strides = array<i32>} : memref<16x64xbf16, #tpu.memory_space<vmem>>, vector<16x64xbf16>,
    return
  }
  func.func @transform_0(%arg0: i32, %arg1: i32, %arg2: i32) -> (i32, i32) {
    %c0_i32 = arith.constant 0 : i32
    return %arg0, %arg2 : i32, i32
  }
  func.func @transform_1(%arg0: i32, %arg1: i32, %arg2: i32) -> (i32, i32) {
    %c0_i32 = arith.constant 0 : i32
    return %arg2, %arg1 : i32, i32
  }
  func.func @transform_2(%arg0: i32, %arg1: i32, %arg2: i32) -> (i32, i32) {
    %c0_i32 = arith.constant 0 : i32
    %c0_i32_0 = arith.constant 0 : i32
    return %c0_i32, %arg1 : i32, i32
  }
  func.func @transform_3(%arg0: i32, %arg1: i32, %arg2: i32) -> (i32, i32) {
    %c0_i32 = arith.constant 0 : i32
    %c0_i32_0 = arith.constant 0 : i32
    %c0_i32_1 = arith.constant 0 : i32
    return %c0_i32, %c0_i32_0 : i32, i32
  }
  func.func @transform_4(%arg0: i32, %arg1: i32, %arg2: i32) -> (i32, i32) {
    %c0_i32 = arith.constant 0 : i32
    %c0_i32_0 = arith.constant 0 : i32
    %c0_i32_1 = arith.constant 0 : i32
    return %c0_i32, %c0_i32_0 : i32, i32
  }
  func.func @transform_5(%arg0: i32, %arg1: i32, %arg2: i32) -> (i32, i32) {
    %c0_i32 = arith.constant 0 : i32
    return %arg0, %arg1 : i32, i32
  }
}

module attributes {stable_mosaic.version = 11 : i64} {
  func.func @kernel(%arg0: i32, %arg1: i32, %arg2: i32, %arg3: memref<16x16xbf16, #tpu.memory_space<vmem>>, %arg4: memref<16x32xbf16, #tpu.memory_space<vmem>>, %arg5: memref<1x32xf32, #tpu.memory_space<vmem>>, %arg6: memref<16x32xbf16, #tpu.memory_space<vmem>>) attributes {dimension_semantics = [#tpu.dimension_semantics<parallel>, #tpu.dimension_semantics<parallel>, #tpu.dimension_semantics<arbitrary>], iteration_bounds = array<i64: 1, 1, 1>, scalar_prefetch = 0 : i64, scratch_operands = 0 : i64, tpu.core_type = #tpu.core_type<tc>, window_params = [{transform_indices = @transform_0, window_bounds = array<i64: 16, 16>}, {transform_indices = @transform_1, window_bounds = array<i64: 16, 32>}, {transform_indices = @transform_2, window_bounds = array<i64: 1, 32>}, {transform_indices = @transform_3, window_bounds = array<i64: 16, 32>}]} {
    %c0 = arith.constant 0 : index
    %c0_0 = arith.constant 0 : index
    %0 = vector.load %arg3[%c0, %c0_0] : memref<16x16xbf16, #tpu.memory_space<vmem>>, vector<16x16xbf16>
    %c0_1 = arith.constant 0 : index
    %c0_2 = arith.constant 0 : index
    %1 = vector.load %arg4[%c0_1, %c0_2] : memref<16x32xbf16, #tpu.memory_space<vmem>>, vector<16x32xbf16>
    %cst = arith.constant dense<0.000000e+00> : vector<16x32xf32>
    %2 = tpu.matmul %0, %1, %cst {dimension_numbers = #tpu.dot_dimension_numbers<[1], [0], [0], [1], [0, 0, 1, 1], [], []>} : vector<16x16xbf16>, vector<16x32xbf16>, vector<16x32xf32> -> vector<16x32xf32>
    %c0_3 = arith.constant 0 : index
    %c0_4 = arith.constant 0 : index
    %3 = vector.load %arg5[%c0_3, %c0_4] : memref<1x32xf32, #tpu.memory_space<vmem>>, vector<1x32xf32>
    %4 = vector.broadcast %3 : vector<1x32xf32> to vector<16x32xf32>
    %5 = arith.addf %2, %4 : vector<16x32xf32>
    %6 = arith.truncf %5 : vector<16x32xf32> to vector<16x32xbf16>
    %c0_5 = arith.constant 0 : index
    %c0_6 = arith.constant 0 : index
    %7 = vector.load %arg6[%c0_5, %c0_6] : memref<16x32xbf16, #tpu.memory_space<vmem>>, vector<16x32xbf16>
    tpu.vector_store %arg6[%c0_5, %c0_6], %6 {strides = array<i32>} : memref<16x32xbf16, #tpu.memory_space<vmem>>, vector<16x32xbf16>,
    return
  }
  func.func @transform_0(%arg0: i32, %arg1: i32, %arg2: i32) -> (i32, i32) {
    %c0_i32 = arith.constant 0 : i32
    return %arg0, %arg2 : i32, i32
  }
  func.func @transform_1(%arg0: i32, %arg1: i32, %arg2: i32) -> (i32, i32) {
    %c0_i32 = arith.constant 0 : i32
    return %arg2, %arg1 : i32, i32
  }
  func.func @transform_2(%arg0: i32, %arg1: i32, %arg2: i32) -> (i32, i32) {
    %c0_i32 = arith.constant 0 : i32
    %c0_i32_0 = arith.constant 0 : i32
    return %c0_i32, %arg1 : i32, i32
  }
  func.func @transform_3(%arg0: i32, %arg1: i32, %arg2: i32) -> (i32, i32) {
    %c0_i32 = arith.constant 0 : i32
    return %arg0, %arg1 : i32, i32
  }
}

module attributes {stable_mosaic.version = 11 : i64} {
  func.func @_ln_relu_pe_kernel(%arg0: i32, %arg1: i32, %arg2: memref<1x8x32xbf16, #tpu.memory_space<vmem>>, %arg3: memref<1x32xf32, #tpu.memory_space<vmem>>, %arg4: memref<1x32xf32, #tpu.memory_space<vmem>>, %arg5: memref<8x32xf32, #tpu.memory_space<vmem>>, %arg6: memref<1x8x32xbf16, #tpu.memory_space<vmem>>) attributes {dimension_semantics = [#tpu.dimension_semantics<parallel>, #tpu.dimension_semantics<parallel>], iteration_bounds = array<i64: 2, 1>, scalar_prefetch = 0 : i64, scratch_operands = 0 : i64, tpu.core_type = #tpu.core_type<tc>, window_params = [{transform_indices = @transform_0, window_bounds = array<i64: 1, 8, 32>}, {pipeline_mode = #tpu.pipeline_mode<synchronous>, transform_indices = @transform_1, window_bounds = array<i64: 1, 32>}, {pipeline_mode = #tpu.pipeline_mode<synchronous>, transform_indices = @transform_2, window_bounds = array<i64: 1, 32>}, {transform_indices = @transform_3, window_bounds = array<i64: 8, 32>}, {transform_indices = @transform_4, window_bounds = array<i64: 1, 8, 32>}]} {
    %c0 = arith.constant 0 : index
    %c0_0 = arith.constant 0 : index
    %c0_1 = arith.constant 0 : index
    %0 = vector.load %arg2[%c0, %c0_0, %c0_1] : memref<1x8x32xbf16, #tpu.memory_space<vmem>>, vector<1x8x32xbf16>
    %1 = vector.shape_cast %0 : vector<1x8x32xbf16> to vector<8x32xbf16>
    %2 = arith.extf %1 : vector<8x32xbf16> to vector<8x32xf32>
    %cst = arith.constant dense<0.000000e+00> : vector<8xf32>
    %3 = vector.multi_reduction <add>, %2, %cst [1] : vector<8x32xf32> to vector<8xf32>
    %4 = vector.shape_cast %3 : vector<8xf32> to vector<8x1xf32>
    %cst_2 = arith.constant 3.200000e+01 : f32
    %5 = vector.broadcast %cst_2 : f32 to vector<8x1xf32>
    %6 = arith.divf %4, %5 : vector<8x1xf32>
    %7 = vector.broadcast %6 : vector<8x1xf32> to vector<8x32xf32>
    %8 = arith.subf %2, %7 : vector<8x32xf32>
    %9 = arith.mulf %8, %8 : vector<8x32xf32>
    %cst_3 = arith.constant dense<0.000000e+00> : vector<8xf32>
    %10 = vector.multi_reduction <add>, %9, %cst_3 [1] : vector<8x32xf32> to vector<8xf32>
    %11 = vector.shape_cast %10 : vector<8xf32> to vector<8x1xf32>
    %cst_4 = arith.constant 3.200000e+01 : f32
    %12 = vector.broadcast %cst_4 : f32 to vector<8x1xf32>
    %13 = arith.divf %11, %12 : vector<8x1xf32>
    %14 = vector.broadcast %6 : vector<8x1xf32> to vector<8x32xf32>
    %15 = arith.subf %2, %14 : vector<8x32xf32>
    %cst_5 = arith.constant 9.99999974E-6 : f32
    %16 = vector.broadcast %cst_5 : f32 to vector<8x1xf32>
    %17 = arith.addf %13, %16 : vector<8x1xf32>
    %18 = math.rsqrt %17 : vector<8x1xf32>
    %19 = vector.broadcast %18 : vector<8x1xf32> to vector<8x32xf32>
    %20 = arith.mulf %15, %19 : vector<8x32xf32>
    %c0_6 = arith.constant 0 : index
    %c0_7 = arith.constant 0 : index
    %21 = vector.load %arg3[%c0_6, %c0_7] : memref<1x32xf32, #tpu.memory_space<vmem>>, vector<1x32xf32>
    %22 = vector.broadcast %21 : vector<1x32xf32> to vector<8x32xf32>
    %23 = arith.mulf %20, %22 : vector<8x32xf32>
    %c0_8 = arith.constant 0 : index
    %c0_9 = arith.constant 0 : index
    %24 = vector.load %arg4[%c0_8, %c0_9] : memref<1x32xf32, #tpu.memory_space<vmem>>, vector<1x32xf32>
    %25 = vector.broadcast %24 : vector<1x32xf32> to vector<8x32xf32>
    %26 = arith.addf %23, %25 : vector<8x32xf32>
    %cst_10 = arith.constant 0.000000e+00 : f32
    %27 = vector.broadcast %cst_10 : f32 to vector<8x32xf32>
    %28 = arith.maximumf %26, %27 : vector<8x32xf32>
    %cst_11 = arith.constant 5.65685415 : f32
    %29 = vector.broadcast %cst_11 : f32 to vector<8x32xf32>
    %30 = arith.mulf %28, %29 : vector<8x32xf32>
    %c0_12 = arith.constant 0 : index
    %c0_13 = arith.constant 0 : index
    %31 = vector.load %arg5[%c0_12, %c0_13] : memref<8x32xf32, #tpu.memory_space<vmem>>, vector<8x32xf32>
    %32 = arith.addf %30, %31 : vector<8x32xf32>
    %33 = arith.truncf %32 : vector<8x32xf32> to vector<8x32xbf16>
    %c0_14 = arith.constant 0 : index
    %c0_15 = arith.constant 0 : index
    %c0_16 = arith.constant 0 : index
    %34 = vector.load %arg6[%c0_14, %c0_15, %c0_16] : memref<1x8x32xbf16, #tpu.memory_space<vmem>>, vector<1x8x32xbf16>
    %35 = vector.shape_cast %34 : vector<1x8x32xbf16> to vector<8x32xbf16>
    %36 = vector.shape_cast %33 : vector<8x32xbf16> to vector<1x8x32xbf16>
    tpu.vector_store %arg6[%c0_14, %c0_15, %c0_16], %36 {strides = array<i32>} : memref<1x8x32xbf16, #tpu.memory_space<vmem>>, vector<1x8x32xbf16>,
    return
  }
  func.func @transform_0(%arg0: i32, %arg1: i32) -> (i32, i32, i32) {
    %c0_i32 = arith.constant 0 : i32
    %c0_i32_0 = arith.constant 0 : i32
    return %arg0, %arg1, %c0_i32 : i32, i32, i32
  }
  func.func @transform_1(%arg0: i32, %arg1: i32) -> (i32, i32) {
    %c0_i32 = arith.constant 0 : i32
    %c0_i32_0 = arith.constant 0 : i32
    %c0_i32_1 = arith.constant 0 : i32
    return %c0_i32, %c0_i32_0 : i32, i32
  }
  func.func @transform_2(%arg0: i32, %arg1: i32) -> (i32, i32) {
    %c0_i32 = arith.constant 0 : i32
    %c0_i32_0 = arith.constant 0 : i32
    %c0_i32_1 = arith.constant 0 : i32
    return %c0_i32, %c0_i32_0 : i32, i32
  }
  func.func @transform_3(%arg0: i32, %arg1: i32) -> (i32, i32) {
    %c0_i32 = arith.constant 0 : i32
    %c0_i32_0 = arith.constant 0 : i32
    return %arg1, %c0_i32 : i32, i32
  }
  func.func @transform_4(%arg0: i32, %arg1: i32) -> (i32, i32, i32) {
    %c0_i32 = arith.constant 0 : i32
    %c0_i32_0 = arith.constant 0 : i32
    return %arg0, %arg1, %c0_i32 : i32, i32, i32
  }
}

module attributes {stable_mosaic.version = 11 : i64} {
  func.func @kernel(%arg0: i32, %arg1: i32, %arg2: i32, %arg3: memref<16x32xbf16, #tpu.memory_space<vmem>>, %arg4: memref<32x32xbf16, #tpu.memory_space<vmem>>, %arg5: memref<1x32xf32, #tpu.memory_space<vmem>>, %arg6: memref<16x32xbf16, #tpu.memory_space<vmem>>, %arg7: memref<16x32xbf16, #tpu.memory_space<vmem>>) attributes {dimension_semantics = [#tpu.dimension_semantics<parallel>, #tpu.dimension_semantics<parallel>, #tpu.dimension_semantics<arbitrary>], iteration_bounds = array<i64: 1, 1, 1>, scalar_prefetch = 0 : i64, scratch_operands = 0 : i64, tpu.core_type = #tpu.core_type<tc>, window_params = [{transform_indices = @transform_0, window_bounds = array<i64: 16, 32>}, {transform_indices = @transform_1, window_bounds = array<i64: 32, 32>}, {transform_indices = @transform_2, window_bounds = array<i64: 1, 32>}, {transform_indices = @transform_3, window_bounds = array<i64: 16, 32>}, {transform_indices = @transform_4, window_bounds = array<i64: 16, 32>}]} {
    %c0 = arith.constant 0 : index
    %c0_0 = arith.constant 0 : index
    %0 = vector.load %arg3[%c0, %c0_0] : memref<16x32xbf16, #tpu.memory_space<vmem>>, vector<16x32xbf16>
    %c0_1 = arith.constant 0 : index
    %c0_2 = arith.constant 0 : index
    %1 = vector.load %arg4[%c0_1, %c0_2] : memref<32x32xbf16, #tpu.memory_space<vmem>>, vector<32x32xbf16>
    %cst = arith.constant dense<0.000000e+00> : vector<16x32xf32>
    %2 = tpu.matmul %0, %1, %cst {dimension_numbers = #tpu.dot_dimension_numbers<[1], [0], [0], [1], [0, 0, 1, 1], [], []>} : vector<16x32xbf16>, vector<32x32xbf16>, vector<16x32xf32> -> vector<16x32xf32>
    %c0_3 = arith.constant 0 : index
    %c0_4 = arith.constant 0 : index
    %3 = vector.load %arg5[%c0_3, %c0_4] : memref<1x32xf32, #tpu.memory_space<vmem>>, vector<1x32xf32>
    %4 = vector.broadcast %3 : vector<1x32xf32> to vector<16x32xf32>
    %5 = arith.addf %2, %4 : vector<16x32xf32>
    %c0_5 = arith.constant 0 : index
    %c0_6 = arith.constant 0 : index
    %6 = vector.load %arg6[%c0_5, %c0_6] : memref<16x32xbf16, #tpu.memory_space<vmem>>, vector<16x32xbf16>
    %7 = arith.extf %6 : vector<16x32xbf16> to vector<16x32xf32>
    %cst_7 = arith.constant 1.000000e+00 : f32
    %8 = vector.broadcast %cst_7 : f32 to vector<16x32xf32>
    %9 = arith.mulf %8, %5 : vector<16x32xf32>
    %10 = arith.addf %7, %9 : vector<16x32xf32>
    %11 = arith.truncf %10 : vector<16x32xf32> to vector<16x32xbf16>
    %c0_8 = arith.constant 0 : index
    %c0_9 = arith.constant 0 : index
    %12 = vector.load %arg7[%c0_8, %c0_9] : memref<16x32xbf16, #tpu.memory_space<vmem>>, vector<16x32xbf16>
    tpu.vector_store %arg7[%c0_8, %c0_9], %11 {strides = array<i32>} : memref<16x32xbf16, #tpu.memory_space<vmem>>, vector<16x32xbf16>,
    return
  }
  func.func @transform_0(%arg0: i32, %arg1: i32, %arg2: i32) -> (i32, i32) {
    %c0_i32 = arith.constant 0 : i32
    return %arg0, %arg2 : i32, i32
  }
  func.func @transform_1(%arg0: i32, %arg1: i32, %arg2: i32) -> (i32, i32) {
    %c0_i32 = arith.constant 0 : i32
    return %arg2, %arg1 : i32, i32
  }
  func.func @transform_2(%arg0: i32, %arg1: i32, %arg2: i32) -> (i32, i32) {
    %c0_i32 = arith.constant 0 : i32
    %c0_i32_0 = arith.constant 0 : i32
    return %c0_i32, %arg1 : i32, i32
  }
  func.func @transform_3(%arg0: i32, %arg1: i32, %arg2: i32) -> (i32, i32) {
    %c0_i32 = arith.constant 0 : i32
    return %arg0, %arg1 : i32, i32
  }
  func.func @transform_4(%arg0: i32, %arg1: i32, %arg2: i32) -> (i32, i32) {
    %c0_i32 = arith.constant 0 : i32
    return %arg0, %arg1 : i32, i32
  }
}

module attributes {stable_mosaic.version = 11 : i64} {
  func.func @kernel(%arg0: i32, %arg1: i32, %arg2: i32, %arg3: memref<16x32xbf16, #tpu.memory_space<vmem>>, %arg4: memref<32x96xbf16, #tpu.memory_space<vmem>>, %arg5: memref<1x96xf32, #tpu.memory_space<vmem>>, %arg6: memref<1x32xf32, #tpu.memory_space<vmem>>, %arg7: memref<1x32xf32, #tpu.memory_space<vmem>>, %arg8: memref<16x96xbf16, #tpu.memory_space<vmem>>) attributes {dimension_semantics = [#tpu.dimension_semantics<parallel>, #tpu.dimension_semantics<parallel>, #tpu.dimension_semantics<arbitrary>], iteration_bounds = array<i64: 1, 1, 1>, scalar_prefetch = 0 : i64, scratch_operands = 0 : i64, tpu.core_type = #tpu.core_type<tc>, window_params = [{transform_indices = @transform_0, window_bounds = array<i64: 16, 32>}, {transform_indices = @transform_1, window_bounds = array<i64: 32, 96>}, {transform_indices = @transform_2, window_bounds = array<i64: 1, 96>}, {pipeline_mode = #tpu.pipeline_mode<synchronous>, transform_indices = @transform_3, window_bounds = array<i64: 1, 32>}, {pipeline_mode = #tpu.pipeline_mode<synchronous>, transform_indices = @transform_4, window_bounds = array<i64: 1, 32>}, {transform_indices = @transform_5, window_bounds = array<i64: 16, 96>}]} {
    %c0 = arith.constant 0 : index
    %c0_0 = arith.constant 0 : index
    %0 = vector.load %arg3[%c0, %c0_0] : memref<16x32xbf16, #tpu.memory_space<vmem>>, vector<16x32xbf16>
    %1 = arith.extf %0 : vector<16x32xbf16> to vector<16x32xf32>
    %cst = arith.constant dense<0.000000e+00> : vector<16xf32>
    %2 = vector.multi_reduction <add>, %1, %cst [1] : vector<16x32xf32> to vector<16xf32>
    %3 = vector.shape_cast %2 : vector<16xf32> to vector<16x1xf32>
    %cst_1 = arith.constant 3.200000e+01 : f32
    %4 = vector.broadcast %cst_1 : f32 to vector<16x1xf32>
    %5 = arith.divf %3, %4 : vector<16x1xf32>
    %6 = vector.broadcast %5 : vector<16x1xf32> to vector<16x32xf32>
    %7 = arith.subf %1, %6 : vector<16x32xf32>
    %8 = arith.mulf %7, %7 : vector<16x32xf32>
    %cst_2 = arith.constant dense<0.000000e+00> : vector<16xf32>
    %9 = vector.multi_reduction <add>, %8, %cst_2 [1] : vector<16x32xf32> to vector<16xf32>
    %10 = vector.shape_cast %9 : vector<16xf32> to vector<16x1xf32>
    %cst_3 = arith.constant 3.200000e+01 : f32
    %11 = vector.broadcast %cst_3 : f32 to vector<16x1xf32>
    %12 = arith.divf %10, %11 : vector<16x1xf32>
    %13 = vector.broadcast %5 : vector<16x1xf32> to vector<16x32xf32>
    %14 = arith.subf %1, %13 : vector<16x32xf32>
    %cst_4 = arith.constant 9.99999974E-6 : f32
    %15 = vector.broadcast %cst_4 : f32 to vector<16x1xf32>
    %16 = arith.addf %12, %15 : vector<16x1xf32>
    %17 = math.rsqrt %16 : vector<16x1xf32>
    %18 = vector.broadcast %17 : vector<16x1xf32> to vector<16x32xf32>
    %19 = arith.mulf %14, %18 : vector<16x32xf32>
    %c0_5 = arith.constant 0 : index
    %c0_6 = arith.constant 0 : index
    %20 = vector.load %arg6[%c0_5, %c0_6] : memref<1x32xf32, #tpu.memory_space<vmem>>, vector<1x32xf32>
    %21 = vector.broadcast %20 : vector<1x32xf32> to vector<16x32xf32>
    %22 = arith.mulf %19, %21 : vector<16x32xf32>
    %c0_7 = arith.constant 0 : index
    %c0_8 = arith.constant 0 : index
    %23 = vector.load %arg7[%c0_7, %c0_8] : memref<1x32xf32, #tpu.memory_space<vmem>>, vector<1x32xf32>
    %24 = vector.broadcast %23 : vector<1x32xf32> to vector<16x32xf32>
    %25 = arith.addf %22, %24 : vector<16x32xf32>
    %26 = arith.truncf %25 : vector<16x32xf32> to vector<16x32xbf16>
    %c0_9 = arith.constant 0 : index
    %c0_10 = arith.constant 0 : index
    %27 = vector.load %arg4[%c0_9, %c0_10] : memref<32x96xbf16, #tpu.memory_space<vmem>>, vector<32x96xbf16>
    %cst_11 = arith.constant dense<0.000000e+00> : vector<16x96xf32>
    %28 = tpu.matmul %26, %27, %cst_11 {dimension_numbers = #tpu.dot_dimension_numbers<[1], [0], [0], [1], [0, 0, 1, 1], [], []>} : vector<16x32xbf16>, vector<32x96xbf16>, vector<16x96xf32> -> vector<16x96xf32>
    %c0_12 = arith.constant 0 : index
    %c0_13 = arith.constant 0 : index
    %29 = vector.load %arg5[%c0_12, %c0_13] : memref<1x96xf32, #tpu.memory_space<vmem>>, vector<1x96xf32>
    %30 = vector.broadcast %29 : vector<1x96xf32> to vector<16x96xf32>
    %31 = arith.addf %28, %30 : vector<16x96xf32>
    %32 = arith.truncf %31 : vector<16x96xf32> to vector<16x96xbf16>
    %c0_14 = arith.constant 0 : index
    %c0_15 = arith.constant 0 : index
    %33 = vector.load %arg8[%c0_14, %c0_15] : memref<16x96xbf16, #tpu.memory_space<vmem>>, vector<16x96xbf16>
    tpu.vector_store %arg8[%c0_14, %c0_15], %32 {strides = array<i32>} : memref<16x96xbf16, #tpu.memory_space<vmem>>, vector<16x96xbf16>,
    return
  }
  func.func @transform_0(%arg0: i32, %arg1: i32, %arg2: i32) -> (i32, i32) {
    %c0_i32 = arith.constant 0 : i32
    return %arg0, %arg2 : i32, i32
  }
  func.func @transform_1(%arg0: i32, %arg1: i32, %arg2: i32) -> (i32, i32) {
    %c0_i32 = arith.constant 0 : i32
    return %arg2, %arg1 : i32, i32
  }
  func.func @transform_2(%arg0: i32, %arg1: i32, %arg2: i32) -> (i32, i32) {
    %c0_i32 = arith.constant 0 : i32
    %c0_i32_0 = arith.constant 0 : i32
    return %c0_i32, %arg1 : i32, i32
  }
  func.func @transform_3(%arg0: i32, %arg1: i32, %arg2: i32) -> (i32, i32) {
    %c0_i32 = arith.constant 0 : i32
    %c0_i32_0 = arith.constant 0 : i32
    %c0_i32_1 = arith.constant 0 : i32
    return %c0_i32, %c0_i32_0 : i32, i32
  }
  func.func @transform_4(%arg0: i32, %arg1: i32, %arg2: i32) -> (i32, i32) {
    %c0_i32 = arith.constant 0 : i32
    %c0_i32_0 = arith.constant 0 : i32
    %c0_i32_1 = arith.constant 0 : i32
    return %c0_i32, %c0_i32_0 : i32, i32
  }
  func.func @transform_5(%arg0: i32, %arg1: i32, %arg2: i32) -> (i32, i32) {
    %c0_i32 = arith.constant 0 : i32
    return %arg0, %arg1 : i32, i32
  }
}

module attributes {stable_mosaic.version = 11 : i64} {
  func.func @kernel(%arg0: i32, %arg1: i32, %arg2: i32, %arg3: memref<16x64xbf16, #tpu.memory_space<vmem>>, %arg4: memref<64x32xbf16, #tpu.memory_space<vmem>>, %arg5: memref<1x32xf32, #tpu.memory_space<vmem>>, %arg6: memref<16x32xbf16, #tpu.memory_space<vmem>>, %arg7: memref<16x32xbf16, #tpu.memory_space<vmem>>) attributes {dimension_semantics = [#tpu.dimension_semantics<parallel>, #tpu.dimension_semantics<parallel>, #tpu.dimension_semantics<arbitrary>], iteration_bounds = array<i64: 1, 1, 1>, scalar_prefetch = 0 : i64, scratch_operands = 0 : i64, tpu.core_type = #tpu.core_type<tc>, window_params = [{transform_indices = @transform_0, window_bounds = array<i64: 16, 64>}, {transform_indices = @transform_1, window_bounds = array<i64: 64, 32>}, {transform_indices = @transform_2, window_bounds = array<i64: 1, 32>}, {transform_indices = @transform_3, window_bounds = array<i64: 16, 32>}, {transform_indices = @transform_4, window_bounds = array<i64: 16, 32>}]} {
    %c0 = arith.constant 0 : index
    %c0_0 = arith.constant 0 : index
    %0 = vector.load %arg3[%c0, %c0_0] : memref<16x64xbf16, #tpu.memory_space<vmem>>, vector<16x64xbf16>
    %c0_1 = arith.constant 0 : index
    %c0_2 = arith.constant 0 : index
    %1 = vector.load %arg4[%c0_1, %c0_2] : memref<64x32xbf16, #tpu.memory_space<vmem>>, vector<64x32xbf16>
    %cst = arith.constant dense<0.000000e+00> : vector<16x32xf32>
    %2 = tpu.matmul %0, %1, %cst {dimension_numbers = #tpu.dot_dimension_numbers<[1], [0], [0], [1], [0, 0, 1, 1], [], []>} : vector<16x64xbf16>, vector<64x32xbf16>, vector<16x32xf32> -> vector<16x32xf32>
    %c0_3 = arith.constant 0 : index
    %c0_4 = arith.constant 0 : index
    %3 = vector.load %arg5[%c0_3, %c0_4] : memref<1x32xf32, #tpu.memory_space<vmem>>, vector<1x32xf32>
    %4 = vector.broadcast %3 : vector<1x32xf32> to vector<16x32xf32>
    %5 = arith.addf %2, %4 : vector<16x32xf32>
    %c0_5 = arith.constant 0 : index
    %c0_6 = arith.constant 0 : index
    %6 = vector.load %arg6[%c0_5, %c0_6] : memref<16x32xbf16, #tpu.memory_space<vmem>>, vector<16x32xbf16>
    %7 = arith.extf %6 : vector<16x32xbf16> to vector<16x32xf32>
    %cst_7 = arith.constant 5.000000e-01 : f32
    %8 = vector.broadcast %cst_7 : f32 to vector<16x32xf32>
    %9 = arith.mulf %8, %5 : vector<16x32xf32>
    %10 = arith.addf %7, %9 : vector<16x32xf32>
    %11 = arith.truncf %10 : vector<16x32xf32> to vector<16x32xbf16>
    %c0_8 = arith.constant 0 : index
    %c0_9 = arith.constant 0 : index
    %12 = vector.load %arg7[%c0_8, %c0_9] : memref<16x32xbf16, #tpu.memory_space<vmem>>, vector<16x32xbf16>
    tpu.vector_store %arg7[%c0_8, %c0_9], %11 {strides = array<i32>} : memref<16x32xbf16, #tpu.memory_space<vmem>>, vector<16x32xbf16>,
    return
  }
  func.func @transform_0(%arg0: i32, %arg1: i32, %arg2: i32) -> (i32, i32) {
    %c0_i32 = arith.constant 0 : i32
    return %arg0, %arg2 : i32, i32
  }
  func.func @transform_1(%arg0: i32, %arg1: i32, %arg2: i32) -> (i32, i32) {
    %c0_i32 = arith.constant 0 : i32
    return %arg2, %arg1 : i32, i32
  }
  func.func @transform_2(%arg0: i32, %arg1: i32, %arg2: i32) -> (i32, i32) {
    %c0_i32 = arith.constant 0 : i32
    %c0_i32_0 = arith.constant 0 : i32
    return %c0_i32, %arg1 : i32, i32
  }
  func.func @transform_3(%arg0: i32, %arg1: i32, %arg2: i32) -> (i32, i32) {
    %c0_i32 = arith.constant 0 : i32
    return %arg0, %arg1 : i32, i32
  }
  func.func @transform_4(%arg0: i32, %arg1: i32, %arg2: i32) -> (i32, i32) {
    %c0_i32 = arith.constant 0 : i32
    return %arg0, %arg1 : i32, i32
  }
}

module attributes {stable_mosaic.version = 11 : i64} {
  func.func @_mhsa_kernel(%arg0: i32, %arg1: i32, %arg2: i32, %arg3: memref<1x8x96xbf16, #tpu.memory_space<vmem>>, %arg4: memref<1x8x96xbf16, #tpu.memory_space<vmem>>, %arg5: memref<1x8x32xbf16, #tpu.memory_space<vmem>>, %arg6: memref<4x8x1xf32, #tpu.memory_space<vmem>>, %arg7: memref<4x8x1xf32, #tpu.memory_space<vmem>>, %arg8: memref<4x8x8xf32, #tpu.memory_space<vmem>>) attributes {dimension_semantics = [#tpu.dimension_semantics<parallel>, #tpu.dimension_semantics<parallel>, #tpu.dimension_semantics<arbitrary>], iteration_bounds = array<i64: 2, 1, 1>, scalar_prefetch = 0 : i64, scratch_operands = 3 : i64, tpu.core_type = #tpu.core_type<tc>, window_params = [{transform_indices = @transform_0, window_bounds = array<i64: 1, 8, 96>}, {transform_indices = @transform_1, window_bounds = array<i64: 1, 8, 96>}, {transform_indices = @transform_2, window_bounds = array<i64: 1, 8, 32>}]} {
    %c0_i32 = arith.constant 0 : i32
    %0 = arith.cmpi eq, %arg2, %c0_i32 : i32
    %1 = arith.extui %0 : i1 to i32
    %c0_i32_0 = arith.constant 0 : i32
    %2 = arith.cmpi ne, %1, %c0_i32_0 : i32
    scf.if %2 {
      %cst_92 = arith.constant 0xFF800000 : f32
      %154 = vector.broadcast %cst_92 : f32 to vector<4x8x1xf32>
      %c0_93 = arith.constant 0 : index
      %c0_94 = arith.constant 0 : index
      %c0_95 = arith.constant 0 : index
      %155 = vector.load %arg6[%c0_93, %c0_94, %c0_95] : memref<4x8x1xf32, #tpu.memory_space<vmem>>, vector<4x8x1xf32>
      tpu.vector_store %arg6[%c0_93, %c0_94, %c0_95], %154 {strides = array<i32>} : memref<4x8x1xf32, #tpu.memory_space<vmem>>, vector<4x8x1xf32>,
      %cst_96 = arith.constant 0.000000e+00 : f32
      %156 = vector.broadcast %cst_96 : f32 to vector<4x8x1xf32>
      %c0_97 = arith.constant 0 : index
      %c0_98 = arith.constant 0 : index
      %c0_99 = arith.constant 0 : index
      %157 = vector.load %arg7[%c0_97, %c0_98, %c0_99] : memref<4x8x1xf32, #tpu.memory_space<vmem>>, vector<4x8x1xf32>
      tpu.vector_store %arg7[%c0_97, %c0_98, %c0_99], %156 {strides = array<i32>} : memref<4x8x1xf32, #tpu.memory_space<vmem>>, vector<4x8x1xf32>,
      %cst_100 = arith.constant 0.000000e+00 : f32
      %158 = vector.broadcast %cst_100 : f32 to vector<4x8x8xf32>
      %c0_101 = arith.constant 0 : index
      %c0_102 = arith.constant 0 : index
      %c0_103 = arith.constant 0 : index
      %159 = vector.load %arg8[%c0_101, %c0_102, %c0_103] : memref<4x8x8xf32, #tpu.memory_space<vmem>>, vector<4x8x8xf32>
      tpu.vector_store %arg8[%c0_101, %c0_102, %c0_103], %158 {strides = array<i32>} : memref<4x8x8xf32, #tpu.memory_space<vmem>>, vector<4x8x8xf32>,
    } else {
    }
    %c0 = arith.constant 0 : index
    %c0_1 = arith.constant 0 : index
    %c0_2 = arith.constant 0 : index
    %3 = vector.load %arg3[%c0, %c0_1, %c0_2] : memref<1x8x96xbf16, #tpu.memory_space<vmem>>, vector<1x8x96xbf16>
    %4 = vector.shape_cast %3 : vector<1x8x96xbf16> to vector<8x96xbf16>
    %c0_3 = arith.constant 0 : index
    %c0_4 = arith.constant 0 : index
    %c0_5 = arith.constant 0 : index
    %5 = vector.load %arg4[%c0_3, %c0_4, %c0_5] : memref<1x8x96xbf16, #tpu.memory_space<vmem>>, vector<1x8x96xbf16>
    %6 = vector.shape_cast %5 : vector<1x8x96xbf16> to vector<8x96xbf16>
    %7 = vector.extract_strided_slice %4 {offsets = [0, 0], sizes = [8, 8], strides = [1, 1]} : vector<8x96xbf16> to vector<8x8xbf16>
    %8 = vector.extract_strided_slice %6 {offsets = [0, 32], sizes = [8, 8], strides = [1, 1]} : vector<8x96xbf16> to vector<8x8xbf16>
    %9 = vector.extract_strided_slice %6 {offsets = [0, 64], sizes = [8, 8], strides = [1, 1]} : vector<8x96xbf16> to vector<8x8xbf16>
    %cst = arith.constant dense<0.000000e+00> : vector<8x8xf32>
    %10 = tpu.matmul %7, %8, %cst {dimension_numbers = #tpu.dot_dimension_numbers<[1], [1], [0], [0], [0, 0, 1, 0], [], []>} : vector<8x8xbf16>, vector<8x8xbf16>, vector<8x8xf32> -> vector<8x8xf32>
    %c0_6 = arith.constant 0 : index
    %c0_7 = arith.constant 0 : index
    %c0_8 = arith.constant 0 : index
    %11 = vector.load %arg6[%c0_6, %c0_7, %c0_8] : memref<4x8x1xf32, #tpu.memory_space<vmem>>, vector<1x8x1xf32>
    %12 = vector.shape_cast %11 : vector<1x8x1xf32> to vector<8x1xf32>
    %cst_9 = arith.constant dense<0xFF800000> : vector<8xf32>
    %13 = vector.multi_reduction <maximumf>, %10, %cst_9 [1] : vector<8x8xf32> to vector<8xf32>
    %14 = vector.shape_cast %13 : vector<8xf32> to vector<8x1xf32>
    %15 = arith.maximumf %12, %14 : vector<8x1xf32>
    %16 = arith.subf %12, %15 : vector<8x1xf32>
    %17 = math.exp %16 : vector<8x1xf32>
    %18 = vector.broadcast %15 : vector<8x1xf32> to vector<8x8xf32>
    %19 = arith.subf %10, %18 : vector<8x8xf32>
    %20 = math.exp %19 : vector<8x8xf32>
    %c0_10 = arith.constant 0 : index
    %c0_11 = arith.constant 0 : index
    %c0_12 = arith.constant 0 : index
    %21 = vector.load %arg7[%c0_10, %c0_11, %c0_12] : memref<4x8x1xf32, #tpu.memory_space<vmem>>, vector<1x8x1xf32>
    %22 = vector.shape_cast %21 : vector<1x8x1xf32> to vector<8x1xf32>
    %23 = arith.mulf %17, %22 : vector<8x1xf32>
    %cst_13 = arith.constant dense<0.000000e+00> : vector<8xf32>
    %24 = vector.multi_reduction <add>, %20, %cst_13 [1] : vector<8x8xf32> to vector<8xf32>
    %25 = vector.shape_cast %24 : vector<8xf32> to vector<8x1xf32>
    %26 = arith.addf %23, %25 : vector<8x1xf32>
    %c0_14 = arith.constant 0 : index
    %c0_15 = arith.constant 0 : index
    %c0_16 = arith.constant 0 : index
    %27 = vector.load %arg7[%c0_14, %c0_15, %c0_16] : memref<4x8x1xf32, #tpu.memory_space<vmem>>, vector<1x8x1xf32>
    %28 = vector.shape_cast %27 : vector<1x8x1xf32> to vector<8x1xf32>
    %29 = vector.shape_cast %26 : vector<8x1xf32> to vector<1x8x1xf32>
    tpu.vector_store %arg7[%c0_14, %c0_15, %c0_16], %29 {strides = array<i32>} : memref<4x8x1xf32, #tpu.memory_space<vmem>>, vector<1x8x1xf32>,
    %c0_17 = arith.constant 0 : index
    %c0_18 = arith.constant 0 : index
    %c0_19 = arith.constant 0 : index
    %30 = vector.load %arg8[%c0_17, %c0_18, %c0_19] : memref<4x8x8xf32, #tpu.memory_space<vmem>>, vector<1x8x8xf32>
    %31 = vector.shape_cast %30 : vector<1x8x8xf32> to vector<8x8xf32>
    %32 = vector.broadcast %17 : vector<8x1xf32> to vector<8x8xf32>
    %33 = arith.mulf %32, %31 : vector<8x8xf32>
    %34 = arith.truncf %20 : vector<8x8xf32> to vector<8x8xbf16>
    %cst_20 = arith.constant dense<0.000000e+00> : vector<8x8xf32>
    %35 = tpu.matmul %34, %9, %cst_20 {dimension_numbers = #tpu.dot_dimension_numbers<[1], [0], [0], [1], [0, 0, 1, 1], [], []>} : vector<8x8xbf16>, vector<8x8xbf16>, vector<8x8xf32> -> vector<8x8xf32>
    %36 = arith.addf %33, %35 : vector<8x8xf32>
    %c0_21 = arith.constant 0 : index
    %c0_22 = arith.constant 0 : index
    %c0_23 = arith.constant 0 : index
    %37 = vector.load %arg8[%c0_21, %c0_22, %c0_23] : memref<4x8x8xf32, #tpu.memory_space<vmem>>, vector<1x8x8xf32>
    %38 = vector.shape_cast %37 : vector<1x8x8xf32> to vector<8x8xf32>
    %39 = vector.shape_cast %36 : vector<8x8xf32> to vector<1x8x8xf32>
    tpu.vector_store %arg8[%c0_21, %c0_22, %c0_23], %39 {strides = array<i32>} : memref<4x8x8xf32, #tpu.memory_space<vmem>>, vector<1x8x8xf32>,
    %c0_24 = arith.constant 0 : index
    %c0_25 = arith.constant 0 : index
    %c0_26 = arith.constant 0 : index
    %40 = vector.load %arg6[%c0_24, %c0_25, %c0_26] : memref<4x8x1xf32, #tpu.memory_space<vmem>>, vector<1x8x1xf32>
    %41 = vector.shape_cast %40 : vector<1x8x1xf32> to vector<8x1xf32>
    %42 = vector.shape_cast %15 : vector<8x1xf32> to vector<1x8x1xf32>
    tpu.vector_store %arg6[%c0_24, %c0_25, %c0_26], %42 {strides = array<i32>} : memref<4x8x1xf32, #tpu.memory_space<vmem>>, vector<1x8x1xf32>,
    %43 = vector.extract_strided_slice %4 {offsets = [0, 8], sizes = [8, 8], strides = [1, 1]} : vector<8x96xbf16> to vector<8x8xbf16>
    %44 = vector.extract_strided_slice %6 {offsets = [0, 40], sizes = [8, 8], strides = [1, 1]} : vector<8x96xbf16> to vector<8x8xbf16>
    %45 = vector.extract_strided_slice %6 {offsets = [0, 72], sizes = [8, 8], strides = [1, 1]} : vector<8x96xbf16> to vector<8x8xbf16>
    %cst_27 = arith.constant dense<0.000000e+00> : vector<8x8xf32>
    %46 = tpu.matmul %43, %44, %cst_27 {dimension_numbers = #tpu.dot_dimension_numbers<[1], [1], [0], [0], [0, 0, 1, 0], [], []>} : vector<8x8xbf16>, vector<8x8xbf16>, vector<8x8xf32> -> vector<8x8xf32>
    %c1 = arith.constant 1 : index
    %c0_28 = arith.constant 0 : index
    %c0_29 = arith.constant 0 : index
    %47 = vector.load %arg6[%c1, %c0_28, %c0_29] : memref<4x8x1xf32, #tpu.memory_space<vmem>>, vector<1x8x1xf32>
    %48 = vector.shape_cast %47 : vector<1x8x1xf32> to vector<8x1xf32>
    %cst_30 = arith.constant dense<0xFF800000> : vector<8xf32>
    %49 = vector.multi_reduction <maximumf>, %46, %cst_30 [1] : vector<8x8xf32> to vector<8xf32>
    %50 = vector.shape_cast %49 : vector<8xf32> to vector<8x1xf32>
    %51 = arith.maximumf %48, %50 : vector<8x1xf32>
    %52 = arith.subf %48, %51 : vector<8x1xf32>
    %53 = math.exp %52 : vector<8x1xf32>
    %54 = vector.broadcast %51 : vector<8x1xf32> to vector<8x8xf32>
    %55 = arith.subf %46, %54 : vector<8x8xf32>
    %56 = math.exp %55 : vector<8x8xf32>
    %c1_31 = arith.constant 1 : index
    %c0_32 = arith.constant 0 : index
    %c0_33 = arith.constant 0 : index
    %57 = vector.load %arg7[%c1_31, %c0_32, %c0_33] : memref<4x8x1xf32, #tpu.memory_space<vmem>>, vector<1x8x1xf32>
    %58 = vector.shape_cast %57 : vector<1x8x1xf32> to vector<8x1xf32>
    %59 = arith.mulf %53, %58 : vector<8x1xf32>
    %cst_34 = arith.constant dense<0.000000e+00> : vector<8xf32>
    %60 = vector.multi_reduction <add>, %56, %cst_34 [1] : vector<8x8xf32> to vector<8xf32>
    %61 = vector.shape_cast %60 : vector<8xf32> to vector<8x1xf32>
    %62 = arith.addf %59, %61 : vector<8x1xf32>
    %c1_35 = arith.constant 1 : index
    %c0_36 = arith.constant 0 : index
    %c0_37 = arith.constant 0 : index
    %63 = vector.load %arg7[%c1_35, %c0_36, %c0_37] : memref<4x8x1xf32, #tpu.memory_space<vmem>>, vector<1x8x1xf32>
    %64 = vector.shape_cast %63 : vector<1x8x1xf32> to vector<8x1xf32>
    %65 = vector.shape_cast %62 : vector<8x1xf32> to vector<1x8x1xf32>
    tpu.vector_store %arg7[%c1_35, %c0_36, %c0_37], %65 {strides = array<i32>} : memref<4x8x1xf32, #tpu.memory_space<vmem>>, vector<1x8x1xf32>,
    %c1_38 = arith.constant 1 : index
    %c0_39 = arith.constant 0 : index
    %c0_40 = arith.constant 0 : index
    %66 = vector.load %arg8[%c1_38, %c0_39, %c0_40] : memref<4x8x8xf32, #tpu.memory_space<vmem>>, vector<1x8x8xf32>
    %67 = vector.shape_cast %66 : vector<1x8x8xf32> to vector<8x8xf32>
    %68 = vector.broadcast %53 : vector<8x1xf32> to vector<8x8xf32>
    %69 = arith.mulf %68, %67 : vector<8x8xf32>
    %70 = arith.truncf %56 : vector<8x8xf32> to vector<8x8xbf16>
    %cst_41 = arith.constant dense<0.000000e+00> : vector<8x8xf32>
    %71 = tpu.matmul %70, %45, %cst_41 {dimension_numbers = #tpu.dot_dimension_numbers<[1], [0], [0], [1], [0, 0, 1, 1], [], []>} : vector<8x8xbf16>, vector<8x8xbf16>, vector<8x8xf32> -> vector<8x8xf32>
    %72 = arith.addf %69, %71 : vector<8x8xf32>
    %c1_42 = arith.constant 1 : index
    %c0_43 = arith.constant 0 : index
    %c0_44 = arith.constant 0 : index
    %73 = vector.load %arg8[%c1_42, %c0_43, %c0_44] : memref<4x8x8xf32, #tpu.memory_space<vmem>>, vector<1x8x8xf32>
    %74 = vector.shape_cast %73 : vector<1x8x8xf32> to vector<8x8xf32>
    %75 = vector.shape_cast %72 : vector<8x8xf32> to vector<1x8x8xf32>
    tpu.vector_store %arg8[%c1_42, %c0_43, %c0_44], %75 {strides = array<i32>} : memref<4x8x8xf32, #tpu.memory_space<vmem>>, vector<1x8x8xf32>,
    %c1_45 = arith.constant 1 : index
    %c0_46 = arith.constant 0 : index
    %c0_47 = arith.constant 0 : index
    %76 = vector.load %arg6[%c1_45, %c0_46, %c0_47] : memref<4x8x1xf32, #tpu.memory_space<vmem>>, vector<1x8x1xf32>
    %77 = vector.shape_cast %76 : vector<1x8x1xf32> to vector<8x1xf32>
    %78 = vector.shape_cast %51 : vector<8x1xf32> to vector<1x8x1xf32>
    tpu.vector_store %arg6[%c1_45, %c0_46, %c0_47], %78 {strides = array<i32>} : memref<4x8x1xf32, #tpu.memory_space<vmem>>, vector<1x8x1xf32>,
    %79 = vector.extract_strided_slice %4 {offsets = [0, 16], sizes = [8, 8], strides = [1, 1]} : vector<8x96xbf16> to vector<8x8xbf16>
    %80 = vector.extract_strided_slice %6 {offsets = [0, 48], sizes = [8, 8], strides = [1, 1]} : vector<8x96xbf16> to vector<8x8xbf16>
    %81 = vector.extract_strided_slice %6 {offsets = [0, 80], sizes = [8, 8], strides = [1, 1]} : vector<8x96xbf16> to vector<8x8xbf16>
    %cst_48 = arith.constant dense<0.000000e+00> : vector<8x8xf32>
    %82 = tpu.matmul %79, %80, %cst_48 {dimension_numbers = #tpu.dot_dimension_numbers<[1], [1], [0], [0], [0, 0, 1, 0], [], []>} : vector<8x8xbf16>, vector<8x8xbf16>, vector<8x8xf32> -> vector<8x8xf32>
    %c2 = arith.constant 2 : index
    %c0_49 = arith.constant 0 : index
    %c0_50 = arith.constant 0 : index
    %83 = vector.load %arg6[%c2, %c0_49, %c0_50] : memref<4x8x1xf32, #tpu.memory_space<vmem>>, vector<1x8x1xf32>
    %84 = vector.shape_cast %83 : vector<1x8x1xf32> to vector<8x1xf32>
    %cst_51 = arith.constant dense<0xFF800000> : vector<8xf32>
    %85 = vector.multi_reduction <maximumf>, %82, %cst_51 [1] : vector<8x8xf32> to vector<8xf32>
    %86 = vector.shape_cast %85 : vector<8xf32> to vector<8x1xf32>
    %87 = arith.maximumf %84, %86 : vector<8x1xf32>
    %88 = arith.subf %84, %87 : vector<8x1xf32>
    %89 = math.exp %88 : vector<8x1xf32>
    %90 = vector.broadcast %87 : vector<8x1xf32> to vector<8x8xf32>
    %91 = arith.subf %82, %90 : vector<8x8xf32>
    %92 = math.exp %91 : vector<8x8xf32>
    %c2_52 = arith.constant 2 : index
    %c0_53 = arith.constant 0 : index
    %c0_54 = arith.constant 0 : index
    %93 = vector.load %arg7[%c2_52, %c0_53, %c0_54] : memref<4x8x1xf32, #tpu.memory_space<vmem>>, vector<1x8x1xf32>
    %94 = vector.shape_cast %93 : vector<1x8x1xf32> to vector<8x1xf32>
    %95 = arith.mulf %89, %94 : vector<8x1xf32>
    %cst_55 = arith.constant dense<0.000000e+00> : vector<8xf32>
    %96 = vector.multi_reduction <add>, %92, %cst_55 [1] : vector<8x8xf32> to vector<8xf32>
    %97 = vector.shape_cast %96 : vector<8xf32> to vector<8x1xf32>
    %98 = arith.addf %95, %97 : vector<8x1xf32>
    %c2_56 = arith.constant 2 : index
    %c0_57 = arith.constant 0 : index
    %c0_58 = arith.constant 0 : index
    %99 = vector.load %arg7[%c2_56, %c0_57, %c0_58] : memref<4x8x1xf32, #tpu.memory_space<vmem>>, vector<1x8x1xf32>
    %100 = vector.shape_cast %99 : vector<1x8x1xf32> to vector<8x1xf32>
    %101 = vector.shape_cast %98 : vector<8x1xf32> to vector<1x8x1xf32>
    tpu.vector_store %arg7[%c2_56, %c0_57, %c0_58], %101 {strides = array<i32>} : memref<4x8x1xf32, #tpu.memory_space<vmem>>, vector<1x8x1xf32>,
    %c2_59 = arith.constant 2 : index
    %c0_60 = arith.constant 0 : index
    %c0_61 = arith.constant 0 : index
    %102 = vector.load %arg8[%c2_59, %c0_60, %c0_61] : memref<4x8x8xf32, #tpu.memory_space<vmem>>, vector<1x8x8xf32>
    %103 = vector.shape_cast %102 : vector<1x8x8xf32> to vector<8x8xf32>
    %104 = vector.broadcast %89 : vector<8x1xf32> to vector<8x8xf32>
    %105 = arith.mulf %104, %103 : vector<8x8xf32>
    %106 = arith.truncf %92 : vector<8x8xf32> to vector<8x8xbf16>
    %cst_62 = arith.constant dense<0.000000e+00> : vector<8x8xf32>
    %107 = tpu.matmul %106, %81, %cst_62 {dimension_numbers = #tpu.dot_dimension_numbers<[1], [0], [0], [1], [0, 0, 1, 1], [], []>} : vector<8x8xbf16>, vector<8x8xbf16>, vector<8x8xf32> -> vector<8x8xf32>
    %108 = arith.addf %105, %107 : vector<8x8xf32>
    %c2_63 = arith.constant 2 : index
    %c0_64 = arith.constant 0 : index
    %c0_65 = arith.constant 0 : index
    %109 = vector.load %arg8[%c2_63, %c0_64, %c0_65] : memref<4x8x8xf32, #tpu.memory_space<vmem>>, vector<1x8x8xf32>
    %110 = vector.shape_cast %109 : vector<1x8x8xf32> to vector<8x8xf32>
    %111 = vector.shape_cast %108 : vector<8x8xf32> to vector<1x8x8xf32>
    tpu.vector_store %arg8[%c2_63, %c0_64, %c0_65], %111 {strides = array<i32>} : memref<4x8x8xf32, #tpu.memory_space<vmem>>, vector<1x8x8xf32>,
    %c2_66 = arith.constant 2 : index
    %c0_67 = arith.constant 0 : index
    %c0_68 = arith.constant 0 : index
    %112 = vector.load %arg6[%c2_66, %c0_67, %c0_68] : memref<4x8x1xf32, #tpu.memory_space<vmem>>, vector<1x8x1xf32>
    %113 = vector.shape_cast %112 : vector<1x8x1xf32> to vector<8x1xf32>
    %114 = vector.shape_cast %87 : vector<8x1xf32> to vector<1x8x1xf32>
    tpu.vector_store %arg6[%c2_66, %c0_67, %c0_68], %114 {strides = array<i32>} : memref<4x8x1xf32, #tpu.memory_space<vmem>>, vector<1x8x1xf32>,
    %115 = vector.extract_strided_slice %4 {offsets = [0, 24], sizes = [8, 8], strides = [1, 1]} : vector<8x96xbf16> to vector<8x8xbf16>
    %116 = vector.extract_strided_slice %6 {offsets = [0, 56], sizes = [8, 8], strides = [1, 1]} : vector<8x96xbf16> to vector<8x8xbf16>
    %117 = vector.extract_strided_slice %6 {offsets = [0, 88], sizes = [8, 8], strides = [1, 1]} : vector<8x96xbf16> to vector<8x8xbf16>
    %cst_69 = arith.constant dense<0.000000e+00> : vector<8x8xf32>
    %118 = tpu.matmul %115, %116, %cst_69 {dimension_numbers = #tpu.dot_dimension_numbers<[1], [1], [0], [0], [0, 0, 1, 0], [], []>} : vector<8x8xbf16>, vector<8x8xbf16>, vector<8x8xf32> -> vector<8x8xf32>
    %c3 = arith.constant 3 : index
    %c0_70 = arith.constant 0 : index
    %c0_71 = arith.constant 0 : index
    %119 = vector.load %arg6[%c3, %c0_70, %c0_71] : memref<4x8x1xf32, #tpu.memory_space<vmem>>, vector<1x8x1xf32>
    %120 = vector.shape_cast %119 : vector<1x8x1xf32> to vector<8x1xf32>
    %cst_72 = arith.constant dense<0xFF800000> : vector<8xf32>
    %121 = vector.multi_reduction <maximumf>, %118, %cst_72 [1] : vector<8x8xf32> to vector<8xf32>
    %122 = vector.shape_cast %121 : vector<8xf32> to vector<8x1xf32>
    %123 = arith.maximumf %120, %122 : vector<8x1xf32>
    %124 = arith.subf %120, %123 : vector<8x1xf32>
    %125 = math.exp %124 : vector<8x1xf32>
    %126 = vector.broadcast %123 : vector<8x1xf32> to vector<8x8xf32>
    %127 = arith.subf %118, %126 : vector<8x8xf32>
    %128 = math.exp %127 : vector<8x8xf32>
    %c3_73 = arith.constant 3 : index
    %c0_74 = arith.constant 0 : index
    %c0_75 = arith.constant 0 : index
    %129 = vector.load %arg7[%c3_73, %c0_74, %c0_75] : memref<4x8x1xf32, #tpu.memory_space<vmem>>, vector<1x8x1xf32>
    %130 = vector.shape_cast %129 : vector<1x8x1xf32> to vector<8x1xf32>
    %131 = arith.mulf %125, %130 : vector<8x1xf32>
    %cst_76 = arith.constant dense<0.000000e+00> : vector<8xf32>
    %132 = vector.multi_reduction <add>, %128, %cst_76 [1] : vector<8x8xf32> to vector<8xf32>
    %133 = vector.shape_cast %132 : vector<8xf32> to vector<8x1xf32>
    %134 = arith.addf %131, %133 : vector<8x1xf32>
    %c3_77 = arith.constant 3 : index
    %c0_78 = arith.constant 0 : index
    %c0_79 = arith.constant 0 : index
    %135 = vector.load %arg7[%c3_77, %c0_78, %c0_79] : memref<4x8x1xf32, #tpu.memory_space<vmem>>, vector<1x8x1xf32>
    %136 = vector.shape_cast %135 : vector<1x8x1xf32> to vector<8x1xf32>
    %137 = vector.shape_cast %134 : vector<8x1xf32> to vector<1x8x1xf32>
    tpu.vector_store %arg7[%c3_77, %c0_78, %c0_79], %137 {strides = array<i32>} : memref<4x8x1xf32, #tpu.memory_space<vmem>>, vector<1x8x1xf32>,
    %c3_80 = arith.constant 3 : index
    %c0_81 = arith.constant 0 : index
    %c0_82 = arith.constant 0 : index
    %138 = vector.load %arg8[%c3_80, %c0_81, %c0_82] : memref<4x8x8xf32, #tpu.memory_space<vmem>>, vector<1x8x8xf32>
    %139 = vector.shape_cast %138 : vector<1x8x8xf32> to vector<8x8xf32>
    %140 = vector.broadcast %125 : vector<8x1xf32> to vector<8x8xf32>
    %141 = arith.mulf %140, %139 : vector<8x8xf32>
    %142 = arith.truncf %128 : vector<8x8xf32> to vector<8x8xbf16>
    %cst_83 = arith.constant dense<0.000000e+00> : vector<8x8xf32>
    %143 = tpu.matmul %142, %117, %cst_83 {dimension_numbers = #tpu.dot_dimension_numbers<[1], [0], [0], [1], [0, 0, 1, 1], [], []>} : vector<8x8xbf16>, vector<8x8xbf16>, vector<8x8xf32> -> vector<8x8xf32>
    %144 = arith.addf %141, %143 : vector<8x8xf32>
    %c3_84 = arith.constant 3 : index
    %c0_85 = arith.constant 0 : index
    %c0_86 = arith.constant 0 : index
    %145 = vector.load %arg8[%c3_84, %c0_85, %c0_86] : memref<4x8x8xf32, #tpu.memory_space<vmem>>, vector<1x8x8xf32>
    %146 = vector.shape_cast %145 : vector<1x8x8xf32> to vector<8x8xf32>
    %147 = vector.shape_cast %144 : vector<8x8xf32> to vector<1x8x8xf32>
    tpu.vector_store %arg8[%c3_84, %c0_85, %c0_86], %147 {strides = array<i32>} : memref<4x8x8xf32, #tpu.memory_space<vmem>>, vector<1x8x8xf32>,
    %c3_87 = arith.constant 3 : index
    %c0_88 = arith.constant 0 : index
    %c0_89 = arith.constant 0 : index
    %148 = vector.load %arg6[%c3_87, %c0_88, %c0_89] : memref<4x8x1xf32, #tpu.memory_space<vmem>>, vector<1x8x1xf32>
    %149 = vector.shape_cast %148 : vector<1x8x1xf32> to vector<8x1xf32>
    %150 = vector.shape_cast %123 : vector<8x1xf32> to vector<1x8x1xf32>
    tpu.vector_store %arg6[%c3_87, %c0_88, %c0_89], %150 {strides = array<i32>} : memref<4x8x1xf32, #tpu.memory_space<vmem>>, vector<1x8x1xf32>,
    %c0_i32_90 = arith.constant 0 : i32
    %151 = arith.cmpi eq, %arg2, %c0_i32_90 : i32
    %152 = arith.extui %151 : i1 to i32
    %c0_i32_91 = arith.constant 0 : i32
    %153 = arith.cmpi ne, %152, %c0_i32_91 : i32
    scf.if %153 {
      %c0_92 = arith.constant 0 : index
      %c0_93 = arith.constant 0 : index
      %c0_94 = arith.constant 0 : index
      %154 = vector.load %arg7[%c0_92, %c0_93, %c0_94] : memref<4x8x1xf32, #tpu.memory_space<vmem>>, vector<1x8x1xf32>
      %155 = vector.shape_cast %154 : vector<1x8x1xf32> to vector<8x1xf32>
      %156 = tpu.reciprocal %155 {approx = true} : vector<8x1xf32> -> vector<8x1xf32>
      %c0_95 = arith.constant 0 : index
      %c0_96 = arith.constant 0 : index
      %c0_97 = arith.constant 0 : index
      %157 = vector.load %arg8[%c0_95, %c0_96, %c0_97] : memref<4x8x8xf32, #tpu.memory_space<vmem>>, vector<1x8x8xf32>
      %158 = vector.shape_cast %157 : vector<1x8x8xf32> to vector<8x8xf32>
      %159 = vector.broadcast %156 : vector<8x1xf32> to vector<8x8xf32>
      %160 = arith.mulf %158, %159 : vector<8x8xf32>
      %161 = arith.truncf %160 : vector<8x8xf32> to vector<8x8xbf16>
      %c1_98 = arith.constant 1 : index
      %c0_99 = arith.constant 0 : index
      %c0_100 = arith.constant 0 : index
      %162 = vector.load %arg7[%c1_98, %c0_99, %c0_100] : memref<4x8x1xf32, #tpu.memory_space<vmem>>, vector<1x8x1xf32>
      %163 = vector.shape_cast %162 : vector<1x8x1xf32> to vector<8x1xf32>
      %164 = tpu.reciprocal %163 {approx = true} : vector<8x1xf32> -> vector<8x1xf32>
      %c1_101 = arith.constant 1 : index
      %c0_102 = arith.constant 0 : index
      %c0_103 = arith.constant 0 : index
      %165 = vector.load %arg8[%c1_101, %c0_102, %c0_103] : memref<4x8x8xf32, #tpu.memory_space<vmem>>, vector<1x8x8xf32>
      %166 = vector.shape_cast %165 : vector<1x8x8xf32> to vector<8x8xf32>
      %167 = vector.broadcast %164 : vector<8x1xf32> to vector<8x8xf32>
      %168 = arith.mulf %166, %167 : vector<8x8xf32>
      %169 = arith.truncf %168 : vector<8x8xf32> to vector<8x8xbf16>
      %c2_104 = arith.constant 2 : index
      %c0_105 = arith.constant 0 : index
      %c0_106 = arith.constant 0 : index
      %170 = vector.load %arg7[%c2_104, %c0_105, %c0_106] : memref<4x8x1xf32, #tpu.memory_space<vmem>>, vector<1x8x1xf32>
      %171 = vector.shape_cast %170 : vector<1x8x1xf32> to vector<8x1xf32>
      %172 = tpu.reciprocal %171 {approx = true} : vector<8x1xf32> -> vector<8x1xf32>
      %c2_107 = arith.constant 2 : index
      %c0_108 = arith.constant 0 : index
      %c0_109 = arith.constant 0 : index
      %173 = vector.load %arg8[%c2_107, %c0_108, %c0_109] : memref<4x8x8xf32, #tpu.memory_space<vmem>>, vector<1x8x8xf32>
      %174 = vector.shape_cast %173 : vector<1x8x8xf32> to vector<8x8xf32>
      %175 = vector.broadcast %172 : vector<8x1xf32> to vector<8x8xf32>
      %176 = arith.mulf %174, %175 : vector<8x8xf32>
      %177 = arith.truncf %176 : vector<8x8xf32> to vector<8x8xbf16>
      %c3_110 = arith.constant 3 : index
      %c0_111 = arith.constant 0 : index
      %c0_112 = arith.constant 0 : index
      %178 = vector.load %arg7[%c3_110, %c0_111, %c0_112] : memref<4x8x1xf32, #tpu.memory_space<vmem>>, vector<1x8x1xf32>
      %179 = vector.shape_cast %178 : vector<1x8x1xf32> to vector<8x1xf32>
      %180 = tpu.reciprocal %179 {approx = true} : vector<8x1xf32> -> vector<8x1xf32>
      %c3_113 = arith.constant 3 : index
      %c0_114 = arith.constant 0 : index
      %c0_115 = arith.constant 0 : index
      %181 = vector.load %arg8[%c3_113, %c0_114, %c0_115] : memref<4x8x8xf32, #tpu.memory_space<vmem>>, vector<1x8x8xf32>
      %182 = vector.shape_cast %181 : vector<1x8x8xf32> to vector<8x8xf32>
      %183 = vector.broadcast %180 : vector<8x1xf32> to vector<8x8xf32>
      %184 = arith.mulf %182, %183 : vector<8x8xf32>
      %185 = arith.truncf %184 : vector<8x8xf32> to vector<8x8xbf16>
      %186 = tpu.concatenate %161, %169, %177, %185 in 1 : vector<8x8xbf16>, vector<8x8xbf16>, vector<8x8xbf16>, vector<8x8xbf16> -> vector<8x32xbf16>
      %c0_116 = arith.constant 0 : index
      %c0_117 = arith.constant 0 : index
      %c0_118 = arith.constant 0 : index
      %187 = vector.load %arg5[%c0_116, %c0_117, %c0_118] : memref<1x8x32xbf16, #tpu.memory_space<vmem>>, vector<1x8x32xbf16>
      %188 = vector.shape_cast %187 : vector<1x8x32xbf16> to vector<8x32xbf16>
      %189 = vector.shape_cast %186 : vector<8x32xbf16> to vector<1x8x32xbf16>
      tpu.vector_store %arg5[%c0_116, %c0_117, %c0_118], %189 {strides = array<i32>} : memref<1x8x32xbf16, #tpu.memory_space<vmem>>, vector<1x8x32xbf16>,
    } else {
    }
    return
  }
  func.func @transform_0(%arg0: i32, %arg1: i32, %arg2: i32) -> (i32, i32, i32) {
    %c0_i32 = arith.constant 0 : i32
    %c0_i32_0 = arith.constant 0 : i32
    return %arg0, %arg1, %c0_i32 : i32, i32, i32
  }
  func.func @transform_1(%arg0: i32, %arg1: i32, %arg2: i32) -> (i32, i32, i32) {
    %c0_i32 = arith.constant 0 : i32
    %c0_i32_0 = arith.constant 0 : i32
    return %arg0, %arg2, %c0_i32 : i32, i32, i32
  }
  func.func @transform_2(%arg0: i32, %arg1: i32, %arg2: i32) -> (i32, i32, i32) {
    %c0_i32 = arith.constant 0 : i32
    %c0_i32_0 = arith.constant 0 : i32
    return %arg0, %arg1, %c0_i32 : i32, i32, i32
  }
}

module attributes {stable_mosaic.version = 11 : i64} {
  func.func @_dwconv_kernel(%arg0: i32, %arg1: memref<1x14x32xbf16, #tpu.memory_space<vmem>>, %arg2: memref<7x32xbf16, #tpu.memory_space<vmem>>, %arg3: memref<1x32xf32, #tpu.memory_space<vmem>>, %arg4: memref<1x8x32xbf16, #tpu.memory_space<vmem>>) attributes {dimension_semantics = [#tpu.dimension_semantics<parallel>], iteration_bounds = array<i64: 2>, scalar_prefetch = 0 : i64, scratch_operands = 0 : i64, tpu.core_type = #tpu.core_type<tc>, window_params = [{transform_indices = @transform_0, window_bounds = array<i64: 1, 14, 32>}, {pipeline_mode = #tpu.pipeline_mode<synchronous>, transform_indices = @transform_1, window_bounds = array<i64: 7, 32>}, {pipeline_mode = #tpu.pipeline_mode<synchronous>, transform_indices = @transform_2, window_bounds = array<i64: 1, 32>}, {transform_indices = @transform_3, window_bounds = array<i64: 1, 8, 32>}]} {
    %c0 = arith.constant 0 : index
    %c0_0 = arith.constant 0 : index
    %c0_1 = arith.constant 0 : index
    %0 = vector.load %arg1[%c0, %c0_0, %c0_1] : memref<1x14x32xbf16, #tpu.memory_space<vmem>>, vector<1x14x32xbf16>
    %1 = vector.shape_cast %0 : vector<1x14x32xbf16> to vector<14x32xbf16>
    %2 = arith.extf %1 : vector<14x32xbf16> to vector<14x32xf32>
    %c0_2 = arith.constant 0 : index
    %c0_3 = arith.constant 0 : index
    %3 = vector.load %arg2[%c0_2, %c0_3] : memref<7x32xbf16, #tpu.memory_space<vmem>>, vector<7x32xbf16>
    %4 = arith.extf %3 : vector<7x32xbf16> to vector<7x32xf32>
    %5 = vector.extract_strided_slice %2 {offsets = [0, 0], sizes = [8, 32], strides = [1, 1]} : vector<14x32xf32> to vector<8x32xf32>
    %6 = vector.extract_strided_slice %4 {offsets = [0, 0], sizes = [1, 32], strides = [1, 1]} : vector<7x32xf32> to vector<1x32xf32>
    %7 = vector.broadcast %6 : vector<1x32xf32> to vector<8x32xf32>
    %8 = arith.mulf %5, %7 : vector<8x32xf32>
    %9 = vector.extract_strided_slice %2 {offsets = [1, 0], sizes = [8, 32], strides = [1, 1]} : vector<14x32xf32> to vector<8x32xf32>
    %10 = vector.extract_strided_slice %4 {offsets = [1, 0], sizes = [1, 32], strides = [1, 1]} : vector<7x32xf32> to vector<1x32xf32>
    %11 = vector.broadcast %10 : vector<1x32xf32> to vector<8x32xf32>
    %12 = arith.mulf %9, %11 : vector<8x32xf32>
    %13 = arith.addf %8, %12 : vector<8x32xf32>
    %14 = vector.extract_strided_slice %2 {offsets = [2, 0], sizes = [8, 32], strides = [1, 1]} : vector<14x32xf32> to vector<8x32xf32>
    %15 = vector.extract_strided_slice %4 {offsets = [2, 0], sizes = [1, 32], strides = [1, 1]} : vector<7x32xf32> to vector<1x32xf32>
    %16 = vector.broadcast %15 : vector<1x32xf32> to vector<8x32xf32>
    %17 = arith.mulf %14, %16 : vector<8x32xf32>
    %18 = arith.addf %13, %17 : vector<8x32xf32>
    %19 = vector.extract_strided_slice %2 {offsets = [3, 0], sizes = [8, 32], strides = [1, 1]} : vector<14x32xf32> to vector<8x32xf32>
    %20 = vector.extract_strided_slice %4 {offsets = [3, 0], sizes = [1, 32], strides = [1, 1]} : vector<7x32xf32> to vector<1x32xf32>
    %21 = vector.broadcast %20 : vector<1x32xf32> to vector<8x32xf32>
    %22 = arith.mulf %19, %21 : vector<8x32xf32>
    %23 = arith.addf %18, %22 : vector<8x32xf32>
    %24 = vector.extract_strided_slice %2 {offsets = [4, 0], sizes = [8, 32], strides = [1, 1]} : vector<14x32xf32> to vector<8x32xf32>
    %25 = vector.extract_strided_slice %4 {offsets = [4, 0], sizes = [1, 32], strides = [1, 1]} : vector<7x32xf32> to vector<1x32xf32>
    %26 = vector.broadcast %25 : vector<1x32xf32> to vector<8x32xf32>
    %27 = arith.mulf %24, %26 : vector<8x32xf32>
    %28 = arith.addf %23, %27 : vector<8x32xf32>
    %29 = vector.extract_strided_slice %2 {offsets = [5, 0], sizes = [8, 32], strides = [1, 1]} : vector<14x32xf32> to vector<8x32xf32>
    %30 = vector.extract_strided_slice %4 {offsets = [5, 0], sizes = [1, 32], strides = [1, 1]} : vector<7x32xf32> to vector<1x32xf32>
    %31 = vector.broadcast %30 : vector<1x32xf32> to vector<8x32xf32>
    %32 = arith.mulf %29, %31 : vector<8x32xf32>
    %33 = arith.addf %28, %32 : vector<8x32xf32>
    %34 = vector.extract_strided_slice %2 {offsets = [6, 0], sizes = [8, 32], strides = [1, 1]} : vector<14x32xf32> to vector<8x32xf32>
    %35 = vector.extract_strided_slice %4 {offsets = [6, 0], sizes = [1, 32], strides = [1, 1]} : vector<7x32xf32> to vector<1x32xf32>
    %36 = vector.broadcast %35 : vector<1x32xf32> to vector<8x32xf32>
    %37 = arith.mulf %34, %36 : vector<8x32xf32>
    %38 = arith.addf %33, %37 : vector<8x32xf32>
    %c0_4 = arith.constant 0 : index
    %c0_5 = arith.constant 0 : index
    %39 = vector.load %arg3[%c0_4, %c0_5] : memref<1x32xf32, #tpu.memory_space<vmem>>, vector<1x32xf32>
    %40 = vector.broadcast %39 : vector<1x32xf32> to vector<8x32xf32>
    %41 = arith.addf %38, %40 : vector<8x32xf32>
    %cst = arith.constant 0.999994993 : f32
    %42 = vector.broadcast %cst : f32 to vector<8x32xf32>
    %43 = arith.mulf %41, %42 : vector<8x32xf32>
    %44 = arith.negf %43 : vector<8x32xf32>
    %45 = math.exp %44 : vector<8x32xf32>
    %cst_6 = arith.constant 1.000000e+00 : f32
    %46 = vector.broadcast %cst_6 : f32 to vector<8x32xf32>
    %47 = arith.addf %46, %45 : vector<8x32xf32>
    %48 = arith.divf %46, %47 : vector<8x32xf32>
    %49 = arith.mulf %43, %48 : vector<8x32xf32>
    %50 = arith.truncf %49 : vector<8x32xf32> to vector<8x32xbf16>
    %c0_7 = arith.constant 0 : index
    %c0_8 = arith.constant 0 : index
    %c0_9 = arith.constant 0 : index
    %51 = vector.load %arg4[%c0_7, %c0_8, %c0_9] : memref<1x8x32xbf16, #tpu.memory_space<vmem>>, vector<1x8x32xbf16>
    %52 = vector.shape_cast %51 : vector<1x8x32xbf16> to vector<8x32xbf16>
    %53 = vector.shape_cast %50 : vector<8x32xbf16> to vector<1x8x32xbf16>
    tpu.vector_store %arg4[%c0_7, %c0_8, %c0_9], %53 {strides = array<i32>} : memref<1x8x32xbf16, #tpu.memory_space<vmem>>, vector<1x8x32xbf16>,
    return
  }
  func.func @transform_0(%arg0: i32) -> (i32, i32, i32) {
    %c0_i32 = arith.constant 0 : i32
    %c0_i32_0 = arith.constant 0 : i32
    %c0_i32_1 = arith.constant 0 : i32
    return %arg0, %c0_i32, %c0_i32_0 : i32, i32, i32
  }
  func.func @transform_1(%arg0: i32) -> (i32, i32) {
    %c0_i32 = arith.constant 0 : i32
    %c0_i32_0 = arith.constant 0 : i32
    %c0_i32_1 = arith.constant 0 : i32
    return %c0_i32, %c0_i32_0 : i32, i32
  }
  func.func @transform_2(%arg0: i32) -> (i32, i32) {
    %c0_i32 = arith.constant 0 : i32
    %c0_i32_0 = arith.constant 0 : i32
    %c0_i32_1 = arith.constant 0 : i32
    return %c0_i32, %c0_i32_0 : i32, i32
  }
  func.func @transform_3(%arg0: i32) -> (i32, i32, i32) {
    %c0_i32 = arith.constant 0 : i32
    %c0_i32_0 = arith.constant 0 : i32
    %c0_i32_1 = arith.constant 0 : i32
    return %arg0, %c0_i32, %c0_i32_0 : i32, i32, i32
  }
}

module attributes {stable_mosaic.version = 11 : i64} {
  func.func @_glu_ln_kernel(%arg0: i32, %arg1: i32, %arg2: memref<16x32xbf16, #tpu.memory_space<vmem>>, %arg3: memref<1x32xf32, #tpu.memory_space<vmem>>, %arg4: memref<1x32xf32, #tpu.memory_space<vmem>>, %arg5: memref<32x32xbf16, #tpu.memory_space<vmem>>, %arg6: memref<1x32xf32, #tpu.memory_space<vmem>>, %arg7: memref<32x32xbf16, #tpu.memory_space<vmem>>, %arg8: memref<1x32xf32, #tpu.memory_space<vmem>>, %arg9: memref<16x32xbf16, #tpu.memory_space<vmem>>) attributes {dimension_semantics = [#tpu.dimension_semantics<parallel>, #tpu.dimension_semantics<parallel>], iteration_bounds = array<i64: 1, 1>, scalar_prefetch = 0 : i64, scratch_operands = 0 : i64, tpu.core_type = #tpu.core_type<tc>, window_params = [{transform_indices = @transform_0, window_bounds = array<i64: 16, 32>}, {pipeline_mode = #tpu.pipeline_mode<synchronous>, transform_indices = @transform_1, window_bounds = array<i64: 1, 32>}, {pipeline_mode = #tpu.pipeline_mode<synchronous>, transform_indices = @transform_2, window_bounds = array<i64: 1, 32>}, {transform_indices = @transform_3, window_bounds = array<i64: 32, 32>}, {transform_indices = @transform_4, window_bounds = array<i64: 1, 32>}, {transform_indices = @transform_5, window_bounds = array<i64: 32, 32>}, {transform_indices = @transform_6, window_bounds = array<i64: 1, 32>}, {transform_indices = @transform_7, window_bounds = array<i64: 16, 32>}]} {
    %c0 = arith.constant 0 : index
    %c0_0 = arith.constant 0 : index
    %0 = vector.load %arg2[%c0, %c0_0] : memref<16x32xbf16, #tpu.memory_space<vmem>>, vector<16x32xbf16>
    %1 = arith.extf %0 : vector<16x32xbf16> to vector<16x32xf32>
    %cst = arith.constant dense<0.000000e+00> : vector<16xf32>
    %2 = vector.multi_reduction <add>, %1, %cst [1] : vector<16x32xf32> to vector<16xf32>
    %3 = vector.shape_cast %2 : vector<16xf32> to vector<16x1xf32>
    %cst_1 = arith.constant 3.200000e+01 : f32
    %4 = vector.broadcast %cst_1 : f32 to vector<16x1xf32>
    %5 = arith.divf %3, %4 : vector<16x1xf32>
    %6 = vector.broadcast %5 : vector<16x1xf32> to vector<16x32xf32>
    %7 = arith.subf %1, %6 : vector<16x32xf32>
    %8 = arith.mulf %7, %7 : vector<16x32xf32>
    %cst_2 = arith.constant dense<0.000000e+00> : vector<16xf32>
    %9 = vector.multi_reduction <add>, %8, %cst_2 [1] : vector<16x32xf32> to vector<16xf32>
    %10 = vector.shape_cast %9 : vector<16xf32> to vector<16x1xf32>
    %cst_3 = arith.constant 3.200000e+01 : f32
    %11 = vector.broadcast %cst_3 : f32 to vector<16x1xf32>
    %12 = arith.divf %10, %11 : vector<16x1xf32>
    %13 = vector.broadcast %5 : vector<16x1xf32> to vector<16x32xf32>
    %14 = arith.subf %1, %13 : vector<16x32xf32>
    %cst_4 = arith.constant 9.99999974E-6 : f32
    %15 = vector.broadcast %cst_4 : f32 to vector<16x1xf32>
    %16 = arith.addf %12, %15 : vector<16x1xf32>
    %17 = math.rsqrt %16 : vector<16x1xf32>
    %18 = vector.broadcast %17 : vector<16x1xf32> to vector<16x32xf32>
    %19 = arith.mulf %14, %18 : vector<16x32xf32>
    %c0_5 = arith.constant 0 : index
    %c0_6 = arith.constant 0 : index
    %20 = vector.load %arg3[%c0_5, %c0_6] : memref<1x32xf32, #tpu.memory_space<vmem>>, vector<1x32xf32>
    %21 = vector.broadcast %20 : vector<1x32xf32> to vector<16x32xf32>
    %22 = arith.mulf %19, %21 : vector<16x32xf32>
    %c0_7 = arith.constant 0 : index
    %c0_8 = arith.constant 0 : index
    %23 = vector.load %arg4[%c0_7, %c0_8] : memref<1x32xf32, #tpu.memory_space<vmem>>, vector<1x32xf32>
    %24 = vector.broadcast %23 : vector<1x32xf32> to vector<16x32xf32>
    %25 = arith.addf %22, %24 : vector<16x32xf32>
    %26 = arith.truncf %25 : vector<16x32xf32> to vector<16x32xbf16>
    %c0_9 = arith.constant 0 : index
    %c0_10 = arith.constant 0 : index
    %27 = vector.load %arg5[%c0_9, %c0_10] : memref<32x32xbf16, #tpu.memory_space<vmem>>, vector<32x32xbf16>
    %cst_11 = arith.constant dense<0.000000e+00> : vector<16x32xf32>
    %28 = tpu.matmul %26, %27, %cst_11 {dimension_numbers = #tpu.dot_dimension_numbers<[1], [0], [0], [1], [0, 0, 1, 1], [], []>} : vector<16x32xbf16>, vector<32x32xbf16>, vector<16x32xf32> -> vector<16x32xf32>
    %c0_12 = arith.constant 0 : index
    %c0_13 = arith.constant 0 : index
    %29 = vector.load %arg6[%c0_12, %c0_13] : memref<1x32xf32, #tpu.memory_space<vmem>>, vector<1x32xf32>
    %30 = vector.broadcast %29 : vector<1x32xf32> to vector<16x32xf32>
    %31 = arith.addf %28, %30 : vector<16x32xf32>
    %c0_14 = arith.constant 0 : index
    %c0_15 = arith.constant 0 : index
    %32 = vector.load %arg7[%c0_14, %c0_15] : memref<32x32xbf16, #tpu.memory_space<vmem>>, vector<32x32xbf16>
    %cst_16 = arith.constant dense<0.000000e+00> : vector<16x32xf32>
    %33 = tpu.matmul %26, %32, %cst_16 {dimension_numbers = #tpu.dot_dimension_numbers<[1], [0], [0], [1], [0, 0, 1, 1], [], []>} : vector<16x32xbf16>, vector<32x32xbf16>, vector<16x32xf32> -> vector<16x32xf32>
    %c0_17 = arith.constant 0 : index
    %c0_18 = arith.constant 0 : index
    %34 = vector.load %arg8[%c0_17, %c0_18] : memref<1x32xf32, #tpu.memory_space<vmem>>, vector<1x32xf32>
    %35 = vector.broadcast %34 : vector<1x32xf32> to vector<16x32xf32>
    %36 = arith.addf %33, %35 : vector<16x32xf32>
    %37 = arith.negf %36 : vector<16x32xf32>
    %38 = math.exp %37 : vector<16x32xf32>
    %cst_19 = arith.constant 1.000000e+00 : f32
    %39 = vector.broadcast %cst_19 : f32 to vector<16x32xf32>
    %40 = arith.addf %39, %38 : vector<16x32xf32>
    %41 = arith.divf %39, %40 : vector<16x32xf32>
    %42 = arith.mulf %31, %41 : vector<16x32xf32>
    %43 = arith.truncf %42 : vector<16x32xf32> to vector<16x32xbf16>
    %c0_20 = arith.constant 0 : index
    %c0_21 = arith.constant 0 : index
    %44 = vector.load %arg9[%c0_20, %c0_21] : memref<16x32xbf16, #tpu.memory_space<vmem>>, vector<16x32xbf16>
    tpu.vector_store %arg9[%c0_20, %c0_21], %43 {strides = array<i32>} : memref<16x32xbf16, #tpu.memory_space<vmem>>, vector<16x32xbf16>,
    return
  }
  func.func @transform_0(%arg0: i32, %arg1: i32) -> (i32, i32) {
    %c0_i32 = arith.constant 0 : i32
    %c0_i32_0 = arith.constant 0 : i32
    return %arg0, %c0_i32 : i32, i32
  }
  func.func @transform_1(%arg0: i32, %arg1: i32) -> (i32, i32) {
    %c0_i32 = arith.constant 0 : i32
    %c0_i32_0 = arith.constant 0 : i32
    %c0_i32_1 = arith.constant 0 : i32
    return %c0_i32, %c0_i32_0 : i32, i32
  }
  func.func @transform_2(%arg0: i32, %arg1: i32) -> (i32, i32) {
    %c0_i32 = arith.constant 0 : i32
    %c0_i32_0 = arith.constant 0 : i32
    %c0_i32_1 = arith.constant 0 : i32
    return %c0_i32, %c0_i32_0 : i32, i32
  }
  func.func @transform_3(%arg0: i32, %arg1: i32) -> (i32, i32) {
    %c0_i32 = arith.constant 0 : i32
    %c0_i32_0 = arith.constant 0 : i32
    return %c0_i32, %arg1 : i32, i32
  }
  func.func @transform_4(%arg0: i32, %arg1: i32) -> (i32, i32) {
    %c0_i32 = arith.constant 0 : i32
    %c0_i32_0 = arith.constant 0 : i32
    return %c0_i32, %arg1 : i32, i32
  }
  func.func @transform_5(%arg0: i32, %arg1: i32) -> (i32, i32) {
    %c0_i32 = arith.constant 0 : i32
    %c0_i32_0 = arith.constant 0 : i32
    return %c0_i32, %arg1 : i32, i32
  }
  func.func @transform_6(%arg0: i32, %arg1: i32) -> (i32, i32) {
    %c0_i32 = arith.constant 0 : i32
    %c0_i32_0 = arith.constant 0 : i32
    return %c0_i32, %arg1 : i32, i32
  }
  func.func @transform_7(%arg0: i32, %arg1: i32) -> (i32, i32) {
    %c0_i32 = arith.constant 0 : i32
    return %arg0, %arg1 : i32, i32
  }
}

module attributes {stable_mosaic.version = 11 : i64} {
  func.func @_ln_kernel(%arg0: i32, %arg1: memref<16x32xbf16, #tpu.memory_space<vmem>>, %arg2: memref<1x32xf32, #tpu.memory_space<vmem>>, %arg3: memref<1x32xf32, #tpu.memory_space<vmem>>, %arg4: memref<16x32xbf16, #tpu.memory_space<vmem>>) attributes {dimension_semantics = [#tpu.dimension_semantics<parallel>], iteration_bounds = array<i64: 1>, scalar_prefetch = 0 : i64, scratch_operands = 0 : i64, tpu.core_type = #tpu.core_type<tc>, window_params = [{transform_indices = @transform_0, window_bounds = array<i64: 16, 32>}, {pipeline_mode = #tpu.pipeline_mode<synchronous>, transform_indices = @transform_1, window_bounds = array<i64: 1, 32>}, {pipeline_mode = #tpu.pipeline_mode<synchronous>, transform_indices = @transform_2, window_bounds = array<i64: 1, 32>}, {transform_indices = @transform_3, window_bounds = array<i64: 16, 32>}]} {
    %c0 = arith.constant 0 : index
    %c0_0 = arith.constant 0 : index
    %0 = vector.load %arg1[%c0, %c0_0] : memref<16x32xbf16, #tpu.memory_space<vmem>>, vector<16x32xbf16>
    %1 = arith.extf %0 : vector<16x32xbf16> to vector<16x32xf32>
    %cst = arith.constant dense<0.000000e+00> : vector<16xf32>
    %2 = vector.multi_reduction <add>, %1, %cst [1] : vector<16x32xf32> to vector<16xf32>
    %3 = vector.shape_cast %2 : vector<16xf32> to vector<16x1xf32>
    %cst_1 = arith.constant 3.200000e+01 : f32
    %4 = vector.broadcast %cst_1 : f32 to vector<16x1xf32>
    %5 = arith.divf %3, %4 : vector<16x1xf32>
    %6 = vector.broadcast %5 : vector<16x1xf32> to vector<16x32xf32>
    %7 = arith.subf %1, %6 : vector<16x32xf32>
    %8 = arith.mulf %7, %7 : vector<16x32xf32>
    %cst_2 = arith.constant dense<0.000000e+00> : vector<16xf32>
    %9 = vector.multi_reduction <add>, %8, %cst_2 [1] : vector<16x32xf32> to vector<16xf32>
    %10 = vector.shape_cast %9 : vector<16xf32> to vector<16x1xf32>
    %cst_3 = arith.constant 3.200000e+01 : f32
    %11 = vector.broadcast %cst_3 : f32 to vector<16x1xf32>
    %12 = arith.divf %10, %11 : vector<16x1xf32>
    %13 = vector.broadcast %5 : vector<16x1xf32> to vector<16x32xf32>
    %14 = arith.subf %1, %13 : vector<16x32xf32>
    %cst_4 = arith.constant 9.99999974E-6 : f32
    %15 = vector.broadcast %cst_4 : f32 to vector<16x1xf32>
    %16 = arith.addf %12, %15 : vector<16x1xf32>
    %17 = math.rsqrt %16 : vector<16x1xf32>
    %18 = vector.broadcast %17 : vector<16x1xf32> to vector<16x32xf32>
    %19 = arith.mulf %14, %18 : vector<16x32xf32>
    %c0_5 = arith.constant 0 : index
    %c0_6 = arith.constant 0 : index
    %20 = vector.load %arg2[%c0_5, %c0_6] : memref<1x32xf32, #tpu.memory_space<vmem>>, vector<1x32xf32>
    %21 = vector.broadcast %20 : vector<1x32xf32> to vector<16x32xf32>
    %22 = arith.mulf %19, %21 : vector<16x32xf32>
    %c0_7 = arith.constant 0 : index
    %c0_8 = arith.constant 0 : index
    %23 = vector.load %arg3[%c0_7, %c0_8] : memref<1x32xf32, #tpu.memory_space<vmem>>, vector<1x32xf32>
    %24 = vector.broadcast %23 : vector<1x32xf32> to vector<16x32xf32>
    %25 = arith.addf %22, %24 : vector<16x32xf32>
    %26 = arith.truncf %25 : vector<16x32xf32> to vector<16x32xbf16>
    %c0_9 = arith.constant 0 : index
    %c0_10 = arith.constant 0 : index
    %27 = vector.load %arg4[%c0_9, %c0_10] : memref<16x32xbf16, #tpu.memory_space<vmem>>, vector<16x32xbf16>
    tpu.vector_store %arg4[%c0_9, %c0_10], %26 {strides = array<i32>} : memref<16x32xbf16, #tpu.memory_space<vmem>>, vector<16x32xbf16>,
    return
  }
  func.func @transform_0(%arg0: i32) -> (i32, i32) {
    %c0_i32 = arith.constant 0 : i32
    %c0_i32_0 = arith.constant 0 : i32
    return %arg0, %c0_i32 : i32, i32
  }
  func.func @transform_1(%arg0: i32) -> (i32, i32) {
    %c0_i32 = arith.constant 0 : i32
    %c0_i32_0 = arith.constant 0 : i32
    %c0_i32_1 = arith.constant 0 : i32
    return %c0_i32, %c0_i32_0 : i32, i32
  }
  func.func @transform_2(%arg0: i32) -> (i32, i32) {
    %c0_i32 = arith.constant 0 : i32
    %c0_i32_0 = arith.constant 0 : i32
    %c0_i32_1 = arith.constant 0 : i32
    return %c0_i32, %c0_i32_0 : i32, i32
  }
  func.func @transform_3(%arg0: i32) -> (i32, i32) {
    %c0_i32 = arith.constant 0 : i32
    %c0_i32_0 = arith.constant 0 : i32
    return %arg0, %c0_i32 : i32, i32
  }
}

</mosaic_0001>

<llo_original>
// kernel: conformer_encoder.26
$region0: #{conformer_encoder.26}
  #allocation0 [shape = 'u32[]', space=smem, size = 0x4, offset = 0x4, fixed_abs, tag = 'smem constant byte address 0x4 - core index']
  #allocation1 [shape = 'u32[144,128]{1,0:T(1,128)}', space=vmem, size = 0x12000, scoped, tag = 'internal scratch']
  %s0 = inlined_call_operand.vmem [shape: bf16[16,32], index: 0, kind: input, shape index: {}]
  %s1 = inlined_call_operand.vmem [shape: bf16[32,64], index: 1, kind: input, shape index: {}]
  %s2 = inlined_call_operand.vmem [shape: f32[1,64], index: 2, kind: input, shape index: {}]
  %s3 = inlined_call_operand.vmem [shape: f32[1,32], index: 3, kind: input, shape index: {}]
  %s4 = inlined_call_operand.vmem [shape: f32[1,32], index: 4, kind: input, shape index: {}]
  %s5 = inlined_call_operand.vmem [shape: bf16[16,64], index: 5, kind: output, shape index: {}]
  %s6 = sld [smem:[#allocation0]]
  $region30: #{conformer_encoder.26} parent=0
    _
  %s8 = ssub.s32 1, %s6
  %s9 = scalar_select 0, %s8, %s6
  // Predicated region
  $region2: #{conformer_encoder.26} parent=0 // pred_check
    _
  $region3: #{conformer_encoder.26} parent=0 // pred_check_branch
    %11 = sbr.rel (0) target = $region5
  $region4: #{conformer_encoder.26} parent=0 // pred_region
    _
  $region5: #{conformer_encoder.26} parent=0 // pred_fallthru
    _
  // Predicated region
  $region6: #{conformer_encoder.26} parent=0 // pred_check
    _
  $region7: #{conformer_encoder.26} parent=0 // pred_check_branch
    %13 = sbr.rel (0) target = $region9
  $region8: #{conformer_encoder.26} parent=0 // pred_region
    _
  $region9: #{conformer_encoder.26} parent=0 // pred_fallthru
    _
  // Predicated region
  $region10: #{conformer_encoder.26} parent=0 // pred_check
    _
  $region11: #{conformer_encoder.26} parent=0 // pred_check_branch
    %15 = sbr.rel (0) target = $region13
  $region12: #{conformer_encoder.26} parent=0 // pred_region
    _
  $region13: #{conformer_encoder.26} parent=0 // pred_fallthru
    _
  // Predicated region
  $region14: #{conformer_encoder.26} parent=0 // pred_check
    _
  $region15: #{conformer_encoder.26} parent=0 // pred_check_branch
    %17 = sbr.rel (0) target = $region17
  $region16: #{conformer_encoder.26} parent=0 // pred_region
    _
  $region17: #{conformer_encoder.26} parent=0 // pred_fallthru
    _
  // Predicated region
  $region18: #{conformer_encoder.26} parent=0 // pred_check
    _
  $region19: #{conformer_encoder.26} parent=0 // pred_check_branch
    %19 = sbr.rel (0) target = $region21
  $region20: #{conformer_encoder.26} parent=0 // pred_region
    _
  $region21: #{conformer_encoder.26} parent=0 // pred_fallthru
    _
  %v21 = vld [vmem:[%s0] sm:$0xf]
  %v22 = vld [vmem:[%s0 + $0x4] sm:$0xf]
  %v23 = vunpack.c.l.bf16 %v21
  %v24 = vunpack.c.l.bf16 %v22
  %vm25 = vcmask 261120
  %v26 = vsel %vm25, %v23, 0.0
  %27 = vadd.xlane.f32.xlu0 %v26
  %v28 = vpop.xlane.xlu0 %27
  %v29 = vsel %vm25, %v24, 0.0
  %30 = vadd.xlane.f32.xlu0 %v29
  %v31 = vpop.xlane.xlu0 %30
  %v32 = vrcp.pop 32.0
  %v33 = vmul.f32 %v28, %v32
  %v34 = vmul.f32 %v31, %v32
  %v35 = vsub.f32 %v23, %v33
  %v36 = vsub.f32 %v24, %v34
  %v37 = vmul.f32 %v35, %v35
  %v38 = vmul.f32 %v36, %v36
  %v39 = vsel %vm25, %v37, 0.0
  %40 = vadd.xlane.f32.xlu0 %v39
  %v41 = vpop.xlane.xlu0 %40
  %v42 = vsel %vm25, %v38, 0.0
  %43 = vadd.xlane.f32.xlu0 %v42
  %v44 = vpop.xlane.xlu0 %43
  %v45 = vmul.f32 %v41, %v32
  %v46 = vmul.f32 %v44, %v32
  %v47 = vadd.f32 %v45, 1e-05
  %v48 = vadd.f32 %v46, 1e-05
  %v49 = vrsqrt.pop %v47
  %v50 = vrsqrt.pop %v48
  %v51 = vmul.f32 %v35, %v49
  %v52 = vmul.f32 %v36, %v50
  %v53 = vld [vmem:[%s3] sm:$0x1]
  %v55 = vlaneseq
  %v56 = vshrl.u32 %v55, 7
  %v57 = vsub.s32 0, %v56
  %v58 = vrot.slane %v53, %v57
  %v60 = vmul.f32 %v51, %v58
  %v61 = vmul.f32 %v52, %v58
  %v62 = vld [vmem:[%s4] sm:$0x1]
  %v64 = vlaneseq
  %v65 = vshrl.u32 %v64, 7
  %v66 = vsub.s32 0, %v65
  %v67 = vrot.slane %v62, %v66
  %v69 = vadd.f32 %v60, %v67
  %v70 = vadd.f32 %v61, %v67
  %v71 = vpack.c.bf16 %v70, %v69
  %v72 = vld [vmem:[%s1] sm:$0xf]
  %v73 = vld [vmem:[%s1 + $0x4] sm:$0xf]
  %v74 = vld [vmem:[%s1 + $0x8] sm:$0xf]
  %v75 = vld [vmem:[%s1 + $0xc] sm:$0xf]
  %v76 = vld [vmem:[%s2] sm:$0x1]
  %v78 = vlaneseq
  %v79 = vshrl.u32 %v78, 7
  %v80 = vsub.s32 0, %v79
  %v81 = vrot.slane %v76, %v80
  %v87 = vunpack.c.l.b16 %v72
  %v88 = vunpack.c.l.b16 %v73
  %v89 = vunpack.c.l.b16 %v74
  %v90 = vunpack.c.l.b16 %v75
  %v91 = vpack.c.b16 %v88, %v87
  %v92 = vpack.c.b16 %v90, %v89
  %v96 = vsel %vm25, %v71, 0
  %98 = vmatprep.subr.bf16.mxu0 0
  %99 = vmatpush1.bf16.msra.mxu0 %v91
  %100 = vmatprep.subr.bf16.mxu0 0
  %101 = vmatpush1.bf16.msra.mxu0 %v92
  %102 = vmatprep.subr.bf16.mxu0 0
  %103 = vmatpush1.bf16.msra.mxu0 0
  %104 = vmatprep.subr.bf16.mxu0 0
  %105 = vmatpush1.bf16.msra.mxu0 0
  %106 = vmatprep.subr.bf16.mxu0 0
  %107 = vmatpush1.bf16.msra.mxu0 0
  %108 = vmatprep.subr.bf16.mxu0 0
  %109 = vmatpush1.bf16.msra.mxu0 0
  %110 = vmatprep.subr.bf16.mxu0 0
  %111 = vmatpush1.bf16.msra.mxu0 0
  %112 = vmatprep.subr.bf16.mxu0 0
  %113 = vmatpush1.bf16.msra.mxu0 0
  %114 = vmatprep.subr.bf16.mxu0 0
  %115 = vmatpush1.bf16.msra.mxu0 0
  %116 = vmatprep.subr.bf16.mxu0 0
  %117 = vmatpush1.bf16.msra.mxu0 0
  %118 = vmatprep.subr.bf16.mxu0 0
  %119 = vmatpush1.bf16.msra.mxu0 0
  %120 = vmatprep.subr.bf16.mxu0 0
  %121 = vmatpush1.bf16.msra.mxu0 0
  %122 = vmatprep.subr.bf16.mxu0 0
  %123 = vmatpush1.bf16.msra.mxu0 0
  %124 = vmatprep.subr.bf16.mxu0 0
  %125 = vmatpush1.bf16.msra.mxu0 0
  %126 = vmatprep.subr.bf16.mxu0 0
  %127 = vmatpush1.bf16.msra.mxu0 0
  %128 = vmatprep.subr.bf16.mxu0 0
  %129 = vmatpush1.bf16.msra.mxu0 0
  %130 = vmatprep.mubr.bf16.mxu0 0
  %131 = vmatmul.mubr.bf16.gmra.mrb[0].mxu0 %v96
  %v132 = vpop.f32.mrb[0].mxu0
  %v133 = vadd.f32 %v81, %v132
  %v134 = vpop.f32.mrb[0].mxu0
  %v135 = vpop.f32.mrb[0].mxu0
  %v136 = vadd.f32 %v81, %v135
  %v137 = vpop.f32.mrb[0].mxu0
  %138 = vdwg.mxu0
  %v139 = vxor.u32 %v133, 2147483648
  %v140 = vxor.u32 %v136, 2147483648
  %v141 = vmul.f32 %v139, 1.442695
  %v142 = vpow.pop %v141
  %v143 = vmul.f32 %v140, 1.442695
  %v144 = vpow.pop %v143
  %v145 = vadd.f32 %v142, 1.0
  %v146 = vadd.f32 %v144, 1.0
  %v147 = vrcp.pop %v145
  %v148 = vmul.f32 1.0, %v147
  %v149 = vrcp.pop %v146
  %v150 = vmul.f32 1.0, %v149
  %v151 = vmul.f32 %v133, %v148
  %v152 = vmul.f32 %v136, %v150
  %v153 = vpack.c.bf16 %v152, %v151
  %v155 = vunpack.c.l.b16 %v153
  %v156 = vunpack.c.h.b16 %v153
  %v157 = vpack.c.b16 %v155, %v155
  %v158 = vpack.c.b16 %v156, %v156
  %vm161 = vcmask 519168
  %162 = vst.msk [vmem:[%s5] sm:$0xf] %vm161, %v157
  %163 = vst.msk [vmem:[%s5 + $0x4] sm:$0xf] %vm161, %v158
  // Predicated region
  $region22: #{conformer_encoder.26} parent=0 // pred_check
    _
  $region23: #{conformer_encoder.26} parent=0 // pred_check_branch
    %165 = sbr.rel (0) target = $region25
  $region24: #{conformer_encoder.26} parent=0 // pred_region
    _
  $region25: #{conformer_encoder.26} parent=0 // pred_fallthru
    _
  // Predicated region
  $region26: #{conformer_encoder.26} parent=0 // pred_check
    _
  $region27: #{conformer_encoder.26} parent=0 // pred_check_branch
    %167 = sbr.rel (0) target = $region29
  $region28: #{conformer_encoder.26} parent=0 // pred_region
    _
  $region29: #{conformer_encoder.26} parent=0 // pred_fallthru
    _

// kernel: conformer_encoder.24
$region0: #{conformer_encoder.24}
  #allocation0 [shape = 'u32[]', space=smem, size = 0x4, offset = 0x4, fixed_abs, tag = 'smem constant byte address 0x4 - core index']
  #allocation1 [shape = 'u32[144,128]{1,0:T(1,128)}', space=vmem, size = 0x12000, scoped, tag = 'internal scratch']
  %s0 = inlined_call_operand.vmem [shape: bf16[16,16], index: 0, kind: input, shape index: {}]
  %s1 = inlined_call_operand.vmem [shape: bf16[16,32], index: 1, kind: input, shape index: {}]
  %s2 = inlined_call_operand.vmem [shape: f32[1,32], index: 2, kind: input, shape index: {}]
  %s3 = inlined_call_operand.vmem [shape: bf16[16,32], index: 3, kind: output, shape index: {}]
  %s4 = sld [smem:[#allocation0]]
  $region22: #{conformer_encoder.24} parent=0
    _
  %s6 = ssub.s32 1, %s4
  %s7 = scalar_select 0, %s6, %s4
  // Predicated region
  $region2: #{conformer_encoder.24} parent=0 // pred_check
    _
  $region3: #{conformer_encoder.24} parent=0 // pred_check_branch
    %9 = sbr.rel (0) target = $region5
  $region4: #{conformer_encoder.24} parent=0 // pred_region
    _
  $region5: #{conformer_encoder.24} parent=0 // pred_fallthru
    _
  // Predicated region
  $region6: #{conformer_encoder.24} parent=0 // pred_check
    _
  $region7: #{conformer_encoder.24} parent=0 // pred_check_branch
    %11 = sbr.rel (0) target = $region9
  $region8: #{conformer_encoder.24} parent=0 // pred_region
    _
  $region9: #{conformer_encoder.24} parent=0 // pred_fallthru
    _
  // Predicated region
  $region10: #{conformer_encoder.24} parent=0 // pred_check
    _
  $region11: #{conformer_encoder.24} parent=0 // pred_check_branch
    %13 = sbr.rel (0) target = $region13
  $region12: #{conformer_encoder.24} parent=0 // pred_region
    _
  $region13: #{conformer_encoder.24} parent=0 // pred_fallthru
    _
  %v15 = vld [vmem:[%s0] sm:$0xf]
  %v16 = vld [vmem:[%s0 + $0x4] sm:$0xf]
  %v17 = vld [vmem:[%s1] sm:$0xf]
  %v18 = vld [vmem:[%s1 + $0x4] sm:$0xf]
  %v19 = vld [vmem:[%s2] sm:$0x1]
  %v21 = vlaneseq
  %v22 = vshrl.u32 %v21, 7
  %v23 = vsub.s32 0, %v22
  %v24 = vrot.slane %v19, %v23
  %v28 = vunpack.c.l.b16 %v15
  %v29 = vunpack.c.l.b16 %v16
  %v30 = vpack.c.b16 %v29, %v28
  %v33 = vunpack.c.l.b16 %v17
  %v34 = vunpack.c.l.b16 %v18
  %v35 = vpack.c.b16 %v34, %v33
  %vm37 = vcmask 130048
  %v39 = vsel %vm37, %v30, 0
  %41 = vmatprep.subr.bf16.mxu0 0
  %42 = vmatpush1.bf16.msra.mxu0 %v35
  %43 = vmatprep.subr.bf16.mxu0 0
  %44 = vmatpush1.bf16.msra.mxu0 0
  %45 = vmatprep.subr.bf16.mxu0 0
  %46 = vmatpush1.bf16.msra.mxu0 0
  %47 = vmatprep.subr.bf16.mxu0 0
  %48 = vmatpush1.bf16.msra.mxu0 0
  %49 = vmatprep.subr.bf16.mxu0 0
  %50 = vmatpush1.bf16.msra.mxu0 0
  %51 = vmatprep.subr.bf16.mxu0 0
  %52 = vmatpush1.bf16.msra.mxu0 0
  %53 = vmatprep.subr.bf16.mxu0 0
  %54 = vmatpush1.bf16.msra.mxu0 0
  %55 = vmatprep.subr.bf16.mxu0 0
  %56 = vmatpush1.bf16.msra.mxu0 0
  %57 = vmatprep.subr.bf16.mxu0 0
  %58 = vmatpush1.bf16.msra.mxu0 0
  %59 = vmatprep.subr.bf16.mxu0 0
  %60 = vmatpush1.bf16.msra.mxu0 0
  %61 = vmatprep.subr.bf16.mxu0 0
  %62 = vmatpush1.bf16.msra.mxu0 0
  %63 = vmatprep.subr.bf16.mxu0 0
  %64 = vmatpush1.bf16.msra.mxu0 0
  %65 = vmatprep.subr.bf16.mxu0 0
  %66 = vmatpush1.bf16.msra.mxu0 0
  %67 = vmatprep.subr.bf16.mxu0 0
  %68 = vmatpush1.bf16.msra.mxu0 0
  %69 = vmatprep.subr.bf16.mxu0 0
  %70 = vmatpush1.bf16.msra.mxu0 0
  %71 = vmatprep.subr.bf16.mxu0 0
  %72 = vmatpush1.bf16.msra.mxu0 0
  %73 = vmatprep.mubr.bf16.mxu0 0
  %74 = vmatmul.mubr.bf16.gmra.mrb[0].mxu0 %v39
  %v75 = vpop.f32.mrb[0].mxu0
  %v76 = vadd.f32 %v24, %v75
  %v77 = vpop.f32.mrb[0].mxu0
  %v78 = vpop.f32.mrb[0].mxu0
  %v79 = vadd.f32 %v24, %v78
  %v80 = vpop.f32.mrb[0].mxu0
  %81 = vdwg.mxu0
  %v82 = vpack.c.bf16 %v79, %v76
  %v84 = vunpack.c.l.b16 %v82
  %v85 = vunpack.c.h.b16 %v82
  %v86 = vpack.c.b16 %v84, %v84
  %v87 = vpack.c.b16 %v85, %v85
  %vm90 = vcmask 257024
  %91 = vst.msk [vmem:[%s3] sm:$0xf] %vm90, %v86
  %92 = vst.msk [vmem:[%s3 + $0x4] sm:$0xf] %vm90, %v87
  // Predicated region
  $region14: #{conformer_encoder.24} parent=0 // pred_check
    _
  $region15: #{conformer_encoder.24} parent=0 // pred_check_branch
    %94 = sbr.rel (0) target = $region17
  $region16: #{conformer_encoder.24} parent=0 // pred_region
    _
  $region17: #{conformer_encoder.24} parent=0 // pred_fallthru
    _
  // Predicated region
  $region18: #{conformer_encoder.24} parent=0 // pred_check
    _
  $region19: #{conformer_encoder.24} parent=0 // pred_check_branch
    %96 = sbr.rel (0) target = $region21
  $region20: #{conformer_encoder.24} parent=0 // pred_region
    _
  $region21: #{conformer_encoder.24} parent=0 // pred_fallthru
    _

// kernel: conformer_encoder.25
$region0: #{conformer_encoder.25}
  #allocation0 [shape = 'u32[]', space=smem, size = 0x4, offset = 0x4, fixed_abs, tag = 'smem constant byte address 0x4 - core index']
  #allocation1 [shape = 'u32[144,128]{1,0:T(1,128)}', space=vmem, size = 0x12000, scoped, tag = 'internal scratch']
  %s0 = inlined_call_operand.vmem [shape: bf16[2,8,32], index: 0, kind: input, shape index: {}]
  %s1 = inlined_call_operand.vmem [shape: f32[1,32], index: 1, kind: input, shape index: {}]
  %s2 = inlined_call_operand.vmem [shape: f32[1,32], index: 2, kind: input, shape index: {}]
  %s3 = inlined_call_operand.vmem [shape: f32[8,32], index: 3, kind: input, shape index: {}]
  %s4 = inlined_call_operand.vmem [shape: bf16[2,8,32], index: 4, kind: output, shape index: {}]
  %s5 = sld [smem:[#allocation0]]
  $region49: #{conformer_encoder.25} parent=0
    _
  %s7 = ssub.s32 1, %s5
  %s8 = scalar_select 0, %s7, %s5
  loop: start=0, step=1, limit=4
  $region2: #{conformer_encoder.25} parent=0 // loop_pre_header
    _
  $region3: #{conformer_encoder.25} parent=0 // loop_header
    %s10 = sphi 0, %s14
    %p11 = scmp.ge.s32.totalorder %s10, 4
    %s17 = sphi 0, %s29
    %s18 = sphi 0, %s25
    %s19 = sphi 0, %s17
    %s20 = sphi 0, %s18
    %s21 = sphi 0, %s19
    %s22 = sphi 0, %s20
    %s34 = sphi 0, %s36
    %s37 = sphi 0, %s34
    %s38 = sphi 0, %s37
    %s54 = sphi 0, %s38
    %s58 = sphi 0, %s58
    %s60 = sphi 0, %s58
    %s61 = sphi 0, %s60
    %s75 = sphi 0, %s61
    %s79 = sphi 0, %s79
    %s81 = sphi 0, %s79
    %s82 = sphi 0, %s81
    %s96 = sphi 0, %s82
    %s102 = sphi 0, %s104
    %s105 = sphi 0, %s102
    %s106 = sphi 0, %s105
    %s122 = sphi 0, %s106
    %s130 = sphi 0, %s132
    %s133 = sphi 0, %s130
    %s134 = sphi 0, %s133
    %s150 = sphi 0, %s134
  $region4: #{conformer_encoder.25} parent=0 // loop_header_branch
    %13 = sbr.rel (%p11) target = $region8
  $region5: #{conformer_encoder.25} parent=0 // loop_body
    %s15 = ssub.s32 %s10, 1
    %s16 = ssub.s32 %s10, 2
    %s23 = sadd.s32 1, %s18
    %p24 = scmp.ge.s32.totalorder %s23, 1
    %s25 = scalar_select %p24, 0, %s23
    %s26 = sadd.s32 1, %s17
    %s27 = scalar_select %p24, %s26, %s17
    %p28 = scmp.ge.s32.totalorder %s27, 2
    %s29 = scalar_select %p28, 0, %s27
    %s30 = ssub.s32 %s17, %s29
    %s31 = ssub.s32 %s18, %s25
    %s32 = sor.u32 %s30, %s31
    %p33 = scmp.eq.s32.totalorder %s32, 0
    %s35 = sadd.s32 %s34, 1
    %s36 = scalar_select %p33, %s34, %s35
    %p39 = pneg %p33
    %p40 = scmp.eq.s32.totalorder %s10, 1
    %p41 = por %p39, %p40
    %p42 = scmp.ne.s32.totalorder %s34, %s37
    %p43 = scmp.eq.s32.totalorder %s10, 0
    %p44 = por %p42, %p43
    %p45 = scmp.ne.s32.totalorder %s34, %s37
    %p46 = scmp.eq.s32.totalorder %s15, 1
    %p47 = por %p45, %p46
    %p48 = scmp.ne.s32.totalorder %s37, %s38
    %p49 = scmp.eq.s32.totalorder %s15, 0
    %p50 = por %p48, %p49
    %p51 = scmp.ne.s32.totalorder %s37, %s38
    %p52 = scmp.eq.s32.totalorder %s16, 1
    %p53 = por %p51, %p52
    %p55 = scmp.ne.s32.totalorder %s38, %s54
    %p56 = scmp.eq.s32.totalorder %s16, 0
    %p57 = por %p55, %p56
    %s59 = sadd.s32 %s58, 1
    %p62 = scmp.eq.s32.totalorder %s10, 1
    %p63 = scmp.ne.s32.totalorder %s58, %s60
    %p64 = scmp.eq.s32.totalorder %s10, 0
    %p65 = por %p63, %p64
    %p66 = scmp.ne.s32.totalorder %s58, %s60
    %p67 = scmp.eq.s32.totalorder %s15, 1
    %p68 = por %p66, %p67
    %p69 = scmp.ne.s32.totalorder %s60, %s61
    %p70 = scmp.eq.s32.totalorder %s15, 0
    %p71 = por %p69, %p70
    %p72 = scmp.ne.s32.totalorder %s60, %s61
    %p73 = scmp.eq.s32.totalorder %s16, 1
    %p74 = por %p72, %p73
    %p76 = scmp.ne.s32.totalorder %s61, %s75
    %p77 = scmp.eq.s32.totalorder %s16, 0
    %p78 = por %p76, %p77
    %s80 = sadd.s32 %s79, 1
    %p83 = scmp.eq.s32.totalorder %s10, 1
    %p84 = scmp.ne.s32.totalorder %s79, %s81
    %p85 = scmp.eq.s32.totalorder %s10, 0
    %p86 = por %p84, %p85
    %p87 = scmp.ne.s32.totalorder %s79, %s81
    %p88 = scmp.eq.s32.totalorder %s15, 1
    %p89 = por %p87, %p88
    %p90 = scmp.ne.s32.totalorder %s81, %s82
    %p91 = scmp.eq.s32.totalorder %s15, 0
    %p92 = por %p90, %p91
    %p93 = scmp.ne.s32.totalorder %s81, %s82
    %p94 = scmp.eq.s32.totalorder %s16, 1
    %p95 = por %p93, %p94
    %p97 = scmp.ne.s32.totalorder %s82, %s96
    %p98 = scmp.eq.s32.totalorder %s16, 0
    %p99 = por %p97, %p98
    %s100 = ssub.s32 %s18, %s25
    %p101 = scmp.eq.s32.totalorder %s100, 0
    %s103 = sadd.s32 %s102, 1
    %s104 = scalar_select %p101, %s102, %s103
    %p107 = pneg %p101
    %p108 = scmp.eq.s32.totalorder %s10, 1
    %p109 = por %p107, %p108
    %p110 = scmp.ne.s32.totalorder %s102, %s105
    %p111 = scmp.eq.s32.totalorder %s10, 0
    %p112 = por %p110, %p111
    %p113 = scmp.ne.s32.totalorder %s102, %s105
    %p114 = scmp.eq.s32.totalorder %s15, 1
    %p115 = por %p113, %p114
    %p116 = scmp.ne.s32.totalorder %s105, %s106
    %p117 = scmp.eq.s32.totalorder %s15, 0
    %p118 = por %p116, %p117
    %p119 = scmp.ne.s32.totalorder %s105, %s106
    %p120 = scmp.eq.s32.totalorder %s16, 1
    %p121 = por %p119, %p120
    %p123 = scmp.ne.s32.totalorder %s106, %s122
    %p124 = scmp.eq.s32.totalorder %s16, 0
    %p125 = por %p123, %p124
    %s126 = ssub.s32 %s17, %s29
    %s127 = ssub.s32 %s18, %s25
    %s128 = sor.u32 %s126, %s127
    %p129 = scmp.eq.s32.totalorder %s128, 0
    %s131 = sadd.s32 %s130, 1
    %s132 = scalar_select %p129, %s130, %s131
    %p135 = pneg %p129
    %p136 = scmp.eq.s32.totalorder %s10, 1
    %p137 = por %p135, %p136
    %p138 = scmp.ne.s32.totalorder %s130, %s133
    %p139 = scmp.eq.s32.totalorder %s10, 0
    %p140 = por %p138, %p139
    %p141 = scmp.ne.s32.totalorder %s130, %s133
    %p142 = scmp.eq.s32.totalorder %s15, 1
    %p143 = por %p141, %p142
    %p144 = scmp.ne.s32.totalorder %s133, %s134
    %p145 = scmp.eq.s32.totalorder %s15, 0
    %p146 = por %p144, %p145
    %p147 = scmp.ne.s32.totalorder %s133, %s134
    %p148 = scmp.eq.s32.totalorder %s16, 1
    %p149 = por %p147, %p148
    %p151 = scmp.ne.s32.totalorder %s134, %s150
    %p152 = scmp.eq.s32.totalorder %s16, 0
    %p153 = por %p151, %p152
    %p154 = scmp.le.s32.totalorder 1, %s10
    %p155 = scmp.lt.s32.totalorder %s10, 3
    %p156 = pnand %p154, %p155
    %p157 = pneg %p156
    // Predicated region
    $region9: #{conformer_encoder.25} parent=5 // pred_check
      _
    $region10: #{conformer_encoder.25} parent=5 // pred_check_branch
      %159 = sbr.rel (%p156) target = $region12
    $region11: #{conformer_encoder.25} parent=5 // pred_region
      %s160 = ssub.s32 %s10, 1
      // Predicated region
      $region13: #{conformer_encoder.25} parent=11 // pred_check
        %p161 = pneg %p71
      $region14: #{conformer_encoder.25} parent=11 // pred_check_branch
        %163 = sbr.rel (%p161) target = $region16
      $region15: #{conformer_encoder.25} parent=11 // pred_region
        _
      $region16: #{conformer_encoder.25} parent=11 // pred_fallthru
        _
      // Predicated region
      $region17: #{conformer_encoder.25} parent=11 // pred_check
        %p164 = pneg %p92
      $region18: #{conformer_encoder.25} parent=11 // pred_check_branch
        %166 = sbr.rel (%p164) target = $region20
      $region19: #{conformer_encoder.25} parent=11 // pred_region
        _
      $region20: #{conformer_encoder.25} parent=11 // pred_fallthru
        _
      // Predicated region
      $region21: #{conformer_encoder.25} parent=11 // pred_check
        %p167 = pneg %p118
      $region22: #{conformer_encoder.25} parent=11 // pred_check_branch
        %169 = sbr.rel (%p167) target = $region24
      $region23: #{conformer_encoder.25} parent=11 // pred_region
        %p170 = scmp.lt.s32.totalorder %s20, 0
        %s171 = scalar_select %p170, %s20, 0
        %s172 = smul.addr %s171, 8
        %s173 = scalar_lea.vmem %s3, %s172
      $region24: #{conformer_encoder.25} parent=11 // pred_fallthru
        _
    $region12: #{conformer_encoder.25} parent=5 // pred_fallthru
      _
    %p174 = scmp.lt.s32.totalorder %s10, 2
    // Predicated region
    $region25: #{conformer_encoder.25} parent=5 // pred_check
      %p175 = pneg %p174
    $region26: #{conformer_encoder.25} parent=5 // pred_check_branch
      %177 = sbr.rel (%p175) target = $region28
    $region27: #{conformer_encoder.25} parent=5 // pred_region
      // Predicated region
      $region29: #{conformer_encoder.25} parent=27 // pred_check
        %p178 = pneg %p44
      $region30: #{conformer_encoder.25} parent=27 // pred_check_branch
        %180 = sbr.rel (%p178) target = $region32
      $region31: #{conformer_encoder.25} parent=27 // pred_region
        %p181 = scmp.lt.s32.totalorder %s17, 1
        %s182 = scalar_select %p181, %s17, 1
        %p183 = scmp.lt.s32.totalorder %s18, 0
        %s184 = scalar_select %p183, %s18, 0
        %s185 = sadd.s32 %s184, %s182
        %s186 = smul.addr %s185, 4
        %s187 = scalar_lea.vmem %s0, %s186
      $region32: #{conformer_encoder.25} parent=27 // pred_fallthru
        _
    $region28: #{conformer_encoder.25} parent=5 // pred_fallthru
      _
    %p188 = scmp.le.s32.totalorder 1, %s10
    %p189 = scmp.lt.s32.totalorder %s10, 3
    %p190 = pnand %p188, %p189
    %p191 = pneg %p190
    // Predicated region
    $region33: #{conformer_encoder.25} parent=5 // pred_check
      _
    $region34: #{conformer_encoder.25} parent=5 // pred_check_branch
      %193 = sbr.rel (%p190) target = $region36
    $region35: #{conformer_encoder.25} parent=5 // pred_region
      %s194 = ssub.s32 %s10, 1
      %p195 = scmp.lt.s32.totalorder %s19, 1
      %s196 = scalar_select %p195, %s19, 1
      %p197 = scmp.lt.s32.totalorder %s20, 0
      %s198 = scalar_select %p197, %s20, 0
      %s199 = sadd.s32 %s198, %s196
      %s200 = smul.addr %s199, 4
      %s201 = scalar_lea.vmem %s0, %s200
      %p202 = pneg %p50
      %p203 = pneg %p47
      %p204 = pneg %p71
      %p205 = pneg %p68
      %p206 = pneg %p92
      %p207 = pneg %p89
      %p208 = scmp.lt.s32.totalorder %s20, 0
      %s209 = scalar_select %p208, %s20, 0
      %s210 = smul.addr %s209, 8
      %s211 = scalar_lea.vmem %s3, %s210
      %p212 = pneg %p118
      %p213 = pneg %p115
      %p214 = pneg %p146
      %p215 = pneg %p143
      %p216 = scmp.lt.s32.totalorder %s19, 1
      %s217 = scalar_select %p216, %s19, 1
      %p218 = scmp.lt.s32.totalorder %s20, 0
      %s219 = scalar_select %p218, %s20, 0
      %s220 = sadd.s32 %s219, %s217
      %s221 = smul.addr %s220, 4
      %s222 = scalar_lea.vmem %s4, %s221
      %p223 = scmp.lt.s32.totalorder %s19, 1
      %s224 = scalar_select %p223, %s19, 1
      %p225 = scmp.lt.s32.totalorder %s20, 0
      %s226 = scalar_select %p225, %s20, 0
      %s227 = sadd.s32 %s226, %s224
      %s228 = smul.addr %s227, 4
      %s229 = scalar_lea.vmem %s0, %s228
      %p230 = scmp.lt.s32.totalorder %s20, 0
      %s231 = scalar_select %p230, %s20, 0
      %s232 = smul.addr %s231, 8
      %s233 = scalar_lea.vmem %s3, %s232
      %p234 = scmp.lt.s32.totalorder %s19, 1
      %s235 = scalar_select %p234, %s19, 1
      %p236 = scmp.lt.s32.totalorder %s20, 0
      %s237 = scalar_select %p236, %s20, 0
      %s238 = sadd.s32 %s237, %s235
      %s239 = smul.addr %s238, 4
      %s240 = scalar_lea.vmem %s4, %s239
      %v241 = vld [vmem:[%s229] sm:$0xf]
      %v242 = vunpack.c.l.bf16 %v241
      %vm243 = vcmask 261120
      %v244 = vsel %vm243, %v242, 0.0
      %245 = vadd.xlane.f32.xlu0 %v244
      %v246 = vpop.xlane.xlu0 %245
      %v247 = vrcp.pop 32.0
      %v248 = vmul.f32 %v246, %v247
      %v249 = vsub.f32 %v242, %v248
      %v250 = vmul.f32 %v249, %v249
      %v251 = vsel %vm243, %v250, 0.0
      %252 = vadd.xlane.f32.xlu0 %v251
      %v253 = vpop.xlane.xlu0 %252
      %v254 = vmul.f32 %v253, %v247
      %v255 = vadd.f32 %v254, 1e-05
      %v256 = vrsqrt.pop %v255
      %v257 = vmul.f32 %v249, %v256
      %v258 = vld [vmem:[%s1] sm:$0x1]
      %v260 = vlaneseq
      %v261 = vshrl.u32 %v260, 7
      %v262 = vsub.s32 0, %v261
      %v263 = vrot.slane %v258, %v262
      %v265 = vmul.f32 %v257, %v263
      %v266 = vld [vmem:[%s2] sm:$0x1]
      %v268 = vlaneseq
      %v269 = vshrl.u32 %v268, 7
      %v270 = vsub.s32 0, %v269
      %v271 = vrot.slane %v266, %v270
      %v273 = vadd.f32 %v265, %v271
      %v274 = vmax.f32 %v273, 0.0
      %v275 = vmul.f32 %v274, 5.656854
      %v276 = vld [vmem:[%s233] sm:$0xff]
      %v277 = vadd.f32 %v275, %v276
      %v278 = vpack.c.bf16 %v277, %v277
      %vm279 = vcmask 257024
      %280 = vst.msk [vmem:[%s240] sm:$0xf] %vm279, %v278
      %p281 = scmp.lt.s32.totalorder %s19, 1
      %s282 = scalar_select %p281, %s19, 1
      %p283 = scmp.lt.s32.totalorder %s20, 0
      %s284 = scalar_select %p283, %s20, 0
      %s285 = sadd.s32 %s284, %s282
      %s286 = smul.addr %s285, 4
      %s287 = scalar_lea.vmem %s4, %s286
      // Predicated region
      $region37: #{conformer_encoder.25} parent=35 // pred_check
        %p288 = pneg %p143
      $region38: #{conformer_encoder.25} parent=35 // pred_check_branch
        %290 = sbr.rel (%p288) target = $region40
      $region39: #{conformer_encoder.25} parent=35 // pred_region
        _
      $region40: #{conformer_encoder.25} parent=35 // pred_fallthru
        _
    $region36: #{conformer_encoder.25} parent=5 // pred_fallthru
      _
    %p291 = scmp.le.s32.totalorder 2, %s10
    // Predicated region
    $region41: #{conformer_encoder.25} parent=5 // pred_check
      %p292 = pneg %p291
    $region42: #{conformer_encoder.25} parent=5 // pred_check_branch
      %294 = sbr.rel (%p292) target = $region44
    $region43: #{conformer_encoder.25} parent=5 // pred_region
      %s295 = ssub.s32 %s10, 2
      // Predicated region
      $region45: #{conformer_encoder.25} parent=43 // pred_check
        %p296 = pneg %p149
      $region46: #{conformer_encoder.25} parent=43 // pred_check_branch
        %298 = sbr.rel (%p296) target = $region48
      $region47: #{conformer_encoder.25} parent=43 // pred_region
        %p299 = scmp.lt.s32.totalorder %s21, 1
        %s300 = scalar_select %p299, %s21, 1
        %p301 = scmp.lt.s32.totalorder %s22, 0
        %s302 = scalar_select %p301, %s22, 0
        %s303 = sadd.s32 %s302, %s300
        %s304 = smul.addr %s303, 4
        %s305 = scalar_lea.vmem %s4, %s304
      $region48: #{conformer_encoder.25} parent=43 // pred_fallthru
        _
    $region44: #{conformer_encoder.25} parent=5 // pred_fallthru
      _
  $region6: #{conformer_encoder.25} parent=0 // loop_footer
    %s14 = sadd.s32 1, %s10
  $region7: #{conformer_encoder.25} parent=0 // loop_footer_branch
    %9 = sbr.rel target = $region3
  $region8: #{conformer_encoder.25} parent=0 // loop_exit
    _

// kernel: conformer_encoder.30
$region0: #{conformer_encoder.30}
  #allocation0 [shape = 'u32[]', space=smem, size = 0x4, offset = 0x4, fixed_abs, tag = 'smem constant byte address 0x4 - core index']
  #allocation1 [shape = 'u32[144,128]{1,0:T(1,128)}', space=vmem, size = 0x12000, scoped, tag = 'internal scratch']
  %s0 = inlined_call_operand.vmem [shape: bf16[16,32], index: 0, kind: input, shape index: {}]
  %s1 = inlined_call_operand.vmem [shape: bf16[32,32], index: 1, kind: input, shape index: {}]
  %s2 = inlined_call_operand.vmem [shape: f32[1,32], index: 2, kind: input, shape index: {}]
  %s3 = inlined_call_operand.vmem [shape: bf16[16,32], index: 3, kind: input, shape index: {}]
  %s4 = inlined_call_operand.vmem [shape: bf16[16,32], index: 4, kind: output, shape index: {}]
  %s5 = sld [smem:[#allocation0]]
  $region26: #{conformer_encoder.30} parent=0
    _
  %s7 = ssub.s32 1, %s5
  %s8 = scalar_select 0, %s7, %s5
  // Predicated region
  $region2: #{conformer_encoder.30} parent=0 // pred_check
    _
  $region3: #{conformer_encoder.30} parent=0 // pred_check_branch
    %10 = sbr.rel (0) target = $region5
  $region4: #{conformer_encoder.30} parent=0 // pred_region
    _
  $region5: #{conformer_encoder.30} parent=0 // pred_fallthru
    _
  // Predicated region
  $region6: #{conformer_encoder.30} parent=0 // pred_check
    _
  $region7: #{conformer_encoder.30} parent=0 // pred_check_branch
    %12 = sbr.rel (0) target = $region9
  $region8: #{conformer_encoder.30} parent=0 // pred_region
    _
  $region9: #{conformer_encoder.30} parent=0 // pred_fallthru
    _
  // Predicated region
  $region10: #{conformer_encoder.30} parent=0 // pred_check
    _
  $region11: #{conformer_encoder.30} parent=0 // pred_check_branch
    %14 = sbr.rel (0) target = $region13
  $region12: #{conformer_encoder.30} parent=0 // pred_region
    _
  $region13: #{conformer_encoder.30} parent=0 // pred_fallthru
    _
  // Predicated region
  $region14: #{conformer_encoder.30} parent=0 // pred_check
    _
  $region15: #{conformer_encoder.30} parent=0 // pred_check_branch
    %16 = sbr.rel (0) target = $region17
  $region16: #{conformer_encoder.30} parent=0 // pred_region
    _
  $region17: #{conformer_encoder.30} parent=0 // pred_fallthru
    _
  %v18 = vld [vmem:[%s0] sm:$0xf]
  %v19 = vld [vmem:[%s0 + $0x4] sm:$0xf]
  %v20 = vld [vmem:[%s1] sm:$0xf]
  %v21 = vld [vmem:[%s1 + $0x4] sm:$0xf]
  %v22 = vld [vmem:[%s1 + $0x8] sm:$0xf]
  %v23 = vld [vmem:[%s1 + $0xc] sm:$0xf]
  %v24 = vld [vmem:[%s2] sm:$0x1]
  %v26 = vlaneseq
  %v27 = vshrl.u32 %v26, 7
  %v28 = vsub.s32 0, %v27
  %v29 = vrot.slane %v24, %v28
  %v33 = vunpack.c.l.b16 %v18
  %v34 = vunpack.c.l.b16 %v19
  %v35 = vpack.c.b16 %v34, %v33
  %v40 = vunpack.c.l.b16 %v20
  %v41 = vunpack.c.l.b16 %v21
  %v42 = vunpack.c.l.b16 %v22
  %v43 = vunpack.c.l.b16 %v23
  %v44 = vpack.c.b16 %v41, %v40
  %v45 = vpack.c.b16 %v43, %v42
  %vm48 = vcmask 261120
  %v50 = vsel %vm48, %v35, 0
  %52 = vmatprep.subr.bf16.mxu0 0
  %53 = vmatpush1.bf16.msra.mxu0 %v44
  %54 = vmatprep.subr.bf16.mxu0 0
  %55 = vmatpush1.bf16.msra.mxu0 %v45
  %56 = vmatprep.subr.bf16.mxu0 0
  %57 = vmatpush1.bf16.msra.mxu0 0
  %58 = vmatprep.subr.bf16.mxu0 0
  %59 = vmatpush1.bf16.msra.mxu0 0
  %60 = vmatprep.subr.bf16.mxu0 0
  %61 = vmatpush1.bf16.msra.mxu0 0
  %62 = vmatprep.subr.bf16.mxu0 0
  %63 = vmatpush1.bf16.msra.mxu0 0
  %64 = vmatprep.subr.bf16.mxu0 0
  %65 = vmatpush1.bf16.msra.mxu0 0
  %66 = vmatprep.subr.bf16.mxu0 0
  %67 = vmatpush1.bf16.msra.mxu0 0
  %68 = vmatprep.subr.bf16.mxu0 0
  %69 = vmatpush1.bf16.msra.mxu0 0
  %70 = vmatprep.subr.bf16.mxu0 0
  %71 = vmatpush1.bf16.msra.mxu0 0
  %72 = vmatprep.subr.bf16.mxu0 0
  %73 = vmatpush1.bf16.msra.mxu0 0
  %74 = vmatprep.subr.bf16.mxu0 0
  %75 = vmatpush1.bf16.msra.mxu0 0
  %76 = vmatprep.subr.bf16.mxu0 0
  %77 = vmatpush1.bf16.msra.mxu0 0
  %78 = vmatprep.subr.bf16.mxu0 0
  %79 = vmatpush1.bf16.msra.mxu0 0
  %80 = vmatprep.subr.bf16.mxu0 0
  %81 = vmatpush1.bf16.msra.mxu0 0
  %82 = vmatprep.subr.bf16.mxu0 0
  %83 = vmatpush1.bf16.msra.mxu0 0
  %84 = vmatprep.mubr.bf16.mxu0 0
  %85 = vmatmul.mubr.bf16.gmra.mrb[0].mxu0 %v50
  %v86 = vpop.f32.mrb[0].mxu0
  %v87 = vadd.f32 %v29, %v86
  %v88 = vpop.f32.mrb[0].mxu0
  %v89 = vpop.f32.mrb[0].mxu0
  %v90 = vadd.f32 %v29, %v89
  %v91 = vpop.f32.mrb[0].mxu0
  %92 = vdwg.mxu0
  %v93 = vld [vmem:[%s3] sm:$0xf]
  %v94 = vld [vmem:[%s3 + $0x4] sm:$0xf]
  %v95 = vunpack.c.l.bf16 %v93
  %v96 = vunpack.c.l.bf16 %v94
  %v97 = vadd.f32 %v95, %v87
  %v98 = vadd.f32 %v96, %v90
  %v99 = vpack.c.bf16 %v98, %v97
  %v101 = vunpack.c.l.b16 %v99
  %v102 = vunpack.c.h.b16 %v99
  %v103 = vpack.c.b16 %v101, %v101
  %v104 = vpack.c.b16 %v102, %v102
  %vm107 = vcmask 257024
  %108 = vst.msk [vmem:[%s4] sm:$0xf] %vm107, %v103
  %109 = vst.msk [vmem:[%s4 + $0x4] sm:$0xf] %vm107, %v104
  // Predicated region
  $region18: #{conformer_encoder.30} parent=0 // pred_check
    _
  $region19: #{conformer_encoder.30} parent=0 // pred_check_branch
    %111 = sbr.rel (0) target = $region21
  $region20: #{conformer_encoder.30} parent=0 // pred_region
    _
  $region21: #{conformer_encoder.30} parent=0 // pred_fallthru
    _
  // Predicated region
  $region22: #{conformer_encoder.30} parent=0 // pred_check
    _
  $region23: #{conformer_encoder.30} parent=0 // pred_check_branch
    %113 = sbr.rel (0) target = $region25
  $region24: #{conformer_encoder.30} parent=0 // pred_region
    _
  $region25: #{conformer_encoder.30} parent=0 // pred_fallthru
    _

// kernel: conformer_encoder.28
$region0: #{conformer_encoder.28}
  #allocation0 [shape = 'u32[]', space=smem, size = 0x4, offset = 0x4, fixed_abs, tag = 'smem constant byte address 0x4 - core index']
  #allocation1 [shape = 'u32[144,128]{1,0:T(1,128)}', space=vmem, size = 0x12000, scoped, tag = 'internal scratch']
  %s0 = inlined_call_operand.vmem [shape: bf16[16,32], index: 0, kind: input, shape index: {}]
  %s1 = inlined_call_operand.vmem [shape: bf16[32,96], index: 1, kind: input, shape index: {}]
  %s2 = inlined_call_operand.vmem [shape: f32[1,96], index: 2, kind: input, shape index: {}]
  %s3 = inlined_call_operand.vmem [shape: f32[1,32], index: 3, kind: input, shape index: {}]
  %s4 = inlined_call_operand.vmem [shape: f32[1,32], index: 4, kind: input, shape index: {}]
  %s5 = inlined_call_operand.vmem [shape: bf16[16,96], index: 5, kind: output, shape index: {}]
  %s6 = sld [smem:[#allocation0]]
  $region30: #{conformer_encoder.28} parent=0
    _
  %s8 = ssub.s32 1, %s6
  %s9 = scalar_select 0, %s8, %s6
  // Predicated region
  $region2: #{conformer_encoder.28} parent=0 // pred_check
    _
  $region3: #{conformer_encoder.28} parent=0 // pred_check_branch
    %11 = sbr.rel (0) target = $region5
  $region4: #{conformer_encoder.28} parent=0 // pred_region
    _
  $region5: #{conformer_encoder.28} parent=0 // pred_fallthru
    _
  // Predicated region
  $region6: #{conformer_encoder.28} parent=0 // pred_check
    _
  $region7: #{conformer_encoder.28} parent=0 // pred_check_branch
    %13 = sbr.rel (0) target = $region9
  $region8: #{conformer_encoder.28} parent=0 // pred_region
    _
  $region9: #{conformer_encoder.28} parent=0 // pred_fallthru
    _
  // Predicated region
  $region10: #{conformer_encoder.28} parent=0 // pred_check
    _
  $region11: #{conformer_encoder.28} parent=0 // pred_check_branch
    %15 = sbr.rel (0) target = $region13
  $region12: #{conformer_encoder.28} parent=0 // pred_region
    _
  $region13: #{conformer_encoder.28} parent=0 // pred_fallthru
    _
  // Predicated region
  $region14: #{conformer_encoder.28} parent=0 // pred_check
    _
  $region15: #{conformer_encoder.28} parent=0 // pred_check_branch
    %17 = sbr.rel (0) target = $region17
  $region16: #{conformer_encoder.28} parent=0 // pred_region
    _
  $region17: #{conformer_encoder.28} parent=0 // pred_fallthru
    _
  // Predicated region
  $region18: #{conformer_encoder.28} parent=0 // pred_check
    _
  $region19: #{conformer_encoder.28} parent=0 // pred_check_branch
    %19 = sbr.rel (0) target = $region21
  $region20: #{conformer_encoder.28} parent=0 // pred_region
    _
  $region21: #{conformer_encoder.28} parent=0 // pred_fallthru
    _
  %v21 = vld [vmem:[%s0] sm:$0xf]
  %v22 = vld [vmem:[%s0 + $0x4] sm:$0xf]
  %v23 = vunpack.c.l.bf16 %v21
  %v24 = vunpack.c.l.bf16 %v22
  %vm25 = vcmask 261120
  %v26 = vsel %vm25, %v23, 0.0
  %27 = vadd.xlane.f32.xlu0 %v26
  %v28 = vpop.xlane.xlu0 %27
  %v29 = vsel %vm25, %v24, 0.0
  %30 = vadd.xlane.f32.xlu0 %v29
  %v31 = vpop.xlane.xlu0 %30
  %v32 = vrcp.pop 32.0
  %v33 = vmul.f32 %v28, %v32
  %v34 = vmul.f32 %v31, %v32
  %v35 = vsub.f32 %v23, %v33
  %v36 = vsub.f32 %v24, %v34
  %v37 = vmul.f32 %v35, %v35
  %v38 = vmul.f32 %v36, %v36
  %v39 = vsel %vm25, %v37, 0.0
  %40 = vadd.xlane.f32.xlu0 %v39
  %v41 = vpop.xlane.xlu0 %40
  %v42 = vsel %vm25, %v38, 0.0
  %43 = vadd.xlane.f32.xlu0 %v42
  %v44 = vpop.xlane.xlu0 %43
  %v45 = vmul.f32 %v41, %v32
  %v46 = vmul.f32 %v44, %v32
  %v47 = vadd.f32 %v45, 1e-05
  %v48 = vadd.f32 %v46, 1e-05
  %v49 = vrsqrt.pop %v47
  %v50 = vrsqrt.pop %v48
  %v51 = vmul.f32 %v35, %v49
  %v52 = vmul.f32 %v36, %v50
  %v53 = vld [vmem:[%s3] sm:$0x1]
  %v55 = vlaneseq
  %v56 = vshrl.u32 %v55, 7
  %v57 = vsub.s32 0, %v56
  %v58 = vrot.slane %v53, %v57
  %v60 = vmul.f32 %v51, %v58
  %v61 = vmul.f32 %v52, %v58
  %v62 = vld [vmem:[%s4] sm:$0x1]
  %v64 = vlaneseq
  %v65 = vshrl.u32 %v64, 7
  %v66 = vsub.s32 0, %v65
  %v67 = vrot.slane %v62, %v66
  %v69 = vadd.f32 %v60, %v67
  %v70 = vadd.f32 %v61, %v67
  %v71 = vpack.c.bf16 %v70, %v69
  %v72 = vld [vmem:[%s1] sm:$0xf]
  %v73 = vld [vmem:[%s1 + $0x4] sm:$0xf]
  %v74 = vld [vmem:[%s1 + $0x8] sm:$0xf]
  %v75 = vld [vmem:[%s1 + $0xc] sm:$0xf]
  %v76 = vld [vmem:[%s2] sm:$0x1]
  %v78 = vlaneseq
  %v79 = vshrl.u32 %v78, 7
  %v80 = vsub.s32 0, %v79
  %v81 = vrot.slane %v76, %v80
  %v87 = vunpack.c.l.b16 %v72
  %v88 = vunpack.c.l.b16 %v73
  %v89 = vunpack.c.l.b16 %v74
  %v90 = vunpack.c.l.b16 %v75
  %v91 = vpack.c.b16 %v88, %v87
  %v92 = vpack.c.b16 %v90, %v89
  %v96 = vsel %vm25, %v71, 0
  %98 = vmatprep.subr.bf16.mxu0 0
  %99 = vmatpush1.bf16.msra.mxu0 %v91
  %100 = vmatprep.subr.bf16.mxu0 0
  %101 = vmatpush1.bf16.msra.mxu0 %v92
  %102 = vmatprep.subr.bf16.mxu0 0
  %103 = vmatpush1.bf16.msra.mxu0 0
  %104 = vmatprep.subr.bf16.mxu0 0
  %105 = vmatpush1.bf16.msra.mxu0 0
  %106 = vmatprep.subr.bf16.mxu0 0
  %107 = vmatpush1.bf16.msra.mxu0 0
  %108 = vmatprep.subr.bf16.mxu0 0
  %109 = vmatpush1.bf16.msra.mxu0 0
  %110 = vmatprep.subr.bf16.mxu0 0
  %111 = vmatpush1.bf16.msra.mxu0 0
  %112 = vmatprep.subr.bf16.mxu0 0
  %113 = vmatpush1.bf16.msra.mxu0 0
  %114 = vmatprep.subr.bf16.mxu0 0
  %115 = vmatpush1.bf16.msra.mxu0 0
  %116 = vmatprep.subr.bf16.mxu0 0
  %117 = vmatpush1.bf16.msra.mxu0 0
  %118 = vmatprep.subr.bf16.mxu0 0
  %119 = vmatpush1.bf16.msra.mxu0 0
  %120 = vmatprep.subr.bf16.mxu0 0
  %121 = vmatpush1.bf16.msra.mxu0 0
  %122 = vmatprep.subr.bf16.mxu0 0
  %123 = vmatpush1.bf16.msra.mxu0 0
  %124 = vmatprep.subr.bf16.mxu0 0
  %125 = vmatpush1.bf16.msra.mxu0 0
  %126 = vmatprep.subr.bf16.mxu0 0
  %127 = vmatpush1.bf16.msra.mxu0 0
  %128 = vmatprep.subr.bf16.mxu0 0
  %129 = vmatpush1.bf16.msra.mxu0 0
  %130 = vmatprep.mubr.bf16.mxu0 0
  %131 = vmatmul.mubr.bf16.gmra.mrb[0].mxu0 %v96
  %v132 = vpop.f32.mrb[0].mxu0
  %v133 = vadd.f32 %v81, %v132
  %v134 = vpop.f32.mrb[0].mxu0
  %v135 = vpop.f32.mrb[0].mxu0
  %v136 = vadd.f32 %v81, %v135
  %v137 = vpop.f32.mrb[0].mxu0
  %138 = vdwg.mxu0
  %v139 = vpack.c.bf16 %v136, %v133
  %v141 = vunpack.c.l.b16 %v139
  %v142 = vunpack.c.h.b16 %v139
  %v143 = vpack.c.b16 %v141, %v141
  %v144 = vpack.c.b16 %v142, %v142
  %vm147 = vcmask 781312
  %148 = vst.msk [vmem:[%s5] sm:$0xf] %vm147, %v143
  %149 = vst.msk [vmem:[%s5 + $0x4] sm:$0xf] %vm147, %v144
  // Predicated region
  $region22: #{conformer_encoder.28} parent=0 // pred_check
    _
  $region23: #{conformer_encoder.28} parent=0 // pred_check_branch
    %151 = sbr.rel (0) target = $region25
  $region24: #{conformer_encoder.28} parent=0 // pred_region
    _
  $region25: #{conformer_encoder.28} parent=0 // pred_fallthru
    _
  // Predicated region
  $region26: #{conformer_encoder.28} parent=0 // pred_check
    _
  $region27: #{conformer_encoder.28} parent=0 // pred_check_branch
    %153 = sbr.rel (0) target = $region29
  $region28: #{conformer_encoder.28} parent=0 // pred_region
    _
  $region29: #{conformer_encoder.28} parent=0 // pred_fallthru
    _

// kernel: conformer_encoder.27
$region0: #{conformer_encoder.27}
  #allocation0 [shape = 'u32[]', space=smem, size = 0x4, offset = 0x4, fixed_abs, tag = 'smem constant byte address 0x4 - core index']
  #allocation1 [shape = 'u32[144,128]{1,0:T(1,128)}', space=vmem, size = 0x12000, scoped, tag = 'internal scratch']
  %s0 = inlined_call_operand.vmem [shape: bf16[16,64], index: 0, kind: input, shape index: {}]
  %s1 = inlined_call_operand.vmem [shape: bf16[64,32], index: 1, kind: input, shape index: {}]
  %s2 = inlined_call_operand.vmem [shape: f32[1,32], index: 2, kind: input, shape index: {}]
  %s3 = inlined_call_operand.vmem [shape: bf16[16,32], index: 3, kind: input, shape index: {}]
  %s4 = inlined_call_operand.vmem [shape: bf16[16,32], index: 4, kind: output, shape index: {}]
  %s5 = sld [smem:[#allocation0]]
  $region26: #{conformer_encoder.27} parent=0
    _
  %s7 = ssub.s32 1, %s5
  %s8 = scalar_select 0, %s7, %s5
  // Predicated region
  $region2: #{conformer_encoder.27} parent=0 // pred_check
    _
  $region3: #{conformer_encoder.27} parent=0 // pred_check_branch
    %10 = sbr.rel (0) target = $region5
  $region4: #{conformer_encoder.27} parent=0 // pred_region
    _
  $region5: #{conformer_encoder.27} parent=0 // pred_fallthru
    _
  // Predicated region
  $region6: #{conformer_encoder.27} parent=0 // pred_check
    _
  $region7: #{conformer_encoder.27} parent=0 // pred_check_branch
    %12 = sbr.rel (0) target = $region9
  $region8: #{conformer_encoder.27} parent=0 // pred_region
    _
  $region9: #{conformer_encoder.27} parent=0 // pred_fallthru
    _
  // Predicated region
  $region10: #{conformer_encoder.27} parent=0 // pred_check
    _
  $region11: #{conformer_encoder.27} parent=0 // pred_check_branch
    %14 = sbr.rel (0) target = $region13
  $region12: #{conformer_encoder.27} parent=0 // pred_region
    _
  $region13: #{conformer_encoder.27} parent=0 // pred_fallthru
    _
  // Predicated region
  $region14: #{conformer_encoder.27} parent=0 // pred_check
    _
  $region15: #{conformer_encoder.27} parent=0 // pred_check_branch
    %16 = sbr.rel (0) target = $region17
  $region16: #{conformer_encoder.27} parent=0 // pred_region
    _
  $region17: #{conformer_encoder.27} parent=0 // pred_fallthru
    _
  %v18 = vld [vmem:[%s0] sm:$0xf]
  %v19 = vld [vmem:[%s0 + $0x4] sm:$0xf]
  %v20 = vld [vmem:[%s1] sm:$0xf]
  %v21 = vld [vmem:[%s1 + $0x4] sm:$0xf]
  %v22 = vld [vmem:[%s1 + $0x8] sm:$0xf]
  %v23 = vld [vmem:[%s1 + $0xc] sm:$0xf]
  %v24 = vld [vmem:[%s1 + $0x10] sm:$0xf]
  %v25 = vld [vmem:[%s1 + $0x14] sm:$0xf]
  %v26 = vld [vmem:[%s1 + $0x18] sm:$0xf]
  %v27 = vld [vmem:[%s1 + $0x1c] sm:$0xf]
  %v28 = vld [vmem:[%s2] sm:$0x1]
  %v30 = vlaneseq
  %v31 = vshrl.u32 %v30, 7
  %v32 = vsub.s32 0, %v31
  %v33 = vrot.slane %v28, %v32
  %v37 = vunpack.c.l.b16 %v18
  %v38 = vunpack.c.l.b16 %v19
  %v39 = vpack.c.b16 %v38, %v37
  %v48 = vunpack.c.l.b16 %v20
  %v49 = vunpack.c.l.b16 %v21
  %v50 = vunpack.c.l.b16 %v22
  %v51 = vunpack.c.l.b16 %v23
  %v52 = vunpack.c.l.b16 %v24
  %v53 = vunpack.c.l.b16 %v25
  %v54 = vunpack.c.l.b16 %v26
  %v55 = vunpack.c.l.b16 %v27
  %v56 = vpack.c.b16 %v49, %v48
  %v57 = vpack.c.b16 %v51, %v50
  %v58 = vpack.c.b16 %v53, %v52
  %v59 = vpack.c.b16 %v55, %v54
  %vm64 = vcmask 523264
  %v66 = vsel %vm64, %v39, 0
  %68 = vmatprep.subr.bf16.mxu0 0
  %69 = vmatpush1.bf16.msra.mxu0 %v56
  %70 = vmatprep.subr.bf16.mxu0 0
  %71 = vmatpush1.bf16.msra.mxu0 %v57
  %72 = vmatprep.subr.bf16.mxu0 0
  %73 = vmatpush1.bf16.msra.mxu0 %v58
  %74 = vmatprep.subr.bf16.mxu0 0
  %75 = vmatpush1.bf16.msra.mxu0 %v59
  %76 = vmatprep.subr.bf16.mxu0 0
  %77 = vmatpush1.bf16.msra.mxu0 0
  %78 = vmatprep.subr.bf16.mxu0 0
  %79 = vmatpush1.bf16.msra.mxu0 0
  %80 = vmatprep.subr.bf16.mxu0 0
  %81 = vmatpush1.bf16.msra.mxu0 0
  %82 = vmatprep.subr.bf16.mxu0 0
  %83 = vmatpush1.bf16.msra.mxu0 0
  %84 = vmatprep.subr.bf16.mxu0 0
  %85 = vmatpush1.bf16.msra.mxu0 0
  %86 = vmatprep.subr.bf16.mxu0 0
  %87 = vmatpush1.bf16.msra.mxu0 0
  %88 = vmatprep.subr.bf16.mxu0 0
  %89 = vmatpush1.bf16.msra.mxu0 0
  %90 = vmatprep.subr.bf16.mxu0 0
  %91 = vmatpush1.bf16.msra.mxu0 0
  %92 = vmatprep.subr.bf16.mxu0 0
  %93 = vmatpush1.bf16.msra.mxu0 0
  %94 = vmatprep.subr.bf16.mxu0 0
  %95 = vmatpush1.bf16.msra.mxu0 0
  %96 = vmatprep.subr.bf16.mxu0 0
  %97 = vmatpush1.bf16.msra.mxu0 0
  %98 = vmatprep.subr.bf16.mxu0 0
  %99 = vmatpush1.bf16.msra.mxu0 0
  %100 = vmatprep.mubr.bf16.mxu0 0
  %101 = vmatmul.mubr.bf16.gmra.mrb[0].mxu0 %v66
  %v102 = vpop.f32.mrb[0].mxu0
  %v103 = vadd.f32 %v33, %v102
  %v104 = vpop.f32.mrb[0].mxu0
  %v105 = vpop.f32.mrb[0].mxu0
  %v106 = vadd.f32 %v33, %v105
  %v107 = vpop.f32.mrb[0].mxu0
  %108 = vdwg.mxu0
  %v109 = vld [vmem:[%s3] sm:$0xf]
  %v110 = vld [vmem:[%s3 + $0x4] sm:$0xf]
  %v111 = vunpack.c.l.bf16 %v109
  %v112 = vunpack.c.l.bf16 %v110
  %v113 = vmul.f32 %v103, 0.5
  %v114 = vmul.f32 %v106, 0.5
  %v115 = vadd.f32 %v111, %v113
  %v116 = vadd.f32 %v112, %v114
  %v117 = vpack.c.bf16 %v116, %v115
  %v119 = vunpack.c.l.b16 %v117
  %v120 = vunpack.c.h.b16 %v117
  %v121 = vpack.c.b16 %v119, %v119
  %v122 = vpack.c.b16 %v120, %v120
  %vm125 = vcmask 257024
  %126 = vst.msk [vmem:[%s4] sm:$0xf] %vm125, %v121
  %127 = vst.msk [vmem:[%s4 + $0x4] sm:$0xf] %vm125, %v122
  // Predicated region
  $region18: #{conformer_encoder.27} parent=0 // pred_check
    _
  $region19: #{conformer_encoder.27} parent=0 // pred_check_branch
    %129 = sbr.rel (0) target = $region21
  $region20: #{conformer_encoder.27} parent=0 // pred_region
    _
  $region21: #{conformer_encoder.27} parent=0 // pred_fallthru
    _
  // Predicated region
  $region22: #{conformer_encoder.27} parent=0 // pred_check
    _
  $region23: #{conformer_encoder.27} parent=0 // pred_check_branch
    %131 = sbr.rel (0) target = $region25
  $region24: #{conformer_encoder.27} parent=0 // pred_region
    _
  $region25: #{conformer_encoder.27} parent=0 // pred_fallthru
    _

// kernel: conformer_encoder.29
$region0: #{conformer_encoder.29}
  #allocation0 [shape = 'u32[]', space=smem, size = 0x4, offset = 0x4, fixed_abs, tag = 'smem constant byte address 0x4 - core index']
  #allocation1 [shape = 'u32[144,128]{1,0:T(1,128)}', space=vmem, size = 0x12000, scoped, tag = 'internal scratch']
  #allocation2 [shape = 'f32[4,8,1]{2,1,0:T(8,128)}', space=vmem, size = 0x4000, scoped, tag = 'scratch operand']
  #allocation3 [shape = 'f32[4,8,1]{2,1,0:T(8,128)}', space=vmem, size = 0x4000, scoped, tag = 'scratch operand']
  #allocation4 [shape = 'f32[4,8,8]{2,1,0:T(8,128)}', space=vmem, size = 0x4000, scoped, tag = 'scratch operand']
  %s0 = inlined_call_operand.vmem [shape: bf16[2,8,96], index: 0, kind: input, shape index: {}, may-alias: {0,1}]
  %s1 = inlined_call_operand.vmem [shape: bf16[2,8,96], index: 1, kind: input, shape index: {}, may-alias: {0,1}]
  %s2 = inlined_call_operand.vmem [shape: bf16[2,8,32], index: 2, kind: output, shape index: {}]
  %s3 = sld [smem:[#allocation0]]
  $region49: #{conformer_encoder.29} parent=0
    _
  %s5 = ssub.s32 1, %s3
  %s6 = scalar_select 0, %s5, %s3
  loop: start=0, step=1, limit=4
  $region2: #{conformer_encoder.29} parent=0 // loop_pre_header
    _
  $region3: #{conformer_encoder.29} parent=0 // loop_header
    %s8 = sphi 0, %s12
    %p9 = scmp.ge.s32.totalorder %s8, 4
    %s15 = sphi 0, %s34
    %s16 = sphi 0, %s30
    %s17 = sphi 0, %s26
    %s18 = sphi 0, %s15
    %s19 = sphi 0, %s16
    %s20 = sphi 0, %s17
    %s21 = sphi 0, %s18
    %s22 = sphi 0, %s19
    %s23 = sphi 0, %s20
    %s39 = sphi 0, %s41
    %s42 = sphi 0, %s39
    %s43 = sphi 0, %s42
    %s59 = sphi 0, %s43
    %s67 = sphi 0, %s69
    %s70 = sphi 0, %s67
    %s71 = sphi 0, %s70
    %s87 = sphi 0, %s71
    %s95 = sphi 0, %s97
    %s98 = sphi 0, %s95
    %s99 = sphi 0, %s98
    %s115 = sphi 0, %s99
  $region4: #{conformer_encoder.29} parent=0 // loop_header_branch
    %11 = sbr.rel (%p9) target = $region8
  $region5: #{conformer_encoder.29} parent=0 // loop_body
    %s13 = ssub.s32 %s8, 1
    %s14 = ssub.s32 %s8, 2
    %s24 = sadd.s32 1, %s17
    %p25 = scmp.ge.s32.totalorder %s24, 1
    %s26 = scalar_select %p25, 0, %s24
    %s27 = sadd.s32 1, %s16
    %s28 = scalar_select %p25, %s27, %s16
    %p29 = scmp.ge.s32.totalorder %s28, 1
    %s30 = scalar_select %p29, 0, %s28
    %s31 = sadd.s32 1, %s15
    %s32 = scalar_select %p29, %s31, %s15
    %p33 = scmp.ge.s32.totalorder %s32, 2
    %s34 = scalar_select %p33, 0, %s32
    %s35 = ssub.s32 %s15, %s34
    %s36 = ssub.s32 %s16, %s30
    %s37 = sor.u32 %s35, %s36
    %p38 = scmp.eq.s32.totalorder %s37, 0
    %s40 = sadd.s32 %s39, 1
    %s41 = scalar_select %p38, %s39, %s40
    %p44 = pneg %p38
    %p45 = scmp.eq.s32.totalorder %s8, 1
    %p46 = por %p44, %p45
    %p47 = scmp.ne.s32.totalorder %s39, %s42
    %p48 = scmp.eq.s32.totalorder %s8, 0
    %p49 = por %p47, %p48
    %p50 = scmp.ne.s32.totalorder %s39, %s42
    %p51 = scmp.eq.s32.totalorder %s13, 1
    %p52 = por %p50, %p51
    %p53 = scmp.ne.s32.totalorder %s42, %s43
    %p54 = scmp.eq.s32.totalorder %s13, 0
    %p55 = por %p53, %p54
    %p56 = scmp.ne.s32.totalorder %s42, %s43
    %p57 = scmp.eq.s32.totalorder %s14, 1
    %p58 = por %p56, %p57
    %p60 = scmp.ne.s32.totalorder %s43, %s59
    %p61 = scmp.eq.s32.totalorder %s14, 0
    %p62 = por %p60, %p61
    %s63 = ssub.s32 %s15, %s34
    %s64 = ssub.s32 %s17, %s26
    %s65 = sor.u32 %s63, %s64
    %p66 = scmp.eq.s32.totalorder %s65, 0
    %s68 = sadd.s32 %s67, 1
    %s69 = scalar_select %p66, %s67, %s68
    %p72 = pneg %p66
    %p73 = scmp.eq.s32.totalorder %s8, 1
    %p74 = por %p72, %p73
    %p75 = scmp.ne.s32.totalorder %s67, %s70
    %p76 = scmp.eq.s32.totalorder %s8, 0
    %p77 = por %p75, %p76
    %p78 = scmp.ne.s32.totalorder %s67, %s70
    %p79 = scmp.eq.s32.totalorder %s13, 1
    %p80 = por %p78, %p79
    %p81 = scmp.ne.s32.totalorder %s70, %s71
    %p82 = scmp.eq.s32.totalorder %s13, 0
    %p83 = por %p81, %p82
    %p84 = scmp.ne.s32.totalorder %s70, %s71
    %p85 = scmp.eq.s32.totalorder %s14, 1
    %p86 = por %p84, %p85
    %p88 = scmp.ne.s32.totalorder %s71, %s87
    %p89 = scmp.eq.s32.totalorder %s14, 0
    %p90 = por %p88, %p89
    %s91 = ssub.s32 %s15, %s34
    %s92 = ssub.s32 %s16, %s30
    %s93 = sor.u32 %s91, %s92
    %p94 = scmp.eq.s32.totalorder %s93, 0
    %s96 = sadd.s32 %s95, 1
    %s97 = scalar_select %p94, %s95, %s96
    %p100 = pneg %p94
    %p101 = scmp.eq.s32.totalorder %s8, 1
    %p102 = por %p100, %p101
    %p103 = scmp.ne.s32.totalorder %s95, %s98
    %p104 = scmp.eq.s32.totalorder %s8, 0
    %p105 = por %p103, %p104
    %p106 = scmp.ne.s32.totalorder %s95, %s98
    %p107 = scmp.eq.s32.totalorder %s13, 1
    %p108 = por %p106, %p107
    %p109 = scmp.ne.s32.totalorder %s98, %s99
    %p110 = scmp.eq.s32.totalorder %s13, 0
    %p111 = por %p109, %p110
    %p112 = scmp.ne.s32.totalorder %s98, %s99
    %p113 = scmp.eq.s32.totalorder %s14, 1
    %p114 = por %p112, %p113
    %p116 = scmp.ne.s32.totalorder %s99, %s115
    %p117 = scmp.eq.s32.totalorder %s14, 0
    %p118 = por %p116, %p117
    %p119 = scmp.le.s32.totalorder 1, %s8
    %p120 = scmp.lt.s32.totalorder %s8, 3
    %p121 = pnand %p119, %p120
    %p122 = pneg %p121
    // Predicated region
    $region9: #{conformer_encoder.29} parent=5 // pred_check
      _
    $region10: #{conformer_encoder.29} parent=5 // pred_check_branch
      %124 = sbr.rel (%p121) target = $region12
    $region11: #{conformer_encoder.29} parent=5 // pred_region
      %s125 = ssub.s32 %s8, 1
    $region12: #{conformer_encoder.29} parent=5 // pred_fallthru
      _
    %p126 = scmp.lt.s32.totalorder %s8, 2
    // Predicated region
    $region13: #{conformer_encoder.29} parent=5 // pred_check
      %p127 = pneg %p126
    $region14: #{conformer_encoder.29} parent=5 // pred_check_branch
      %129 = sbr.rel (%p127) target = $region16
    $region15: #{conformer_encoder.29} parent=5 // pred_region
      // Predicated region
      $region17: #{conformer_encoder.29} parent=15 // pred_check
        %p130 = pneg %p49
      $region18: #{conformer_encoder.29} parent=15 // pred_check_branch
        %132 = sbr.rel (%p130) target = $region20
      $region19: #{conformer_encoder.29} parent=15 // pred_region
        %p133 = scmp.lt.s32.totalorder %s15, 1
        %s134 = scalar_select %p133, %s15, 1
        %p135 = scmp.lt.s32.totalorder %s16, 0
        %s136 = scalar_select %p135, %s16, 0
        %s137 = sadd.s32 %s136, %s134
        %s138 = smul.addr %s137, 4
        %s139 = scalar_lea.vmem %s0, %s138
      $region20: #{conformer_encoder.29} parent=15 // pred_fallthru
        _
      // Predicated region
      $region21: #{conformer_encoder.29} parent=15 // pred_check
        %p140 = pneg %p77
      $region22: #{conformer_encoder.29} parent=15 // pred_check_branch
        %142 = sbr.rel (%p140) target = $region24
      $region23: #{conformer_encoder.29} parent=15 // pred_region
        %p143 = scmp.lt.s32.totalorder %s15, 1
        %s144 = scalar_select %p143, %s15, 1
        %p145 = scmp.lt.s32.totalorder %s17, 0
        %s146 = scalar_select %p145, %s17, 0
        %s147 = sadd.s32 %s146, %s144
        %s148 = smul.addr %s147, 4
        %s149 = scalar_lea.vmem %s1, %s148
      $region24: #{conformer_encoder.29} parent=15 // pred_fallthru
        _
    $region16: #{conformer_encoder.29} parent=5 // pred_fallthru
      _
    %p150 = scmp.le.s32.totalorder 1, %s8
    %p151 = scmp.lt.s32.totalorder %s8, 3
    %p152 = pnand %p150, %p151
    %p153 = pneg %p152
    // Predicated region
    $region25: #{conformer_encoder.29} parent=5 // pred_check
      _
    $region26: #{conformer_encoder.29} parent=5 // pred_check_branch
      %155 = sbr.rel (%p152) target = $region28
    $region27: #{conformer_encoder.29} parent=5 // pred_region
      %s156 = ssub.s32 %s8, 1
      %p157 = scmp.lt.s32.totalorder %s18, 1
      %s158 = scalar_select %p157, %s18, 1
      %p159 = scmp.lt.s32.totalorder %s19, 0
      %s160 = scalar_select %p159, %s19, 0
      %s161 = sadd.s32 %s160, %s158
      %s162 = smul.addr %s161, 4
      %s163 = scalar_lea.vmem %s0, %s162
      %p164 = pneg %p55
      %p165 = pneg %p52
      %p166 = scmp.lt.s32.totalorder %s18, 1
      %s167 = scalar_select %p166, %s18, 1
      %p168 = scmp.lt.s32.totalorder %s20, 0
      %s169 = scalar_select %p168, %s20, 0
      %s170 = sadd.s32 %s169, %s167
      %s171 = smul.addr %s170, 4
      %s172 = scalar_lea.vmem %s1, %s171
      %p173 = pneg %p83
      %p174 = pneg %p80
      %p175 = pneg %p111
      %p176 = pneg %p108
      %p177 = scmp.lt.s32.totalorder %s18, 1
      %s178 = scalar_select %p177, %s18, 1
      %p179 = scmp.lt.s32.totalorder %s19, 0
      %s180 = scalar_select %p179, %s19, 0
      %s181 = sadd.s32 %s180, %s178
      %s182 = smul.addr %s181, 4
      %s183 = scalar_lea.vmem %s2, %s182
      %p184 = scmp.lt.s32.totalorder %s18, 1
      %s185 = scalar_select %p184, %s18, 1
      %p186 = scmp.lt.s32.totalorder %s19, 0
      %s187 = scalar_select %p186, %s19, 0
      %s188 = sadd.s32 %s187, %s185
      %s189 = smul.addr %s188, 4
      %s190 = scalar_lea.vmem %s0, %s189
      %p191 = scmp.lt.s32.totalorder %s18, 1
      %s192 = scalar_select %p191, %s18, 1
      %p193 = scmp.lt.s32.totalorder %s20, 0
      %s194 = scalar_select %p193, %s20, 0
      %s195 = sadd.s32 %s194, %s192
      %s196 = smul.addr %s195, 4
      %s197 = scalar_lea.vmem %s1, %s196
      %p198 = scmp.lt.s32.totalorder %s18, 1
      %s199 = scalar_select %p198, %s18, 1
      %p200 = scmp.lt.s32.totalorder %s19, 0
      %s201 = scalar_select %p200, %s19, 0
      %s202 = sadd.s32 %s201, %s199
      %s203 = smul.addr %s202, 4
      %s204 = scalar_lea.vmem %s2, %s203
      %p206 = scmp.eq.s32.totalorder %s20, 0
      // Predicated region
      $region29: #{conformer_encoder.29} parent=27 // pred_check
        %p207 = pneg %p206
      $region30: #{conformer_encoder.29} parent=27 // pred_check_branch
        %209 = sbr.rel (%p207) target = $region32
      $region31: #{conformer_encoder.29} parent=27 // pred_region
        %vm210 = vcmask 7168
        %211 = vst.msk [vmem:[#allocation2] sm:$0xff] %vm210, -inf
        %212 = vst.msk [vmem:[#allocation2 + $0x8] sm:$0xff] %vm210, -inf
        %213 = vst.msk [vmem:[#allocation2 + $0x10] sm:$0xff] %vm210, -inf
        %214 = vst.msk [vmem:[#allocation2 + $0x18] sm:$0xff] %vm210, -inf
        %215 = vst.msk [vmem:[#allocation3] sm:$0xff] %vm210, 0.0
        %216 = vst.msk [vmem:[#allocation3 + $0x8] sm:$0xff] %vm210, 0.0
        %217 = vst.msk [vmem:[#allocation3 + $0x10] sm:$0xff] %vm210, 0.0
        %218 = vst.msk [vmem:[#allocation3 + $0x18] sm:$0xff] %vm210, 0.0
        %vm219 = vcmask 64512
        %220 = vst.msk [vmem:[#allocation4] sm:$0xff] %vm219, 0.0
        %221 = vst.msk [vmem:[#allocation4 + $0x8] sm:$0xff] %vm219, 0.0
        %222 = vst.msk [vmem:[#allocation4 + $0x10] sm:$0xff] %vm219, 0.0
        %223 = vst.msk [vmem:[#allocation4 + $0x18] sm:$0xff] %vm219, 0.0
      $region32: #{conformer_encoder.29} parent=27 // pred_fallthru
        _
      %v224 = vld [vmem:[%s190] sm:$0xf]
      %v225 = vld [vmem:[%s197] sm:$0xf]
      %v227 = vunpack.c.l.b16 %v225
      %v228 = vpack.c.b16 %v227, %v227
      %229 = vrot.lane.b32.xlu0 %v228, 96
      %v230 = vpop.permute.xlu0 %229
      %vm231 = vcmask 64512
      %v233 = vsel %vm231, %v224, 0
      %v236 = vsel %vm231, %v230, 0
      %238 = vmatprep.subr.bf16.mxu0 0
      %239 = vmatpush1.bf16.xpose.msra.mxu0 %v236
      %240 = vmatprep.subr.bf16.mxu0 0
      %241 = vmatpush1.bf16.xpose.msra.mxu0 0
      %242 = vmatprep.subr.bf16.mxu0 0
      %243 = vmatpush1.bf16.xpose.msra.mxu0 0
      %244 = vmatprep.subr.bf16.mxu0 0
      %245 = vmatpush1.bf16.xpose.msra.mxu0 0
      %246 = vmatprep.subr.bf16.mxu0 0
      %247 = vmatpush1.bf16.xpose.msra.mxu0 0
      %248 = vmatprep.subr.bf16.mxu0 0
      %249 = vmatpush1.bf16.xpose.msra.mxu0 0
      %250 = vmatprep.subr.bf16.mxu0 0
      %251 = vmatpush1.bf16.xpose.msra.mxu0 0
      %252 = vmatprep.subr.bf16.mxu0 0
      %253 = vmatpush1.bf16.xpose.msra.mxu0 0
      %254 = vmatprep.subr.bf16.mxu0 0
      %255 = vmatpush1.bf16.xpose.msra.mxu0 0
      %256 = vmatprep.subr.bf16.mxu0 0
      %257 = vmatpush1.bf16.xpose.msra.mxu0 0
      %258 = vmatprep.subr.bf16.mxu0 0
      %259 = vmatpush1.bf16.xpose.msra.mxu0 0
      %260 = vmatprep.subr.bf16.mxu0 0
      %261 = vmatpush1.bf16.xpose.msra.mxu0 0
      %262 = vmatprep.subr.bf16.mxu0 0
      %263 = vmatpush1.bf16.xpose.msra.mxu0 0
      %264 = vmatprep.subr.bf16.mxu0 0
      %265 = vmatpush1.bf16.xpose.msra.mxu0 0
      %266 = vmatprep.subr.bf16.mxu0 0
      %267 = vmatpush1.bf16.xpose.msra.mxu0 0
      %268 = vmatprep.subr.bf16.mxu0 0
      %269 = vmatpush1.bf16.xpose.msra.mxu0 0
      %270 = vmatprep.mubr.bf16.mxu0 0
      %271 = vmatmul.mubr.bf16.gmra.mrb[0].mxu0 %v233
      %v272 = vpop.f32.mrb[0].mxu0
      %v273 = vadd.f32 0.0, %v272
      %v274 = vpop.f32.mrb[0].mxu0
      %v275 = vpop.f32.mrb[0].mxu0
      %v276 = vpop.f32.mrb[0].mxu0
      %277 = vdwg.mxu0
      %v278 = vld [vmem:[#allocation2] sm:$0xff]
      %v279 = vsel %vm231, %v273, -inf
      %280 = vmax.xlane.f32.xlu0 %v279
      %v281 = vpop.xlane.xlu0 %280
      %v282 = vmax.f32 %v278, %v281
      %v283 = vsub.f32 %v278, %v282
      %v284 = vmul.f32 %v283, 1.442695
      %v285 = vpow.pop %v284
      %287 = vset.pattern.permute.xlu0 0
      %288 = vperm.xlu0 %287, %v282
      %v289 = vpop.permute.xlu0 %288
      %v291 = vsub.f32 %v273, %v289
      %v292 = vmul.f32 %v291, 1.442695
      %v293 = vpow.pop %v292
      %v294 = vld [vmem:[#allocation3] sm:$0xff]
      %v295 = vmul.f32 %v285, %v294
      %v296 = vsel %vm231, %v293, 0.0
      %297 = vadd.xlane.f32.xlu0 %v296
      %v298 = vpop.xlane.xlu0 %297
      %v299 = vadd.f32 %v295, %v298
      %vm300 = vcmask 7168
      %301 = vst.msk [vmem:[#allocation3] sm:$0xff] %vm300, %v299
      %v302 = vld [vmem:[#allocation4] sm:$0xff]
      %304 = vset.pattern.permute.xlu0 0
      %305 = vperm.xlu0 %304, %v285
      %v306 = vpop.permute.xlu0 %305
      %v308 = vmul.f32 %v306, %v302
      %v309 = vpack.c.bf16 %v293, %v293
      %310 = vrot.lane.b32.xlu0 %v228, 64
      %v311 = vpop.permute.xlu0 %310
      %v313 = vsel %vm231, %v309, 0
      %vm315 = vcmask 1043456
      %v317 = vsel %vm315, %v311, 0
      %319 = vmatprep.subr.bf16.mxu0 0
      %320 = vmatpush1.bf16.msra.mxu0 %v317
      %321 = vmatprep.subr.bf16.mxu0 0
      %322 = vmatpush1.bf16.msra.mxu0 0
      %323 = vmatprep.subr.bf16.mxu0 0
      %324 = vmatpush1.bf16.msra.mxu0 0
      %325 = vmatprep.subr.bf16.mxu0 0
      %326 = vmatpush1.bf16.msra.mxu0 0
      %327 = vmatprep.subr.bf16.mxu0 0
      %328 = vmatpush1.bf16.msra.mxu0 0
      %329 = vmatprep.subr.bf16.mxu0 0
      %330 = vmatpush1.bf16.msra.mxu0 0
      %331 = vmatprep.subr.bf16.mxu0 0
      %332 = vmatpush1.bf16.msra.mxu0 0
      %333 = vmatprep.subr.bf16.mxu0 0
      %334 = vmatpush1.bf16.msra.mxu0 0
      %335 = vmatprep.subr.bf16.mxu0 0
      %336 = vmatpush1.bf16.msra.mxu0 0
      %337 = vmatprep.subr.bf16.mxu0 0
      %338 = vmatpush1.bf16.msra.mxu0 0
      %339 = vmatprep.subr.bf16.mxu0 0
      %340 = vmatpush1.bf16.msra.mxu0 0
      %341 = vmatprep.subr.bf16.mxu0 0
      %342 = vmatpush1.bf16.msra.mxu0 0
      %343 = vmatprep.subr.bf16.mxu0 0
      %344 = vmatpush1.bf16.msra.mxu0 0
      %345 = vmatprep.subr.bf16.mxu0 0
      %346 = vmatpush1.bf16.msra.mxu0 0
      %347 = vmatprep.subr.bf16.mxu0 0
      %348 = vmatpush1.bf16.msra.mxu0 0
      %349 = vmatprep.subr.bf16.mxu0 0
      %350 = vmatpush1.bf16.msra.mxu0 0
      %351 = vmatprep.mubr.bf16.mxu0 0
      %352 = vmatmul.mubr.bf16.gmra.mrb[0].mxu0 %v313
      %v353 = vpop.f32.mrb[0].mxu0
      %v354 = vadd.f32 0.0, %v353
      %v355 = vpop.f32.mrb[0].mxu0
      %v356 = vpop.f32.mrb[0].mxu0
      %v357 = vpop.f32.mrb[0].mxu0
      %358 = vdwg.mxu0
      %v359 = vadd.f32 %v308, %v354
      %360 = vst.msk [vmem:[#allocation4] sm:$0xff] %vm231, %v359
      %361 = vst.msk [vmem:[#allocation2] sm:$0xff] %vm300, %v282
      %v363 = vunpack.c.l.b16 %v224
      %v364 = vpack.c.b16 %v363, %v363
      %365 = vrot.lane.b32.xlu0 %v364, 120
      %v366 = vpop.permute.xlu0 %365
      %367 = vrot.lane.b32.xlu0 %v228, 88
      %v368 = vpop.permute.xlu0 %367
      %v370 = vsel %vm231, %v366, 0
      %v373 = vsel %vm231, %v368, 0
      %375 = vmatprep.subr.bf16.mxu0 0
      %376 = vmatpush1.bf16.xpose.msra.mxu0 %v373
      %377 = vmatprep.subr.bf16.mxu0 0
      %378 = vmatpush1.bf16.xpose.msra.mxu0 0
      %379 = vmatprep.subr.bf16.mxu0 0
      %380 = vmatpush1.bf16.xpose.msra.mxu0 0
      %381 = vmatprep.subr.bf16.mxu0 0
      %382 = vmatpush1.bf16.xpose.msra.mxu0 0
      %383 = vmatprep.subr.bf16.mxu0 0
      %384 = vmatpush1.bf16.xpose.msra.mxu0 0
      %385 = vmatprep.subr.bf16.mxu0 0
      %386 = vmatpush1.bf16.xpose.msra.mxu0 0
      %387 = vmatprep.subr.bf16.mxu0 0
      %388 = vmatpush1.bf16.xpose.msra.mxu0 0
      %389 = vmatprep.subr.bf16.mxu0 0
      %390 = vmatpush1.bf16.xpose.msra.mxu0 0
      %391 = vmatprep.subr.bf16.mxu0 0
      %392 = vmatpush1.bf16.xpose.msra.mxu0 0
      %393 = vmatprep.subr.bf16.mxu0 0
      %394 = vmatpush1.bf16.xpose.msra.mxu0 0
      %395 = vmatprep.subr.bf16.mxu0 0
      %396 = vmatpush1.bf16.xpose.msra.mxu0 0
      %397 = vmatprep.subr.bf16.mxu0 0
      %398 = vmatpush1.bf16.xpose.msra.mxu0 0
      %399 = vmatprep.subr.bf16.mxu0 0
      %400 = vmatpush1.bf16.xpose.msra.mxu0 0
      %401 = vmatprep.subr.bf16.mxu0 0
      %402 = vmatpush1.bf16.xpose.msra.mxu0 0
      %403 = vmatprep.subr.bf16.mxu0 0
      %404 = vmatpush1.bf16.xpose.msra.mxu0 0
      %405 = vmatprep.subr.bf16.mxu0 0
      %406 = vmatpush1.bf16.xpose.msra.mxu0 0
      %407 = vmatprep.mubr.bf16.mxu0 0
      %408 = vmatmul.mubr.bf16.gmra.mrb[0].mxu0 %v370
      %v409 = vpop.f32.mrb[0].mxu0
      %v410 = vadd.f32 0.0, %v409
      %v411 = vpop.f32.mrb[0].mxu0
      %v412 = vpop.f32.mrb[0].mxu0
      %v413 = vpop.f32.mrb[0].mxu0
      %414 = vdwg.mxu0
      %s415 = scalar_lea.vmem [#allocation2], 8
      %v416 = vld [vmem:[%s415] sm:$0xff]
      %v417 = vsel %vm231, %v410, -inf
      %418 = vmax.xlane.f32.xlu0 %v417
      %v419 = vpop.xlane.xlu0 %418
      %v420 = vmax.f32 %v416, %v419
      %v421 = vsub.f32 %v416, %v420
      %v422 = vmul.f32 %v421, 1.442695
      %v423 = vpow.pop %v422
      %425 = vset.pattern.permute.xlu0 0
      %426 = vperm.xlu0 %425, %v420
      %v427 = vpop.permute.xlu0 %426
      %v429 = vsub.f32 %v410, %v427
      %v430 = vmul.f32 %v429, 1.442695
      %v431 = vpow.pop %v430
      %s432 = scalar_lea.vmem [#allocation3], 8
      %v433 = vld [vmem:[%s432] sm:$0xff]
      %v434 = vmul.f32 %v423, %v433
      %v435 = vsel %vm231, %v431, 0.0
      %436 = vadd.xlane.f32.xlu0 %v435
      %v437 = vpop.xlane.xlu0 %436
      %v438 = vadd.f32 %v434, %v437
      %439 = vst.msk [vmem:[%s432] sm:$0xff] %vm300, %v438
      %s440 = scalar_lea.vmem [#allocation4], 8
      %v441 = vld [vmem:[%s440] sm:$0xff]
      %443 = vset.pattern.permute.xlu0 0
      %444 = vperm.xlu0 %443, %v423
      %v445 = vpop.permute.xlu0 %444
      %v447 = vmul.f32 %v445, %v441
      %v448 = vpack.c.bf16 %v431, %v431
      %449 = vrot.lane.b32.xlu0 %v228, 56
      %v450 = vpop.permute.xlu0 %449
      %v452 = vsel %vm231, %v448, 0
      %v455 = vsel %vm315, %v450, 0
      %457 = vmatprep.subr.bf16.mxu0 0
      %458 = vmatpush1.bf16.msra.mxu0 %v455
      %459 = vmatprep.subr.bf16.mxu0 0
      %460 = vmatpush1.bf16.msra.mxu0 0
      %461 = vmatprep.subr.bf16.mxu0 0
      %462 = vmatpush1.bf16.msra.mxu0 0
      %463 = vmatprep.subr.bf16.mxu0 0
      %464 = vmatpush1.bf16.msra.mxu0 0
      %465 = vmatprep.subr.bf16.mxu0 0
      %466 = vmatpush1.bf16.msra.mxu0 0
      %467 = vmatprep.subr.bf16.mxu0 0
      %468 = vmatpush1.bf16.msra.mxu0 0
      %469 = vmatprep.subr.bf16.mxu0 0
      %470 = vmatpush1.bf16.msra.mxu0 0
      %471 = vmatprep.subr.bf16.mxu0 0
      %472 = vmatpush1.bf16.msra.mxu0 0
      %473 = vmatprep.subr.bf16.mxu0 0
      %474 = vmatpush1.bf16.msra.mxu0 0
      %475 = vmatprep.subr.bf16.mxu0 0
      %476 = vmatpush1.bf16.msra.mxu0 0
      %477 = vmatprep.subr.bf16.mxu0 0
      %478 = vmatpush1.bf16.msra.mxu0 0
      %479 = vmatprep.subr.bf16.mxu0 0
      %480 = vmatpush1.bf16.msra.mxu0 0
      %481 = vmatprep.subr.bf16.mxu0 0
      %482 = vmatpush1.bf16.msra.mxu0 0
      %483 = vmatprep.subr.bf16.mxu0 0
      %484 = vmatpush1.bf16.msra.mxu0 0
      %485 = vmatprep.subr.bf16.mxu0 0
      %486 = vmatpush1.bf16.msra.mxu0 0
      %487 = vmatprep.subr.bf16.mxu0 0
      %488 = vmatpush1.bf16.msra.mxu0 0
      %489 = vmatprep.mubr.bf16.mxu0 0
      %490 = vmatmul.mubr.bf16.gmra.mrb[0].mxu0 %v452
      %v491 = vpop.f32.mrb[0].mxu0
      %v492 = vadd.f32 0.0, %v491
      %v493 = vpop.f32.mrb[0].mxu0
      %v494 = vpop.f32.mrb[0].mxu0
      %v495 = vpop.f32.mrb[0].mxu0
      %496 = vdwg.mxu0
      %v497 = vadd.f32 %v447, %v492
      %498 = vst.msk [vmem:[%s440] sm:$0xff] %vm231, %v497
      %499 = vst.msk [vmem:[%s415] sm:$0xff] %vm300, %v420
      %500 = vrot.lane.b32.xlu0 %v364, 112
      %v501 = vpop.permute.xlu0 %500
      %502 = vrot.lane.b32.xlu0 %v228, 80
      %v503 = vpop.permute.xlu0 %502
      %v505 = vsel %vm231, %v501, 0
      %v508 = vsel %vm231, %v503, 0
      %510 = vmatprep.subr.bf16.mxu0 0
      %511 = vmatpush1.bf16.xpose.msra.mxu0 %v508
      %512 = vmatprep.subr.bf16.mxu0 0
      %513 = vmatpush1.bf16.xpose.msra.mxu0 0
      %514 = vmatprep.subr.bf16.mxu0 0
      %515 = vmatpush1.bf16.xpose.msra.mxu0 0
      %516 = vmatprep.subr.bf16.mxu0 0
      %517 = vmatpush1.bf16.xpose.msra.mxu0 0
      %518 = vmatprep.subr.bf16.mxu0 0
      %519 = vmatpush1.bf16.xpose.msra.mxu0 0
      %520 = vmatprep.subr.bf16.mxu0 0
      %521 = vmatpush1.bf16.xpose.msra.mxu0 0
      %522 = vmatprep.subr.bf16.mxu0 0
      %523 = vmatpush1.bf16.xpose.msra.mxu0 0
      %524 = vmatprep.subr.bf16.mxu0 0
      %525 = vmatpush1.bf16.xpose.msra.mxu0 0
      %526 = vmatprep.subr.bf16.mxu0 0
      %527 = vmatpush1.bf16.xpose.msra.mxu0 0
      %528 = vmatprep.subr.bf16.mxu0 0
      %529 = vmatpush1.bf16.xpose.msra.mxu0 0
      %530 = vmatprep.subr.bf16.mxu0 0
      %531 = vmatpush1.bf16.xpose.msra.mxu0 0
      %532 = vmatprep.subr.bf16.mxu0 0
      %533 = vmatpush1.bf16.xpose.msra.mxu0 0
      %534 = vmatprep.subr.bf16.mxu0 0
      %535 = vmatpush1.bf16.xpose.msra.mxu0 0
      %536 = vmatprep.subr.bf16.mxu0 0
      %537 = vmatpush1.bf16.xpose.msra.mxu0 0
      %538 = vmatprep.subr.bf16.mxu0 0
      %539 = vmatpush1.bf16.xpose.msra.mxu0 0
      %540 = vmatprep.subr.bf16.mxu0 0
      %541 = vmatpush1.bf16.xpose.msra.mxu0 0
      %542 = vmatprep.mubr.bf16.mxu0 0
      %543 = vmatmul.mubr.bf16.gmra.mrb[0].mxu0 %v505
      %v544 = vpop.f32.mrb[0].mxu0
      %v545 = vadd.f32 0.0, %v544
      %v546 = vpop.f32.mrb[0].mxu0
      %v547 = vpop.f32.mrb[0].mxu0
      %v548 = vpop.f32.mrb[0].mxu0
      %549 = vdwg.mxu0
      %s550 = scalar_lea.vmem [#allocation2], 16
      %v551 = vld [vmem:[%s550] sm:$0xff]
      %v552 = vsel %vm231, %v545, -inf
      %553 = vmax.xlane.f32.xlu0 %v552
      %v554 = vpop.xlane.xlu0 %553
      %v555 = vmax.f32 %v551, %v554
      %v556 = vsub.f32 %v551, %v555
      %v557 = vmul.f32 %v556, 1.442695
      %v558 = vpow.pop %v557
      %560 = vset.pattern.permute.xlu0 0
      %561 = vperm.xlu0 %560, %v555
      %v562 = vpop.permute.xlu0 %561
      %v564 = vsub.f32 %v545, %v562
      %v565 = vmul.f32 %v564, 1.442695
      %v566 = vpow.pop %v565
      %s567 = scalar_lea.vmem [#allocation3], 16
      %v568 = vld [vmem:[%s567] sm:$0xff]
      %v569 = vmul.f32 %v558, %v568
      %v570 = vsel %vm231, %v566, 0.0
      %571 = vadd.xlane.f32.xlu0 %v570
      %v572 = vpop.xlane.xlu0 %571
      %v573 = vadd.f32 %v569, %v572
      %574 = vst.msk [vmem:[%s567] sm:$0xff] %vm300, %v573
      %s575 = scalar_lea.vmem [#allocation4], 16
      %v576 = vld [vmem:[%s575] sm:$0xff]
      %578 = vset.pattern.permute.xlu0 0
      %579 = vperm.xlu0 %578, %v558
      %v580 = vpop.permute.xlu0 %579
      %v582 = vmul.f32 %v580, %v576
      %v583 = vpack.c.bf16 %v566, %v566
      %584 = vrot.lane.b32.xlu0 %v228, 48
      %v585 = vpop.permute.xlu0 %584
      %v587 = vsel %vm231, %v583, 0
      %v590 = vsel %vm315, %v585, 0
      %592 = vmatprep.subr.bf16.mxu0 0
      %593 = vmatpush1.bf16.msra.mxu0 %v590
      %594 = vmatprep.subr.bf16.mxu0 0
      %595 = vmatpush1.bf16.msra.mxu0 0
      %596 = vmatprep.subr.bf16.mxu0 0
      %597 = vmatpush1.bf16.msra.mxu0 0
      %598 = vmatprep.subr.bf16.mxu0 0
      %599 = vmatpush1.bf16.msra.mxu0 0
      %600 = vmatprep.subr.bf16.mxu0 0
      %601 = vmatpush1.bf16.msra.mxu0 0
      %602 = vmatprep.subr.bf16.mxu0 0
      %603 = vmatpush1.bf16.msra.mxu0 0
      %604 = vmatprep.subr.bf16.mxu0 0
      %605 = vmatpush1.bf16.msra.mxu0 0
      %606 = vmatprep.subr.bf16.mxu0 0
      %607 = vmatpush1.bf16.msra.mxu0 0
      %608 = vmatprep.subr.bf16.mxu0 0
      %609 = vmatpush1.bf16.msra.mxu0 0
      %610 = vmatprep.subr.bf16.mxu0 0
      %611 = vmatpush1.bf16.msra.mxu0 0
      %612 = vmatprep.subr.bf16.mxu0 0
      %613 = vmatpush1.bf16.msra.mxu0 0
      %614 = vmatprep.subr.bf16.mxu0 0
      %615 = vmatpush1.bf16.msra.mxu0 0
      %616 = vmatprep.subr.bf16.mxu0 0
      %617 = vmatpush1.bf16.msra.mxu0 0
      %618 = vmatprep.subr.bf16.mxu0 0
      %619 = vmatpush1.bf16.msra.mxu0 0
      %620 = vmatprep.subr.bf16.mxu0 0
      %621 = vmatpush1.bf16.msra.mxu0 0
      %622 = vmatprep.subr.bf16.mxu0 0
      %623 = vmatpush1.bf16.msra.mxu0 0
      %624 = vmatprep.mubr.bf16.mxu0 0
      %625 = vmatmul.mubr.bf16.gmra.mrb[0].mxu0 %v587
      %v626 = vpop.f32.mrb[0].mxu0
      %v627 = vadd.f32 0.0, %v626
      %v628 = vpop.f32.mrb[0].mxu0
      %v629 = vpop.f32.mrb[0].mxu0
      %v630 = vpop.f32.mrb[0].mxu0
      %631 = vdwg.mxu0
      %v632 = vadd.f32 %v582, %v627
      %633 = vst.msk [vmem:[%s575] sm:$0xff] %vm231, %v632
      %634 = vst.msk [vmem:[%s550] sm:$0xff] %vm300, %v555
      %635 = vrot.lane.b32.xlu0 %v364, 104
      %v636 = vpop.permute.xlu0 %635
      %637 = vrot.lane.b32.xlu0 %v228, 72
      %v638 = vpop.permute.xlu0 %637
      %v640 = vsel %vm231, %v636, 0
      %v643 = vsel %vm231, %v638, 0
      %645 = vmatprep.subr.bf16.mxu0 0
      %646 = vmatpush1.bf16.xpose.msra.mxu0 %v643
      %647 = vmatprep.subr.bf16.mxu0 0
      %648 = vmatpush1.bf16.xpose.msra.mxu0 0
      %649 = vmatprep.subr.bf16.mxu0 0
      %650 = vmatpush1.bf16.xpose.msra.mxu0 0
      %651 = vmatprep.subr.bf16.mxu0 0
      %652 = vmatpush1.bf16.xpose.msra.mxu0 0
      %653 = vmatprep.subr.bf16.mxu0 0
      %654 = vmatpush1.bf16.xpose.msra.mxu0 0
      %655 = vmatprep.subr.bf16.mxu0 0
      %656 = vmatpush1.bf16.xpose.msra.mxu0 0
      %657 = vmatprep.subr.bf16.mxu0 0
      %658 = vmatpush1.bf16.xpose.msra.mxu0 0
      %659 = vmatprep.subr.bf16.mxu0 0
      %660 = vmatpush1.bf16.xpose.msra.mxu0 0
      %661 = vmatprep.subr.bf16.mxu0 0
      %662 = vmatpush1.bf16.xpose.msra.mxu0 0
      %663 = vmatprep.subr.bf16.mxu0 0
      %664 = vmatpush1.bf16.xpose.msra.mxu0 0
      %665 = vmatprep.subr.bf16.mxu0 0
      %666 = vmatpush1.bf16.xpose.msra.mxu0 0
      %667 = vmatprep.subr.bf16.mxu0 0
      %668 = vmatpush1.bf16.xpose.msra.mxu0 0
      %669 = vmatprep.subr.bf16.mxu0 0
      %670 = vmatpush1.bf16.xpose.msra.mxu0 0
      %671 = vmatprep.subr.bf16.mxu0 0
      %672 = vmatpush1.bf16.xpose.msra.mxu0 0
      %673 = vmatprep.subr.bf16.mxu0 0
      %674 = vmatpush1.bf16.xpose.msra.mxu0 0
      %675 = vmatprep.subr.bf16.mxu0 0
      %676 = vmatpush1.bf16.xpose.msra.mxu0 0
      %677 = vmatprep.mubr.bf16.mxu0 0
      %678 = vmatmul.mubr.bf16.gmra.mrb[0].mxu0 %v640
      %v679 = vpop.f32.mrb[0].mxu0
      %v680 = vadd.f32 0.0, %v679
      %v681 = vpop.f32.mrb[0].mxu0
      %v682 = vpop.f32.mrb[0].mxu0
      %v683 = vpop.f32.mrb[0].mxu0
      %684 = vdwg.mxu0
      %s685 = scalar_lea.vmem [#allocation2], 24
      %v686 = vld [vmem:[%s685] sm:$0xff]
      %v687 = vsel %vm231, %v680, -inf
      %688 = vmax.xlane.f32.xlu0 %v687
      %v689 = vpop.xlane.xlu0 %688
      %v690 = vmax.f32 %v686, %v689
      %v691 = vsub.f32 %v686, %v690
      %v692 = vmul.f32 %v691, 1.442695
      %v693 = vpow.pop %v692
      %695 = vset.pattern.permute.xlu0 0
      %696 = vperm.xlu0 %695, %v690
      %v697 = vpop.permute.xlu0 %696
      %v699 = vsub.f32 %v680, %v697
      %v700 = vmul.f32 %v699, 1.442695
      %v701 = vpow.pop %v700
      %s702 = scalar_lea.vmem [#allocation3], 24
      %v703 = vld [vmem:[%s702] sm:$0xff]
      %v704 = vmul.f32 %v693, %v703
      %v705 = vsel %vm231, %v701, 0.0
      %706 = vadd.xlane.f32.xlu0 %v705
      %v707 = vpop.xlane.xlu0 %706
      %v708 = vadd.f32 %v704, %v707
      %709 = vst.msk [vmem:[%s702] sm:$0xff] %vm300, %v708
      %s710 = scalar_lea.vmem [#allocation4], 24
      %v711 = vld [vmem:[%s710] sm:$0xff]
      %713 = vset.pattern.permute.xlu0 0
      %714 = vperm.xlu0 %713, %v693
      %v715 = vpop.permute.xlu0 %714
      %v717 = vmul.f32 %v715, %v711
      %v718 = vpack.c.bf16 %v701, %v701
      %719 = vrot.lane.b32.xlu0 %v228, 40
      %v720 = vpop.permute.xlu0 %719
      %v722 = vsel %vm231, %v718, 0
      %v725 = vsel %vm315, %v720, 0
      %727 = vmatprep.subr.bf16.mxu0 0
      %728 = vmatpush1.bf16.msra.mxu0 %v725
      %729 = vmatprep.subr.bf16.mxu0 0
      %730 = vmatpush1.bf16.msra.mxu0 0
      %731 = vmatprep.subr.bf16.mxu0 0
      %732 = vmatpush1.bf16.msra.mxu0 0
      %733 = vmatprep.subr.bf16.mxu0 0
      %734 = vmatpush1.bf16.msra.mxu0 0
      %735 = vmatprep.subr.bf16.mxu0 0
      %736 = vmatpush1.bf16.msra.mxu0 0
      %737 = vmatprep.subr.bf16.mxu0 0
      %738 = vmatpush1.bf16.msra.mxu0 0
      %739 = vmatprep.subr.bf16.mxu0 0
      %740 = vmatpush1.bf16.msra.mxu0 0
      %741 = vmatprep.subr.bf16.mxu0 0
      %742 = vmatpush1.bf16.msra.mxu0 0
      %743 = vmatprep.subr.bf16.mxu0 0
      %744 = vmatpush1.bf16.msra.mxu0 0
      %745 = vmatprep.subr.bf16.mxu0 0
      %746 = vmatpush1.bf16.msra.mxu0 0
      %747 = vmatprep.subr.bf16.mxu0 0
      %748 = vmatpush1.bf16.msra.mxu0 0
      %749 = vmatprep.subr.bf16.mxu0 0
      %750 = vmatpush1.bf16.msra.mxu0 0
      %751 = vmatprep.subr.bf16.mxu0 0
      %752 = vmatpush1.bf16.msra.mxu0 0
      %753 = vmatprep.subr.bf16.mxu0 0
      %754 = vmatpush1.bf16.msra.mxu0 0
      %755 = vmatprep.subr.bf16.mxu0 0
      %756 = vmatpush1.bf16.msra.mxu0 0
      %757 = vmatprep.subr.bf16.mxu0 0
      %758 = vmatpush1.bf16.msra.mxu0 0
      %759 = vmatprep.mubr.bf16.mxu0 0
      %760 = vmatmul.mubr.bf16.gmra.mrb[0].mxu0 %v722
      %v761 = vpop.f32.mrb[0].mxu0
      %v762 = vadd.f32 0.0, %v761
      %v763 = vpop.f32.mrb[0].mxu0
      %v764 = vpop.f32.mrb[0].mxu0
      %v765 = vpop.f32.mrb[0].mxu0
      %766 = vdwg.mxu0
      %v767 = vadd.f32 %v717, %v762
      %768 = vst.msk [vmem:[%s710] sm:$0xff] %vm231, %v767
      %769 = vst.msk [vmem:[%s685] sm:$0xff] %vm300, %v690
      // Predicated region
      $region33: #{conformer_encoder.29} parent=27 // pred_check
        %p770 = pneg %p206
      $region34: #{conformer_encoder.29} parent=27 // pred_check_branch
        %772 = sbr.rel (%p770) target = $region36
      $region35: #{conformer_encoder.29} parent=27 // pred_region
        %v773 = vld [vmem:[#allocation3] sm:$0xff]
        %v774 = vrcp.pop %v773
        %v775 = vld [vmem:[#allocation4] sm:$0xff]
        %777 = vset.pattern.permute.xlu0 0
        %778 = vperm.xlu0 %777, %v774
        %v779 = vpop.permute.xlu0 %778
        %v781 = vmul.f32 %v775, %v779
        %v782 = vpack.c.bf16 %v781, %v781
        %v783 = vld [vmem:[%s432] sm:$0xff]
        %v784 = vrcp.pop %v783
        %v785 = vld [vmem:[%s440] sm:$0xff]
        %787 = vset.pattern.permute.xlu0 0
        %788 = vperm.xlu0 %787, %v784
        %v789 = vpop.permute.xlu0 %788
        %v791 = vmul.f32 %v785, %v789
        %v792 = vpack.c.bf16 %v791, %v791
        %v793 = vld [vmem:[%s567] sm:$0xff]
        %v794 = vrcp.pop %v793
        %v795 = vld [vmem:[%s575] sm:$0xff]
        %797 = vset.pattern.permute.xlu0 0
        %798 = vperm.xlu0 %797, %v794
        %v799 = vpop.permute.xlu0 %798
        %v801 = vmul.f32 %v795, %v799
        %v802 = vpack.c.bf16 %v801, %v801
        %v803 = vld [vmem:[%s702] sm:$0xff]
        %v804 = vrcp.pop %v803
        %v805 = vld [vmem:[%s710] sm:$0xff]
        %807 = vset.pattern.permute.xlu0 0
        %808 = vperm.xlu0 %807, %v804
        %v809 = vpop.permute.xlu0 %808
        %v811 = vmul.f32 %v805, %v809
        %v812 = vpack.c.bf16 %v811, %v811
        %814 = vrot.lane.b32.xlu0 %v792, 8
        %v815 = vpop.permute.xlu0 %814
        %817 = vrot.lane.b32.xlu0 %v802, 16
        %v818 = vpop.permute.xlu0 %817
        %820 = vrot.lane.b32.xlu0 %v812, 24
        %v821 = vpop.permute.xlu0 %820
        %v824 = vsel %vm231, %v782, %v815
        %vm825 = vcmask 130048
        %v827 = vsel %vm825, %v824, %v818
        %vm828 = vcmask 195584
        %v830 = vsel %vm828, %v827, %v821
        %vm832 = vcmask 257024
        %833 = vst.msk [vmem:[%s204] sm:$0xf] %vm832, %v830
      $region36: #{conformer_encoder.29} parent=27 // pred_fallthru
        _
      %p834 = scmp.lt.s32.totalorder %s18, 1
      %s835 = scalar_select %p834, %s18, 1
      %p836 = scmp.lt.s32.totalorder %s19, 0
      %s837 = scalar_select %p836, %s19, 0
      %s838 = sadd.s32 %s837, %s835
      %s839 = smul.addr %s838, 4
      %s840 = scalar_lea.vmem %s2, %s839
      // Predicated region
      $region37: #{conformer_encoder.29} parent=27 // pred_check
        %p841 = pneg %p108
      $region38: #{conformer_encoder.29} parent=27 // pred_check_branch
        %843 = sbr.rel (%p841) target = $region40
      $region39: #{conformer_encoder.29} parent=27 // pred_region
        _
      $region40: #{conformer_encoder.29} parent=27 // pred_fallthru
        _
    $region28: #{conformer_encoder.29} parent=5 // pred_fallthru
      _
    %p844 = scmp.le.s32.totalorder 2, %s8
    // Predicated region
    $region41: #{conformer_encoder.29} parent=5 // pred_check
      %p845 = pneg %p844
    $region42: #{conformer_encoder.29} parent=5 // pred_check_branch
      %847 = sbr.rel (%p845) target = $region44
    $region43: #{conformer_encoder.29} parent=5 // pred_region
      %s848 = ssub.s32 %s8, 2
      // Predicated region
      $region45: #{conformer_encoder.29} parent=43 // pred_check
        %p849 = pneg %p114
      $region46: #{conformer_encoder.29} parent=43 // pred_check_branch
        %851 = sbr.rel (%p849) target = $region48
      $region47: #{conformer_encoder.29} parent=43 // pred_region
        %p852 = scmp.lt.s32.totalorder %s21, 1
        %s853 = scalar_select %p852, %s21, 1
        %p854 = scmp.lt.s32.totalorder %s22, 0
        %s855 = scalar_select %p854, %s22, 0
        %s856 = sadd.s32 %s855, %s853
        %s857 = smul.addr %s856, 4
        %s858 = scalar_lea.vmem %s2, %s857
      $region48: #{conformer_encoder.29} parent=43 // pred_fallthru
        _
    $region44: #{conformer_encoder.29} parent=5 // pred_fallthru
      _
  $region6: #{conformer_encoder.29} parent=0 // loop_footer
    %s12 = sadd.s32 1, %s8
  $region7: #{conformer_encoder.29} parent=0 // loop_footer_branch
    %7 = sbr.rel target = $region3
  $region8: #{conformer_encoder.29} parent=0 // loop_exit
    _

// kernel: conformer_encoder.32
$region0: #{conformer_encoder.32}
  #allocation0 [shape = 'u32[]', space=smem, size = 0x4, offset = 0x4, fixed_abs, tag = 'smem constant byte address 0x4 - core index']
  #allocation1 [shape = 'u32[144,128]{1,0:T(1,128)}', space=vmem, size = 0x12000, scoped, tag = 'internal scratch']
  %s0 = inlined_call_operand.vmem [shape: bf16[2,14,32], index: 0, kind: input, shape index: {}]
  %s1 = inlined_call_operand.vmem [shape: bf16[7,32], index: 1, kind: input, shape index: {}]
  %s2 = inlined_call_operand.vmem [shape: f32[1,32], index: 2, kind: input, shape index: {}]
  %s3 = inlined_call_operand.vmem [shape: bf16[2,8,32], index: 3, kind: output, shape index: {}]
  %s4 = sld [smem:[#allocation0]]
  $region45: #{conformer_encoder.32} parent=0
    _
  %s6 = ssub.s32 1, %s4
  %s7 = scalar_select 0, %s6, %s4
  loop: start=0, step=1, limit=4
  $region2: #{conformer_encoder.32} parent=0 // loop_pre_header
    _
  $region3: #{conformer_encoder.32} parent=0 // loop_header
    %s9 = sphi 0, %s13
    %p10 = scmp.ge.s32.totalorder %s9, 4
    %s19 = sphi 0, %s21
    %s22 = sphi 0, %s19
    %s23 = sphi 0, %s22
    %s39 = sphi 0, %s23
    %s43 = sphi 0, %s43
    %s45 = sphi 0, %s43
    %s46 = sphi 0, %s45
    %s60 = sphi 0, %s46
    %s64 = sphi 0, %s64
    %s66 = sphi 0, %s64
    %s67 = sphi 0, %s66
    %s81 = sphi 0, %s67
    %s87 = sphi 0, %s89
    %s90 = sphi 0, %s87
    %s91 = sphi 0, %s90
    %s107 = sphi 0, %s91
  $region4: #{conformer_encoder.32} parent=0 // loop_header_branch
    %12 = sbr.rel (%p10) target = $region8
  $region5: #{conformer_encoder.32} parent=0 // loop_body
    %s14 = ssub.s32 %s9, 1
    %s15 = ssub.s32 %s9, 2
    %s16 = sadd.s32 %s9, 1
    %s17 = ssub.s32 %s9, %s16
    %p18 = scmp.eq.s32.totalorder %s17, 0
    %s20 = sadd.s32 %s19, 1
    %s21 = scalar_select %p18, %s19, %s20
    %p24 = pneg %p18
    %p25 = scmp.eq.s32.totalorder %s9, 1
    %p26 = por %p24, %p25
    %p27 = scmp.ne.s32.totalorder %s19, %s22
    %p28 = scmp.eq.s32.totalorder %s9, 0
    %p29 = por %p27, %p28
    %p30 = scmp.ne.s32.totalorder %s19, %s22
    %p31 = scmp.eq.s32.totalorder %s14, 1
    %p32 = por %p30, %p31
    %p33 = scmp.ne.s32.totalorder %s22, %s23
    %p34 = scmp.eq.s32.totalorder %s14, 0
    %p35 = por %p33, %p34
    %p36 = scmp.ne.s32.totalorder %s22, %s23
    %p37 = scmp.eq.s32.totalorder %s15, 1
    %p38 = por %p36, %p37
    %p40 = scmp.ne.s32.totalorder %s23, %s39
    %p41 = scmp.eq.s32.totalorder %s15, 0
    %p42 = por %p40, %p41
    %s44 = sadd.s32 %s43, 1
    %p47 = scmp.eq.s32.totalorder %s9, 1
    %p48 = scmp.ne.s32.totalorder %s43, %s45
    %p49 = scmp.eq.s32.totalorder %s9, 0
    %p50 = por %p48, %p49
    %p51 = scmp.ne.s32.totalorder %s43, %s45
    %p52 = scmp.eq.s32.totalorder %s14, 1
    %p53 = por %p51, %p52
    %p54 = scmp.ne.s32.totalorder %s45, %s46
    %p55 = scmp.eq.s32.totalorder %s14, 0
    %p56 = por %p54, %p55
    %p57 = scmp.ne.s32.totalorder %s45, %s46
    %p58 = scmp.eq.s32.totalorder %s15, 1
    %p59 = por %p57, %p58
    %p61 = scmp.ne.s32.totalorder %s46, %s60
    %p62 = scmp.eq.s32.totalorder %s15, 0
    %p63 = por %p61, %p62
    %s65 = sadd.s32 %s64, 1
    %p68 = scmp.eq.s32.totalorder %s9, 1
    %p69 = scmp.ne.s32.totalorder %s64, %s66
    %p70 = scmp.eq.s32.totalorder %s9, 0
    %p71 = por %p69, %p70
    %p72 = scmp.ne.s32.totalorder %s64, %s66
    %p73 = scmp.eq.s32.totalorder %s14, 1
    %p74 = por %p72, %p73
    %p75 = scmp.ne.s32.totalorder %s66, %s67
    %p76 = scmp.eq.s32.totalorder %s14, 0
    %p77 = por %p75, %p76
    %p78 = scmp.ne.s32.totalorder %s66, %s67
    %p79 = scmp.eq.s32.totalorder %s15, 1
    %p80 = por %p78, %p79
    %p82 = scmp.ne.s32.totalorder %s67, %s81
    %p83 = scmp.eq.s32.totalorder %s15, 0
    %p84 = por %p82, %p83
    %s85 = ssub.s32 %s9, %s16
    %p86 = scmp.eq.s32.totalorder %s85, 0
    %s88 = sadd.s32 %s87, 1
    %s89 = scalar_select %p86, %s87, %s88
    %p92 = pneg %p86
    %p93 = scmp.eq.s32.totalorder %s9, 1
    %p94 = por %p92, %p93
    %p95 = scmp.ne.s32.totalorder %s87, %s90
    %p96 = scmp.eq.s32.totalorder %s9, 0
    %p97 = por %p95, %p96
    %p98 = scmp.ne.s32.totalorder %s87, %s90
    %p99 = scmp.eq.s32.totalorder %s14, 1
    %p100 = por %p98, %p99
    %p101 = scmp.ne.s32.totalorder %s90, %s91
    %p102 = scmp.eq.s32.totalorder %s14, 0
    %p103 = por %p101, %p102
    %p104 = scmp.ne.s32.totalorder %s90, %s91
    %p105 = scmp.eq.s32.totalorder %s15, 1
    %p106 = por %p104, %p105
    %p108 = scmp.ne.s32.totalorder %s91, %s107
    %p109 = scmp.eq.s32.totalorder %s15, 0
    %p110 = por %p108, %p109
    %p111 = scmp.le.s32.totalorder 1, %s9
    %p112 = scmp.lt.s32.totalorder %s9, 3
    %p113 = pnand %p111, %p112
    %p114 = pneg %p113
    // Predicated region
    $region9: #{conformer_encoder.32} parent=5 // pred_check
      _
    $region10: #{conformer_encoder.32} parent=5 // pred_check_branch
      %116 = sbr.rel (%p113) target = $region12
    $region11: #{conformer_encoder.32} parent=5 // pred_region
      %s117 = ssub.s32 %s9, 1
      // Predicated region
      $region13: #{conformer_encoder.32} parent=11 // pred_check
        %p118 = pneg %p56
      $region14: #{conformer_encoder.32} parent=11 // pred_check_branch
        %120 = sbr.rel (%p118) target = $region16
      $region15: #{conformer_encoder.32} parent=11 // pred_region
        _
      $region16: #{conformer_encoder.32} parent=11 // pred_fallthru
        _
      // Predicated region
      $region17: #{conformer_encoder.32} parent=11 // pred_check
        %p121 = pneg %p77
      $region18: #{conformer_encoder.32} parent=11 // pred_check_branch
        %123 = sbr.rel (%p121) target = $region20
      $region19: #{conformer_encoder.32} parent=11 // pred_region
        _
      $region20: #{conformer_encoder.32} parent=11 // pred_fallthru
        _
    $region12: #{conformer_encoder.32} parent=5 // pred_fallthru
      _
    %p124 = scmp.lt.s32.totalorder %s9, 2
    // Predicated region
    $region21: #{conformer_encoder.32} parent=5 // pred_check
      %p125 = pneg %p124
    $region22: #{conformer_encoder.32} parent=5 // pred_check_branch
      %127 = sbr.rel (%p125) target = $region24
    $region23: #{conformer_encoder.32} parent=5 // pred_region
      // Predicated region
      $region25: #{conformer_encoder.32} parent=23 // pred_check
        %p128 = pneg %p29
      $region26: #{conformer_encoder.32} parent=23 // pred_check_branch
        %130 = sbr.rel (%p128) target = $region28
      $region27: #{conformer_encoder.32} parent=23 // pred_region
        %p131 = scmp.lt.s32.totalorder %s9, 1
        %s132 = scalar_select %p131, %s9, 1
        %s133 = smul.addr %s132, 2
        %s134 = smul.addr %s133, 4
        %s135 = scalar_lea.vmem %s0, %s134
      $region28: #{conformer_encoder.32} parent=23 // pred_fallthru
        _
    $region24: #{conformer_encoder.32} parent=5 // pred_fallthru
      _
    %p136 = scmp.le.s32.totalorder 1, %s9
    %p137 = scmp.lt.s32.totalorder %s9, 3
    %p138 = pnand %p136, %p137
    %p139 = pneg %p138
    // Predicated region
    $region29: #{conformer_encoder.32} parent=5 // pred_check
      _
    $region30: #{conformer_encoder.32} parent=5 // pred_check_branch
      %141 = sbr.rel (%p138) target = $region32
    $region31: #{conformer_encoder.32} parent=5 // pred_region
      %s142 = ssub.s32 %s9, 1
      %p143 = scmp.lt.s32.totalorder %s14, 1
      %s144 = scalar_select %p143, %s14, 1
      %s145 = smul.addr %s144, 2
      %s146 = smul.addr %s145, 4
      %s147 = scalar_lea.vmem %s0, %s146
      %p148 = pneg %p35
      %p149 = pneg %p32
      %p150 = pneg %p56
      %p151 = pneg %p53
      %p152 = pneg %p77
      %p153 = pneg %p74
      %p154 = pneg %p103
      %p155 = pneg %p100
      %p156 = scmp.lt.s32.totalorder %s14, 1
      %s157 = scalar_select %p156, %s14, 1
      %s158 = smul.addr %s157, 4
      %s159 = scalar_lea.vmem %s3, %s158
      %p160 = scmp.lt.s32.totalorder %s14, 1
      %s161 = scalar_select %p160, %s14, 1
      %s162 = smul.addr %s161, 2
      %s163 = smul.addr %s162, 4
      %s164 = scalar_lea.vmem %s0, %s163
      %p165 = scmp.lt.s32.totalorder %s14, 1
      %s166 = scalar_select %p165, %s14, 1
      %s167 = smul.addr %s166, 4
      %s168 = scalar_lea.vmem %s3, %s167
      %v169 = vld [vmem:[%s164] sm:$0xf]
      %v170 = vld [vmem:[%s164 + $0x4] sm:$0x7]
      %v171 = vunpack.c.l.bf16 %v169
      %v172 = vunpack.c.l.bf16 %v170
      %v173 = vld [vmem:[%s1] sm:$0xf]
      %v174 = vunpack.c.l.bf16 %v173
      %v175 = vlaneseq
      %v176 = vshrl.u32 %v175, 7
      %v177 = vsub.s32 0, %v176
      %v178 = vrot.slane %v174, %v177
      %v179 = vmul.f32 %v171, %v178
      %v180 = vlaneseq
      %v181 = vshrl.u32 %v180, 7
      %v182 = vsub.s32 1, %v181
      %v183 = vrot.slane %v174, %v182
      %v184 = vmul.f32 %v171, %v183
      %v185 = vmul.f32 %v172, %v183
      %vm188 = vcmask 1046528
      %v189 = vrot.slane %v184, 1
      %v190 = vrot.slane %v185, 1
      %v191 = vsel %vm188, %v189, %v190
      %v193 = vadd.f32 %v179, %v191
      %v194 = vlaneseq
      %v195 = vshrl.u32 %v194, 7
      %v196 = vsub.s32 2, %v195
      %v197 = vrot.slane %v174, %v196
      %v198 = vmul.f32 %v171, %v197
      %v199 = vmul.f32 %v172, %v197
      %vm202 = vcmask 1045504
      %v203 = vrot.slane %v198, 2
      %v204 = vrot.slane %v199, 2
      %v205 = vsel %vm202, %v203, %v204
      %v207 = vadd.f32 %v193, %v205
      %v208 = vlaneseq
      %v209 = vshrl.u32 %v208, 7
      %v210 = vsub.s32 3, %v209
      %v211 = vrot.slane %v174, %v210
      %v212 = vmul.f32 %v171, %v211
      %v213 = vmul.f32 %v172, %v211
      %vm216 = vcmask 1044480
      %v217 = vrot.slane %v212, 3
      %v218 = vrot.slane %v213, 3
      %v219 = vsel %vm216, %v217, %v218
      %v221 = vadd.f32 %v207, %v219
      %v222 = vlaneseq
      %v223 = vshrl.u32 %v222, 7
      %v224 = vsub.s32 4, %v223
      %v225 = vrot.slane %v174, %v224
      %v226 = vmul.f32 %v171, %v225
      %v227 = vmul.f32 %v172, %v225
      %vm230 = vcmask 1043456
      %v231 = vrot.slane %v226, 4
      %v232 = vrot.slane %v227, 4
      %v233 = vsel %vm230, %v231, %v232
      %v235 = vadd.f32 %v221, %v233
      %v236 = vlaneseq
      %v237 = vshrl.u32 %v236, 7
      %v238 = vsub.s32 5, %v237
      %v239 = vrot.slane %v174, %v238
      %v240 = vmul.f32 %v171, %v239
      %v241 = vmul.f32 %v172, %v239
      %vm244 = vcmask 1042432
      %v245 = vrot.slane %v240, 5
      %v246 = vrot.slane %v241, 5
      %v247 = vsel %vm244, %v245, %v246
      %v249 = vadd.f32 %v235, %v247
      %v250 = vlaneseq
      %v251 = vshrl.u32 %v250, 7
      %v252 = vsub.s32 6, %v251
      %v253 = vrot.slane %v174, %v252
      %v254 = vmul.f32 %v171, %v253
      %v255 = vmul.f32 %v172, %v253
      %vm258 = vcmask 1041408
      %v259 = vrot.slane %v254, 6
      %v260 = vrot.slane %v255, 6
      %v261 = vsel %vm258, %v259, %v260
      %v263 = vadd.f32 %v249, %v261
      %v264 = vld [vmem:[%s2] sm:$0x1]
      %v266 = vlaneseq
      %v267 = vshrl.u32 %v266, 7
      %v268 = vsub.s32 0, %v267
      %v269 = vrot.slane %v264, %v268
      %v271 = vadd.f32 %v263, %v269
      %v272 = vmul.f32 %v271, 0.999995
      %v273 = vxor.u32 %v272, 2147483648
      %v274 = vmul.f32 %v273, 1.442695
      %v275 = vpow.pop %v274
      %v276 = vadd.f32 %v275, 1.0
      %v277 = vrcp.pop %v276
      %v278 = vmul.f32 1.0, %v277
      %v279 = vmul.f32 %v272, %v278
      %v280 = vpack.c.bf16 %v279, %v279
      %vm281 = vcmask 257024
      %282 = vst.msk [vmem:[%s168] sm:$0xf] %vm281, %v280
      %p283 = scmp.lt.s32.totalorder %s14, 1
      %s284 = scalar_select %p283, %s14, 1
      %s285 = smul.addr %s284, 4
      %s286 = scalar_lea.vmem %s3, %s285
      // Predicated region
      $region33: #{conformer_encoder.32} parent=31 // pred_check
        %p287 = pneg %p100
      $region34: #{conformer_encoder.32} parent=31 // pred_check_branch
        %289 = sbr.rel (%p287) target = $region36
      $region35: #{conformer_encoder.32} parent=31 // pred_region
        _
      $region36: #{conformer_encoder.32} parent=31 // pred_fallthru
        _
    $region32: #{conformer_encoder.32} parent=5 // pred_fallthru
      _
    %p290 = scmp.le.s32.totalorder 2, %s9
    // Predicated region
    $region37: #{conformer_encoder.32} parent=5 // pred_check
      %p291 = pneg %p290
    $region38: #{conformer_encoder.32} parent=5 // pred_check_branch
      %293 = sbr.rel (%p291) target = $region40
    $region39: #{conformer_encoder.32} parent=5 // pred_region
      %s294 = ssub.s32 %s9, 2
      // Predicated region
      $region41: #{conformer_encoder.32} parent=39 // pred_check
        %p295 = pneg %p106
      $region42: #{conformer_encoder.32} parent=39 // pred_check_branch
        %297 = sbr.rel (%p295) target = $region44
      $region43: #{conformer_encoder.32} parent=39 // pred_region
        %p298 = scmp.lt.s32.totalorder %s15, 1
        %s299 = scalar_select %p298, %s15, 1
        %s300 = smul.addr %s299, 4
        %s301 = scalar_lea.vmem %s3, %s300
      $region44: #{conformer_encoder.32} parent=39 // pred_fallthru
        _
    $region40: #{conformer_encoder.32} parent=5 // pred_fallthru
      _
  $region6: #{conformer_encoder.32} parent=0 // loop_footer
    %s13 = sadd.s32 1, %s9
  $region7: #{conformer_encoder.32} parent=0 // loop_footer_branch
    %8 = sbr.rel target = $region3
  $region8: #{conformer_encoder.32} parent=0 // loop_exit
    _

// kernel: conformer_encoder.36
$region0: #{conformer_encoder.36}
  #allocation0 [shape = 'u32[]', space=smem, size = 0x4, offset = 0x4, fixed_abs, tag = 'smem constant byte address 0x4 - core index']
  #allocation1 [shape = 'u32[144,128]{1,0:T(1,128)}', space=vmem, size = 0x12000, scoped, tag = 'internal scratch']
  %s0 = inlined_call_operand.vmem [shape: bf16[16,32], index: 0, kind: input, shape index: {}]
  %s1 = inlined_call_operand.vmem [shape: f32[1,32], index: 1, kind: input, shape index: {}]
  %s2 = inlined_call_operand.vmem [shape: f32[1,32], index: 2, kind: input, shape index: {}]
  %s3 = inlined_call_operand.vmem [shape: bf16[16,32], index: 3, kind: output, shape index: {}]
  %s4 = sld [smem:[#allocation0]]
  $region22: #{conformer_encoder.36} parent=0
    _
  %s6 = ssub.s32 1, %s4
  %s7 = scalar_select 0, %s6, %s4
  // Predicated region
  $region2: #{conformer_encoder.36} parent=0 // pred_check
    _
  $region3: #{conformer_encoder.36} parent=0 // pred_check_branch
    %9 = sbr.rel (0) target = $region5
  $region4: #{conformer_encoder.36} parent=0 // pred_region
    _
  $region5: #{conformer_encoder.36} parent=0 // pred_fallthru
    _
  // Predicated region
  $region6: #{conformer_encoder.36} parent=0 // pred_check
    _
  $region7: #{conformer_encoder.36} parent=0 // pred_check_branch
    %11 = sbr.rel (0) target = $region9
  $region8: #{conformer_encoder.36} parent=0 // pred_region
    _
  $region9: #{conformer_encoder.36} parent=0 // pred_fallthru
    _
  // Predicated region
  $region10: #{conformer_encoder.36} parent=0 // pred_check
    _
  $region11: #{conformer_encoder.36} parent=0 // pred_check_branch
    %13 = sbr.rel (0) target = $region13
  $region12: #{conformer_encoder.36} parent=0 // pred_region
    _
  $region13: #{conformer_encoder.36} parent=0 // pred_fallthru
    _
  %v14 = vld [vmem:[%s0] sm:$0xf]
  %v15 = vld [vmem:[%s0 + $0x4] sm:$0xf]
  %v16 = vunpack.c.l.bf16 %v14
  %v17 = vunpack.c.l.bf16 %v15
  %vm18 = vcmask 261120
  %v19 = vsel %vm18, %v16, 0.0
  %20 = vadd.xlane.f32.xlu0 %v19
  %v21 = vpop.xlane.xlu0 %20
  %v22 = vsel %vm18, %v17, 0.0
  %23 = vadd.xlane.f32.xlu0 %v22
  %v24 = vpop.xlane.xlu0 %23
  %v25 = vrcp.pop 32.0
  %v26 = vmul.f32 %v21, %v25
  %v27 = vmul.f32 %v24, %v25
  %v28 = vsub.f32 %v16, %v26
  %v29 = vsub.f32 %v17, %v27
  %v30 = vmul.f32 %v28, %v28
  %v31 = vmul.f32 %v29, %v29
  %v32 = vsel %vm18, %v30, 0.0
  %33 = vadd.xlane.f32.xlu0 %v32
  %v34 = vpop.xlane.xlu0 %33
  %v35 = vsel %vm18, %v31, 0.0
  %36 = vadd.xlane.f32.xlu0 %v35
  %v37 = vpop.xlane.xlu0 %36
  %v38 = vmul.f32 %v34, %v25
  %v39 = vmul.f32 %v37, %v25
  %v40 = vadd.f32 %v38, 1e-05
  %v41 = vadd.f32 %v39, 1e-05
  %v42 = vrsqrt.pop %v40
  %v43 = vrsqrt.pop %v41
  %v44 = vmul.f32 %v28, %v42
  %v45 = vmul.f32 %v29, %v43
  %v46 = vld [vmem:[%s1] sm:$0x1]
  %v48 = vlaneseq
  %v49 = vshrl.u32 %v48, 7
  %v50 = vsub.s32 0, %v49
  %v51 = vrot.slane %v46, %v50
  %v53 = vmul.f32 %v44, %v51
  %v54 = vmul.f32 %v45, %v51
  %v55 = vld [vmem:[%s2] sm:$0x1]
  %v57 = vlaneseq
  %v58 = vshrl.u32 %v57, 7
  %v59 = vsub.s32 0, %v58
  %v60 = vrot.slane %v55, %v59
  %v62 = vadd.f32 %v53, %v60
  %v63 = vadd.f32 %v54, %v60
  %v64 = vpack.c.bf16 %v63, %v62
  %v66 = vunpack.c.l.b16 %v64
  %v67 = vunpack.c.h.b16 %v64
  %v68 = vpack.c.b16 %v66, %v66
  %v69 = vpack.c.b16 %v67, %v67
  %vm72 = vcmask 257024
  %73 = vst.msk [vmem:[%s3] sm:$0xf] %vm72, %v68
  %74 = vst.msk [vmem:[%s3 + $0x4] sm:$0xf] %vm72, %v69
  // Predicated region
  $region14: #{conformer_encoder.36} parent=0 // pred_check
    _
  $region15: #{conformer_encoder.36} parent=0 // pred_check_branch
    %76 = sbr.rel (0) target = $region17
  $region16: #{conformer_encoder.36} parent=0 // pred_region
    _
  $region17: #{conformer_encoder.36} parent=0 // pred_fallthru
    _
  // Predicated region
  $region18: #{conformer_encoder.36} parent=0 // pred_check
    _
  $region19: #{conformer_encoder.36} parent=0 // pred_check_branch
    %78 = sbr.rel (0) target = $region21
  $region20: #{conformer_encoder.36} parent=0 // pred_region
    _
  $region21: #{conformer_encoder.36} parent=0 // pred_fallthru
    _

// kernel: conformer_encoder.31
$region0: #{conformer_encoder.31}
  #allocation0 [shape = 'u32[]', space=smem, size = 0x4, offset = 0x4, fixed_abs, tag = 'smem constant byte address 0x4 - core index']
  #allocation1 [shape = 'u32[144,128]{1,0:T(1,128)}', space=vmem, size = 0x12000, scoped, tag = 'internal scratch']
  %s0 = inlined_call_operand.vmem [shape: bf16[16,32], index: 0, kind: input, shape index: {}]
  %s1 = inlined_call_operand.vmem [shape: f32[1,32], index: 1, kind: input, shape index: {}]
  %s2 = inlined_call_operand.vmem [shape: f32[1,32], index: 2, kind: input, shape index: {}]
  %s3 = inlined_call_operand.vmem [shape: bf16[32,32], index: 3, kind: input, shape index: {}]
  %s4 = inlined_call_operand.vmem [shape: f32[1,32], index: 4, kind: input, shape index: {}]
  %s5 = inlined_call_operand.vmem [shape: bf16[32,32], index: 5, kind: input, shape index: {}]
  %s6 = inlined_call_operand.vmem [shape: f32[1,32], index: 6, kind: input, shape index: {}]
  %s7 = inlined_call_operand.vmem [shape: bf16[16,32], index: 7, kind: output, shape index: {}]
  %s8 = sld [smem:[#allocation0]]
  $region38: #{conformer_encoder.31} parent=0
    _
  %s10 = ssub.s32 1, %s8
  %s11 = scalar_select 0, %s10, %s8
  // Predicated region
  $region2: #{conformer_encoder.31} parent=0 // pred_check
    _
  $region3: #{conformer_encoder.31} parent=0 // pred_check_branch
    %13 = sbr.rel (0) target = $region5
  $region4: #{conformer_encoder.31} parent=0 // pred_region
    _
  $region5: #{conformer_encoder.31} parent=0 // pred_fallthru
    _
  // Predicated region
  $region6: #{conformer_encoder.31} parent=0 // pred_check
    _
  $region7: #{conformer_encoder.31} parent=0 // pred_check_branch
    %15 = sbr.rel (0) target = $region9
  $region8: #{conformer_encoder.31} parent=0 // pred_region
    _
  $region9: #{conformer_encoder.31} parent=0 // pred_fallthru
    _
  // Predicated region
  $region10: #{conformer_encoder.31} parent=0 // pred_check
    _
  $region11: #{conformer_encoder.31} parent=0 // pred_check_branch
    %17 = sbr.rel (0) target = $region13
  $region12: #{conformer_encoder.31} parent=0 // pred_region
    _
  $region13: #{conformer_encoder.31} parent=0 // pred_fallthru
    _
  // Predicated region
  $region14: #{conformer_encoder.31} parent=0 // pred_check
    _
  $region15: #{conformer_encoder.31} parent=0 // pred_check_branch
    %19 = sbr.rel (0) target = $region17
  $region16: #{conformer_encoder.31} parent=0 // pred_region
    _
  $region17: #{conformer_encoder.31} parent=0 // pred_fallthru
    _
  // Predicated region
  $region18: #{conformer_encoder.31} parent=0 // pred_check
    _
  $region19: #{conformer_encoder.31} parent=0 // pred_check_branch
    %21 = sbr.rel (0) target = $region21
  $region20: #{conformer_encoder.31} parent=0 // pred_region
    _
  $region21: #{conformer_encoder.31} parent=0 // pred_fallthru
    _
  // Predicated region
  $region22: #{conformer_encoder.31} parent=0 // pred_check
    _
  $region23: #{conformer_encoder.31} parent=0 // pred_check_branch
    %23 = sbr.rel (0) target = $region25
  $region24: #{conformer_encoder.31} parent=0 // pred_region
    _
  $region25: #{conformer_encoder.31} parent=0 // pred_fallthru
    _
  // Predicated region
  $region26: #{conformer_encoder.31} parent=0 // pred_check
    _
  $region27: #{conformer_encoder.31} parent=0 // pred_check_branch
    %25 = sbr.rel (0) target = $region29
  $region28: #{conformer_encoder.31} parent=0 // pred_region
    _
  $region29: #{conformer_encoder.31} parent=0 // pred_fallthru
    _
  %v27 = vld [vmem:[%s0] sm:$0xf]
  %v28 = vld [vmem:[%s0 + $0x4] sm:$0xf]
  %v29 = vunpack.c.l.bf16 %v27
  %v30 = vunpack.c.l.bf16 %v28
  %vm31 = vcmask 261120
  %v32 = vsel %vm31, %v29, 0.0
  %33 = vadd.xlane.f32.xlu0 %v32
  %v34 = vpop.xlane.xlu0 %33
  %v35 = vsel %vm31, %v30, 0.0
  %36 = vadd.xlane.f32.xlu0 %v35
  %v37 = vpop.xlane.xlu0 %36
  %v38 = vrcp.pop 32.0
  %v39 = vmul.f32 %v34, %v38
  %v40 = vmul.f32 %v37, %v38
  %v41 = vsub.f32 %v29, %v39
  %v42 = vsub.f32 %v30, %v40
  %v43 = vmul.f32 %v41, %v41
  %v44 = vmul.f32 %v42, %v42
  %v45 = vsel %vm31, %v43, 0.0
  %46 = vadd.xlane.f32.xlu0 %v45
  %v47 = vpop.xlane.xlu0 %46
  %v48 = vsel %vm31, %v44, 0.0
  %49 = vadd.xlane.f32.xlu0 %v48
  %v50 = vpop.xlane.xlu0 %49
  %v51 = vmul.f32 %v47, %v38
  %v52 = vmul.f32 %v50, %v38
  %v53 = vadd.f32 %v51, 1e-05
  %v54 = vadd.f32 %v52, 1e-05
  %v55 = vrsqrt.pop %v53
  %v56 = vrsqrt.pop %v54
  %v57 = vmul.f32 %v41, %v55
  %v58 = vmul.f32 %v42, %v56
  %v59 = vld [vmem:[%s1] sm:$0x1]
  %v61 = vlaneseq
  %v62 = vshrl.u32 %v61, 7
  %v63 = vsub.s32 0, %v62
  %v64 = vrot.slane %v59, %v63
  %v66 = vmul.f32 %v57, %v64
  %v67 = vmul.f32 %v58, %v64
  %v68 = vld [vmem:[%s2] sm:$0x1]
  %v70 = vlaneseq
  %v71 = vshrl.u32 %v70, 7
  %v72 = vsub.s32 0, %v71
  %v73 = vrot.slane %v68, %v72
  %v75 = vadd.f32 %v66, %v73
  %v76 = vadd.f32 %v67, %v73
  %v77 = vpack.c.bf16 %v76, %v75
  %v78 = vld [vmem:[%s3] sm:$0xf]
  %v79 = vld [vmem:[%s3 + $0x4] sm:$0xf]
  %v80 = vld [vmem:[%s3 + $0x8] sm:$0xf]
  %v81 = vld [vmem:[%s3 + $0xc] sm:$0xf]
  %v82 = vld [vmem:[%s4] sm:$0x1]
  %v84 = vlaneseq
  %v85 = vshrl.u32 %v84, 7
  %v86 = vsub.s32 0, %v85
  %v87 = vrot.slane %v82, %v86
  %v93 = vunpack.c.l.b16 %v78
  %v94 = vunpack.c.l.b16 %v79
  %v95 = vunpack.c.l.b16 %v80
  %v96 = vunpack.c.l.b16 %v81
  %v97 = vpack.c.b16 %v94, %v93
  %v98 = vpack.c.b16 %v96, %v95
  %v102 = vsel %vm31, %v77, 0
  %104 = vmatprep.subr.bf16.mxu0 0
  %105 = vmatpush1.bf16.msra.mxu0 %v97
  %106 = vmatprep.subr.bf16.mxu0 0
  %107 = vmatpush1.bf16.msra.mxu0 %v98
  %108 = vmatprep.subr.bf16.mxu0 0
  %109 = vmatpush1.bf16.msra.mxu0 0
  %110 = vmatprep.subr.bf16.mxu0 0
  %111 = vmatpush1.bf16.msra.mxu0 0
  %112 = vmatprep.subr.bf16.mxu0 0
  %113 = vmatpush1.bf16.msra.mxu0 0
  %114 = vmatprep.subr.bf16.mxu0 0
  %115 = vmatpush1.bf16.msra.mxu0 0
  %116 = vmatprep.subr.bf16.mxu0 0
  %117 = vmatpush1.bf16.msra.mxu0 0
  %118 = vmatprep.subr.bf16.mxu0 0
  %119 = vmatpush1.bf16.msra.mxu0 0
  %120 = vmatprep.subr.bf16.mxu0 0
  %121 = vmatpush1.bf16.msra.mxu0 0
  %122 = vmatprep.subr.bf16.mxu0 0
  %123 = vmatpush1.bf16.msra.mxu0 0
  %124 = vmatprep.subr.bf16.mxu0 0
  %125 = vmatpush1.bf16.msra.mxu0 0
  %126 = vmatprep.subr.bf16.mxu0 0
  %127 = vmatpush1.bf16.msra.mxu0 0
  %128 = vmatprep.subr.bf16.mxu0 0
  %129 = vmatpush1.bf16.msra.mxu0 0
  %130 = vmatprep.subr.bf16.mxu0 0
  %131 = vmatpush1.bf16.msra.mxu0 0
  %132 = vmatprep.subr.bf16.mxu0 0
  %133 = vmatpush1.bf16.msra.mxu0 0
  %134 = vmatprep.subr.bf16.mxu0 0
  %135 = vmatpush1.bf16.msra.mxu0 0
  %136 = vmatprep.mubr.bf16.mxu0 0
  %137 = vmatmul.mubr.bf16.gmra.mrb[0].mxu0 %v102
  %v138 = vpop.f32.mrb[0].mxu0
  %v139 = vadd.f32 %v87, %v138
  %v140 = vpop.f32.mrb[0].mxu0
  %v141 = vpop.f32.mrb[0].mxu0
  %v142 = vadd.f32 %v87, %v141
  %v143 = vpop.f32.mrb[0].mxu0
  %144 = vdwg.mxu0
  %v145 = vld [vmem:[%s5] sm:$0xf]
  %v146 = vld [vmem:[%s5 + $0x4] sm:$0xf]
  %v147 = vld [vmem:[%s5 + $0x8] sm:$0xf]
  %v148 = vld [vmem:[%s5 + $0xc] sm:$0xf]
  %v149 = vld [vmem:[%s6] sm:$0x1]
  %v151 = vlaneseq
  %v152 = vshrl.u32 %v151, 7
  %v153 = vsub.s32 0, %v152
  %v154 = vrot.slane %v149, %v153
  %v160 = vunpack.c.l.b16 %v145
  %v161 = vunpack.c.l.b16 %v146
  %v162 = vunpack.c.l.b16 %v147
  %v163 = vunpack.c.l.b16 %v148
  %v164 = vpack.c.b16 %v161, %v160
  %v165 = vpack.c.b16 %v163, %v162
  %168 = vmatprep.subr.bf16.mxu0 0
  %169 = vmatpush1.bf16.msra.mxu0 %v164
  %170 = vmatprep.subr.bf16.mxu0 0
  %171 = vmatpush1.bf16.msra.mxu0 %v165
  %172 = vmatprep.subr.bf16.mxu0 0
  %173 = vmatpush1.bf16.msra.mxu0 0
  %174 = vmatprep.subr.bf16.mxu0 0
  %175 = vmatpush1.bf16.msra.mxu0 0
  %176 = vmatprep.subr.bf16.mxu0 0
  %177 = vmatpush1.bf16.msra.mxu0 0
  %178 = vmatprep.subr.bf16.mxu0 0
  %179 = vmatpush1.bf16.msra.mxu0 0
  %180 = vmatprep.subr.bf16.mxu0 0
  %181 = vmatpush1.bf16.msra.mxu0 0
  %182 = vmatprep.subr.bf16.mxu0 0
  %183 = vmatpush1.bf16.msra.mxu0 0
  %184 = vmatprep.subr.bf16.mxu0 0
  %185 = vmatpush1.bf16.msra.mxu0 0
  %186 = vmatprep.subr.bf16.mxu0 0
  %187 = vmatpush1.bf16.msra.mxu0 0
  %188 = vmatprep.subr.bf16.mxu0 0
  %189 = vmatpush1.bf16.msra.mxu0 0
  %190 = vmatprep.subr.bf16.mxu0 0
  %191 = vmatpush1.bf16.msra.mxu0 0
  %192 = vmatprep.subr.bf16.mxu0 0
  %193 = vmatpush1.bf16.msra.mxu0 0
  %194 = vmatprep.subr.bf16.mxu0 0
  %195 = vmatpush1.bf16.msra.mxu0 0
  %196 = vmatprep.subr.bf16.mxu0 0
  %197 = vmatpush1.bf16.msra.mxu0 0
  %198 = vmatprep.subr.bf16.mxu0 0
  %199 = vmatpush1.bf16.msra.mxu0 0
  %200 = vmatprep.mubr.bf16.mxu0 0
  %201 = vmatmul.mubr.bf16.gmra.mrb[0].mxu0 %v102
  %v202 = vpop.f32.mrb[0].mxu0
  %v203 = vadd.f32 %v154, %v202
  %v204 = vpop.f32.mrb[0].mxu0
  %v205 = vpop.f32.mrb[0].mxu0
  %v206 = vadd.f32 %v154, %v205
  %v207 = vpop.f32.mrb[0].mxu0
  %208 = vdwg.mxu0
  %v209 = vxor.u32 %v203, 2147483648
  %v210 = vxor.u32 %v206, 2147483648
  %v211 = vmul.f32 %v209, 1.442695
  %v212 = vpow.pop %v211
  %v213 = vmul.f32 %v210, 1.442695
  %v214 = vpow.pop %v213
  %v215 = vadd.f32 %v212, 1.0
  %v216 = vadd.f32 %v214, 1.0
  %v217 = vrcp.pop %v215
  %v218 = vmul.f32 1.0, %v217
  %v219 = vrcp.pop %v216
  %v220 = vmul.f32 1.0, %v219
  %v221 = vmul.f32 %v139, %v218
  %v222 = vmul.f32 %v142, %v220
  %v223 = vpack.c.bf16 %v222, %v221
  %v225 = vunpack.c.l.b16 %v223
  %v226 = vunpack.c.h.b16 %v223
  %v227 = vpack.c.b16 %v225, %v225
  %v228 = vpack.c.b16 %v226, %v226
  %vm231 = vcmask 257024
  %232 = vst.msk [vmem:[%s7] sm:$0xf] %vm231, %v227
  %233 = vst.msk [vmem:[%s7 + $0x4] sm:$0xf] %vm231, %v228
  // Predicated region
  $region30: #{conformer_encoder.31} parent=0 // pred_check
    _
  $region31: #{conformer_encoder.31} parent=0 // pred_check_branch
    %235 = sbr.rel (0) target = $region33
  $region32: #{conformer_encoder.31} parent=0 // pred_region
    _
  $region33: #{conformer_encoder.31} parent=0 // pred_fallthru
    _
  // Predicated region
  $region34: #{conformer_encoder.31} parent=0 // pred_check
    _
  $region35: #{conformer_encoder.31} parent=0 // pred_check_branch
    %237 = sbr.rel (0) target = $region37
  $region36: #{conformer_encoder.31} parent=0 // pred_region
    _
  $region37: #{conformer_encoder.31} parent=0 // pred_fallthru
    _

</llo_original>
